<compile_context>
chip_gen: v6e
topology: v6e:2x2x1
jax: 0.10.0
libtpu: 0.0.40
codegen_flags: <defaults>
</compile_context>

<pallas_src>
import jax
import jax.numpy as jnp
from jax.experimental import pallas as pl
from jax.experimental.pallas import tpu as pltpu

# ---- small synthetic BERT config -------------------------------------------
VOCAB = 64
TYPE_VOCAB = 2
MAX_POS = 16
SEQ = 8
HIDDEN = 128
N_HEADS = 2
HEAD_DIM = HIDDEN // N_HEADS
INTER = 256
N_LAYERS = 2
LN_EPS = 1e-12
MASK_NEG = -10000.0

# ---- embedding slab rows (shape (_E_ROWS, HIDDEN), fp32) --------------------
_E_WORD = 0
_E_POS = _E_WORD + VOCAB            # 64
_E_TYPE = _E_POS + SEQ              # 72
_E_LN_G = _E_TYPE + TYPE_VOCAB      # 74
_E_LN_B = _E_LN_G + 1               # 75
_E_ROWS = 80                        # padded to sublane multiple

# ---- per-layer weight slab columns (shape (N_LAYERS, HIDDEN, _W_COLS), bf16) -
_W_Q = 0
_W_K = HIDDEN
_W_V = 2 * HIDDEN
_W_O = 3 * HIDDEN
_W_I = 4 * HIDDEN
_W_COLS = 4 * HIDDEN + INTER        # 768

# ---- per-layer bias / layernorm slab (shape (N_LAYERS, 8, 384), fp32) -------
_P_BQKV = 0                         # 384-wide contiguous [bq | bk | bv]
_P_BO = 1                           # cols 0:HIDDEN
_P_LN1G, _P_LN1B = 2, 3
_P_BI = 4                           # cols 0:INTER
_P_BO2 = 5
_P_LN2G, _P_LN2B = 6, 7
_P_ROWS = 8
_P_COLS = 3 * HIDDEN                # 384 (>= INTER)

# ---- QA slab (shape (_QA_ROWS, QA_PAD), fp32) -------------------------------
QA_PAD = 128                        # lane-dense padded output width
_QA_W = 0
_QA_B = HIDDEN                      # bias row (sublane aligned)
_QA_ROWS = HIDDEN + 8


def _layer_norm(x, g, b):
    mu = jnp.mean(x, axis=-1, keepdims=True)
    var = jnp.mean((x - mu) ** 2, axis=-1, keepdims=True)
    return (x - mu) * jax.lax.rsqrt(var + LN_EPS) * g + b


# ---- fused kernel: embeddings + N_LAYERS encoder layers + QA head -----------
def qabert_kernel(idstt_ref, mask_ref, emb_ref, w_ref, wo2_ref, p_ref, qa_ref,
                  out_ref):
    # ---------------- embeddings + LN ---------------------------------------
    idstt = idstt_ref[...]                                   # (S, 2) int32
    ids = idstt[:, 0:1]
    tt = idstt[:, 1:2]
    word_oh = (jax.lax.broadcasted_iota(jnp.int32, (SEQ, VOCAB), 1)
               == ids).astype(jnp.float32)                   # (S, VOCAB)
    word = jnp.dot(word_oh, emb_ref[_E_WORD:_E_WORD + VOCAB, :],
                   preferred_element_type=jnp.float32)       # MXU gather
    pos = emb_ref[_E_POS:_E_POS + SEQ, :]                    # (S, H)
    # token-type ids are in {0, 1} (TYPE_VOCAB == 2)
    tok = jnp.where(tt == 0,
                    emb_ref[_E_TYPE:_E_TYPE + 1, :],
                    emb_ref[_E_TYPE + 1:_E_TYPE + 2, :])
    x = _layer_norm(word + pos + tok,
                    emb_ref[_E_LN_G:_E_LN_G + 1, :],
                    emb_ref[_E_LN_B:_E_LN_B + 1, :])

    mask_add = mask_ref[...]                                 # (1, S) additive

    # ---------------- encoder layers (static unroll, no grid) ---------------
    for l in range(N_LAYERS):
        w_l = w_ref.at[l]        # (HIDDEN, _W_COLS) bf16 ref view (free)
        wo2_l = wo2_ref.at[l]    # (INTER, HIDDEN)   bf16 ref view
        p_l = p_ref.at[l]        # (_P_ROWS, _P_COLS) fp32 ref view

        xb = x.astype(jnp.bfloat16)
        # fused, lane-dense QKV projection; 1/sqrt(head_dim) already folded
        # into the Q weight columns at param-build time.
        qkv = (jnp.dot(xb, w_l[:, 0:3 * HIDDEN],
                       preferred_element_type=jnp.float32)
               + p_l[_P_BQKV:_P_BQKV + 1, 0:3 * HIDDEN])     # (S, 3H) fp32

        attn = jnp.zeros((SEQ, HIDDEN), jnp.float32)
        for h in range(N_HEADS):                             # static unroll
            hs0 = h * HEAD_DIM
            q = qkv[:, _W_Q + hs0:_W_Q + hs0 + HEAD_DIM]
            k = qkv[:, _W_K + hs0:_W_K + hs0 + HEAD_DIM]
            v = qkv[:, _W_V + hs0:_W_V + hs0 + HEAD_DIM]
            # NT contraction: q @ k^T without an explicit XLU transpose.
            scores = jax.lax.dot_general(
                q, k, (((1,), (1,)), ((), ())),
                preferred_element_type=jnp.float32)
            scores = scores + mask_add                       # broadcast rows
            scores = scores - jnp.max(scores, axis=-1, keepdims=True)
            probs = jnp.exp(scores)
            probs = probs * pl.reciprocal(
                jnp.sum(probs, axis=-1, keepdims=True), approx=True)
            ctx = jnp.dot(probs, v, preferred_element_type=jnp.float32)
            # fold this head's W_O rows directly into the accumulator
            attn = attn + jnp.dot(
                ctx.astype(jnp.bfloat16),
                w_l[hs0:hs0 + HEAD_DIM, _W_O:_W_O + HIDDEN],
                preferred_element_type=jnp.float32)

        attn = attn + p_l[_P_BO:_P_BO + 1, 0:HIDDEN]
        x1 = _layer_norm(x + attn,
                         p_l[_P_LN1G:_P_LN1G + 1, 0:HIDDEN],
                         p_l[_P_LN1B:_P_LN1B + 1, 0:HIDDEN])

        hmid = (jnp.dot(x1.astype(jnp.bfloat16), w_l[:, _W_I:_W_I + INTER],
                        preferred_element_type=jnp.float32)
                + p_l[_P_BI:_P_BI + 1, 0:INTER])
        # TODO(synk): HF BERT uses exact erf-GELU; tanh-approximate GELU used here.
        hmid = jax.nn.gelu(hmid, approximate=True)
        ffn = (jnp.dot(hmid.astype(jnp.bfloat16), wo2_l[...],
                       preferred_element_type=jnp.float32)
               + p_l[_P_BO2:_P_BO2 + 1, 0:HIDDEN])
        x = _layer_norm(x1 + ffn,
                        p_l[_P_LN2G:_P_LN2G + 1, 0:HIDDEN],
                        p_l[_P_LN2B:_P_LN2B + 1, 0:HIDDEN])

    # ---------------- QA head, lane-dense padded output ----------------------
    out_ref[...] = (jnp.dot(x, qa_ref[_QA_W:_QA_W + HIDDEN, :],
                            preferred_element_type=jnp.float32)
                    + qa_ref[_QA_B:_QA_B + 1, :])


_VMEM = pl.BlockSpec(memory_space=pltpu.MemorySpace.VMEM)

_fused_call = pl.pallas_call(
    qabert_kernel,
    out_shape=jax.ShapeDtypeStruct((SEQ, QA_PAD), jnp.float32),
    in_specs=[_VMEM] * 7,
    out_specs=_VMEM,
)


# ---- parameter construction (packed slabs, deterministic) -------------------
def init_params(key):
    def nrm(k, shape):
        return jax.random.normal(k, shape, jnp.float32) * 0.02

    keys = jax.random.split(key, 4 + 8 * N_LAYERS)

    emb_slab = jnp.zeros((_E_ROWS, HIDDEN), jnp.float32)
    emb_slab = emb_slab.at[_E_WORD:_E_WORD + VOCAB].set(nrm(keys[0], (VOCAB, HIDDEN)))
    emb_slab = emb_slab.at[_E_POS:_E_POS + SEQ].set(
        nrm(keys[1], (MAX_POS, HIDDEN))[:SEQ])
    emb_slab = emb_slab.at[_E_TYPE:_E_TYPE + TYPE_VOCAB].set(
        nrm(keys[2], (TYPE_VOCAB, HIDDEN)))
    emb_slab = emb_slab.at[_E_LN_G].set(1.0)      # LN gamma = 1, beta = 0

    qa_slab = jnp.zeros((_QA_ROWS, QA_PAD), jnp.float32)
    qa_slab = qa_slab.at[_QA_W:_QA_W + HIDDEN, 0:2].set(nrm(keys[3], (HIDDEN, 2)))
    # QA bias (row _QA_B) stays zero.

    scale = 1.0 / (HEAD_DIM ** 0.5)
    w_slab = jnp.zeros((N_LAYERS, HIDDEN, _W_COLS), jnp.float32)
    wo2_slab = jnp.zeros((N_LAYERS, INTER, HIDDEN), jnp.float32)
    p_slab = jnp.zeros((N_LAYERS, _P_ROWS, _P_COLS), jnp.float32)
    for l in range(N_LAYERS):
        k = keys[4 + 8 * l: 4 + 8 * (l + 1)]
        # 1/sqrt(head_dim) folded into Q projection (weights; bias is zero).
        w_slab = w_slab.at[l, :, _W_Q:_W_Q + HIDDEN].set(
            nrm(k[0], (HIDDEN, HIDDEN)) * scale)
        w_slab = w_slab.at[l, :, _W_K:_W_K + HIDDEN].set(nrm(k[1], (HIDDEN, HIDDEN)))
        w_slab = w_slab.at[l, :, _W_V:_W_V + HIDDEN].set(nrm(k[2], (HIDDEN, HIDDEN)))
        w_slab = w_slab.at[l, :, _W_O:_W_O + HIDDEN].set(nrm(k[3], (HIDDEN, HIDDEN)))
        w_slab = w_slab.at[l, :, _W_I:_W_I + INTER].set(nrm(k[4], (HIDDEN, INTER)))
        wo2_slab = wo2_slab.at[l].set(nrm(k[5], (INTER, HIDDEN)))
        # biases zero; LayerNorm gamma = 1, beta = 0
        p_slab = p_slab.at[l, _P_LN1G, 0:HIDDEN].set(1.0)
        p_slab = p_slab.at[l, _P_LN2G, 0:HIDDEN].set(1.0)

    # Big matmul slabs streamed as bf16 (MXU-native); biases/LN/embeddings fp32.
    return {"emb_slab": emb_slab,
            "w_slab": w_slab.astype(jnp.bfloat16),
            "wo2_slab": wo2_slab.astype(jnp.bfloat16),
            "p_slab": p_slab,
            "qa_slab": qa_slab}


@jax.jit
def qabert_forward(params, input_ids, attention_mask, token_type_ids):
    # PyTorch module unsqueezes batch=1; we compute on [S, H] and re-add it.
    idstt = jnp.stack([input_ids.astype(jnp.int32),
                       token_type_ids.astype(jnp.int32)], axis=1)      # (S, 2)
    mask_add = (1.0 - attention_mask.reshape(1, SEQ).astype(jnp.float32)) * MASK_NEG

    logits = _fused_call(idstt, mask_add,
                         params["emb_slab"], params["w_slab"],
                         params["wo2_slab"], params["p_slab"],
                         params["qa_slab"])                  # (SEQ, 128) padded

    start_logits = logits[:, 0].reshape(1, SEQ)
    end_logits = logits[:, 1].reshape(1, SEQ)
    return start_logits, end_logits


if __name__ == "__main__":
    root = jax.random.PRNGKey(0)
    k_param, k_ids = jax.random.split(root)
    params = init_params(k_param)

    input_ids = jax.random.randint(k_ids, (SEQ,), 0, VOCAB, dtype=jnp.int32)
    attention_mask = jnp.array([1, 1, 1, 1, 1, 1, 0, 0], dtype=jnp.int32)
    token_type_ids = jnp.array([0, 0, 0, 1, 1, 1, 1, 1], dtype=jnp.int32)

    start_logits, end_logits = qabert_forward(
        params, input_ids, attention_mask, token_type_ids)
    jax.block_until_ready((start_logits, end_logits))

    assert start_logits.shape == (1, SEQ) and end_logits.shape == (1, SEQ)
    assert start_logits.dtype == jnp.float32 and end_logits.dtype == jnp.float32
    assert bool(jnp.all(jnp.isfinite(start_logits)))
    assert bool(jnp.all(jnp.isfinite(end_logits)))
    print("KERNEL_OK")
</pallas_src>

<mosaic_0001>
module attributes {stable_mosaic.version = 11 : i64} {
  func.func @qabert_kernel(%arg0: memref<8x2xi32, #tpu.memory_space<vmem>>, %arg1: memref<1x8xf32, #tpu.memory_space<vmem>>, %arg2: memref<80x128xf32, #tpu.memory_space<vmem>>, %arg3: memref<2x128x768xbf16, #tpu.memory_space<vmem>>, %arg4: memref<2x256x128xbf16, #tpu.memory_space<vmem>>, %arg5: memref<2x8x384xf32, #tpu.memory_space<vmem>>, %arg6: memref<136x128xf32, #tpu.memory_space<vmem>>, %arg7: memref<8x128xf32, #tpu.memory_space<vmem>>) attributes {dimension_semantics = [], scalar_prefetch = 0 : i64, scratch_operands = 0 : i64, tpu.core_type = #tpu.core_type<tc>} {
    %c0 = arith.constant 0 : index
    %c0_0 = arith.constant 0 : index
    %0 = vector.load %arg0[%c0, %c0_0] : memref<8x2xi32, #tpu.memory_space<vmem>>, vector<8x2xi32>
    %1 = vector.extract_strided_slice %0 {offsets = [0, 0], sizes = [8, 1], strides = [1, 1]} : vector<8x2xi32> to vector<8x1xi32>
    %2 = vector.extract_strided_slice %0 {offsets = [0, 1], sizes = [8, 1], strides = [1, 1]} : vector<8x2xi32> to vector<8x1xi32>
    %3 = tpu.iota {dimensions = array<i32: 1>} : vector<8x64xi32>
    %4 = vector.broadcast %1 : vector<8x1xi32> to vector<8x64xi32>
    %5 = arith.cmpi eq, %3, %4 : vector<8x64xi32>
    %6 = arith.extui %5 : vector<8x64xi1> to vector<8x64xi32>
    %7 = arith.sitofp %6 : vector<8x64xi32> to vector<8x64xf32>
    %c0_1 = arith.constant 0 : index
    %c0_2 = arith.constant 0 : index
    %8 = vector.load %arg2[%c0_1, %c0_2] : memref<80x128xf32, #tpu.memory_space<vmem>>, vector<64x128xf32>
    %cst = arith.constant dense<0.000000e+00> : vector<8x128xf32>
    %9 = tpu.matmul %7, %8, %cst {dimension_numbers = #tpu.dot_dimension_numbers<[1], [0], [0], [1], [0, 0, 1, 1], [], []>} : vector<8x64xf32>, vector<64x128xf32>, vector<8x128xf32> -> vector<8x128xf32>
    %c64 = arith.constant 64 : index
    %c0_3 = arith.constant 0 : index
    %10 = vector.load %arg2[%c64, %c0_3] : memref<80x128xf32, #tpu.memory_space<vmem>>, vector<8x128xf32>
    %c0_i32 = arith.constant 0 : i32
    %11 = vector.broadcast %c0_i32 : i32 to vector<8x1xi32>
    %12 = arith.cmpi eq, %2, %11 : vector<8x1xi32>
    %c72 = arith.constant 72 : index
    %c0_4 = arith.constant 0 : index
    %13 = vector.load %arg2[%c72, %c0_4] : memref<80x128xf32, #tpu.memory_space<vmem>>, vector<1x128xf32>
    %c73 = arith.constant 73 : index
    %c0_5 = arith.constant 0 : index
    %14 = vector.load %arg2[%c73, %c0_5] : memref<80x128xf32, #tpu.memory_space<vmem>>, vector<1x128xf32>
    %15 = vector.shape_cast %12 : vector<8x1xi1> to vector<8x1xi1>
    %16 = vector.broadcast %15 : vector<8x1xi1> to vector<8x128xi1>
    %17 = vector.shape_cast %13 : vector<1x128xf32> to vector<1x128xf32>
    %18 = vector.broadcast %17 : vector<1x128xf32> to vector<8x128xf32>
    %19 = vector.shape_cast %14 : vector<1x128xf32> to vector<1x128xf32>
    %20 = vector.broadcast %19 : vector<1x128xf32> to vector<8x128xf32>
    %21 = arith.select %16, %18, %20 : vector<8x128xi1>, vector<8x128xf32>
    %22 = arith.addf %9, %10 : vector<8x128xf32>
    %23 = arith.addf %22, %21 : vector<8x128xf32>
    %c74 = arith.constant 74 : index
    %c0_6 = arith.constant 0 : index
    %24 = vector.load %arg2[%c74, %c0_6] : memref<80x128xf32, #tpu.memory_space<vmem>>, vector<1x128xf32>
    %c75 = arith.constant 75 : index
    %c0_7 = arith.constant 0 : index
    %25 = vector.load %arg2[%c75, %c0_7] : memref<80x128xf32, #tpu.memory_space<vmem>>, vector<1x128xf32>
    %cst_8 = arith.constant dense<0.000000e+00> : vector<8xf32>
    %26 = vector.multi_reduction <add>, %23, %cst_8 [1] : vector<8x128xf32> to vector<8xf32>
    %27 = vector.shape_cast %26 : vector<8xf32> to vector<8x1xf32>
    %cst_9 = arith.constant 1.280000e+02 : f32
    %28 = vector.broadcast %cst_9 : f32 to vector<8x1xf32>
    %29 = arith.divf %27, %28 : vector<8x1xf32>
    %30 = vector.broadcast %29 : vector<8x1xf32> to vector<8x128xf32>
    %31 = arith.subf %23, %30 : vector<8x128xf32>
    %32 = arith.mulf %31, %31 : vector<8x128xf32>
    %cst_10 = arith.constant dense<0.000000e+00> : vector<8xf32>
    %33 = vector.multi_reduction <add>, %32, %cst_10 [1] : vector<8x128xf32> to vector<8xf32>
    %34 = vector.shape_cast %33 : vector<8xf32> to vector<8x1xf32>
    %cst_11 = arith.constant 1.280000e+02 : f32
    %35 = vector.broadcast %cst_11 : f32 to vector<8x1xf32>
    %36 = arith.divf %34, %35 : vector<8x1xf32>
    %37 = vector.broadcast %29 : vector<8x1xf32> to vector<8x128xf32>
    %38 = arith.subf %23, %37 : vector<8x128xf32>
    %cst_12 = arith.constant 9.99999996E-13 : f32
    %39 = vector.broadcast %cst_12 : f32 to vector<8x1xf32>
    %40 = arith.addf %36, %39 : vector<8x1xf32>
    %41 = math.rsqrt %40 : vector<8x1xf32>
    %42 = vector.broadcast %41 : vector<8x1xf32> to vector<8x128xf32>
    %43 = arith.mulf %38, %42 : vector<8x128xf32>
    %44 = vector.broadcast %24 : vector<1x128xf32> to vector<8x128xf32>
    %45 = arith.mulf %43, %44 : vector<8x128xf32>
    %46 = vector.broadcast %25 : vector<1x128xf32> to vector<8x128xf32>
    %47 = arith.addf %45, %46 : vector<8x128xf32>
    %c0_13 = arith.constant 0 : index
    %c0_14 = arith.constant 0 : index
    %48 = vector.load %arg1[%c0_13, %c0_14] : memref<1x8xf32, #tpu.memory_space<vmem>>, vector<1x8xf32>
    %49 = arith.truncf %47 : vector<8x128xf32> to vector<8x128xbf16>
    %c0_i32_15 = arith.constant 0 : i32
    %c0_i32_16 = arith.constant 0 : i32
    %c0_i32_17 = arith.constant 0 : i32
    %50 = tpu.memref_slice %arg3[%c0_i32_15, %c0_i32_16, %c0_i32_17] : memref<2x128x768xbf16, #tpu.memory_space<vmem>> -> memref<1x128x768xbf16, #tpu.memory_space<vmem>>
    %51 = tpu.memref_squeeze %50 : memref<1x128x768xbf16, #tpu.memory_space<vmem>> -> memref<128x768xbf16, #tpu.memory_space<vmem>>
    %c0_18 = arith.constant 0 : index
    %c0_19 = arith.constant 0 : index
    %52 = vector.load %51[%c0_18, %c0_19] : memref<128x768xbf16, #tpu.memory_space<vmem>>, vector<128x384xbf16>
    %cst_20 = arith.constant dense<0.000000e+00> : vector<8x384xf32>
    %53 = tpu.matmul %49, %52, %cst_20 {dimension_numbers = #tpu.dot_dimension_numbers<[1], [0], [0], [1], [0, 0, 1, 1], [], []>} : vector<8x128xbf16>, vector<128x384xbf16>, vector<8x384xf32> -> vector<8x384xf32>
    %c0_i32_21 = arith.constant 0 : i32
    %c0_i32_22 = arith.constant 0 : i32
    %c0_i32_23 = arith.constant 0 : i32
    %54 = tpu.memref_slice %arg5[%c0_i32_21, %c0_i32_22, %c0_i32_23] : memref<2x8x384xf32, #tpu.memory_space<vmem>> -> memref<1x8x384xf32, #tpu.memory_space<vmem>>
    %55 = tpu.memref_squeeze %54 : memref<1x8x384xf32, #tpu.memory_space<vmem>> -> memref<8x384xf32, #tpu.memory_space<vmem>>
    %c0_24 = arith.constant 0 : index
    %c0_25 = arith.constant 0 : index
    %56 = vector.load %55[%c0_24, %c0_25] : memref<8x384xf32, #tpu.memory_space<vmem>>, vector<1x384xf32>
    %57 = vector.broadcast %56 : vector<1x384xf32> to vector<8x384xf32>
    %58 = arith.addf %53, %57 : vector<8x384xf32>
    %cst_26 = arith.constant 0.000000e+00 : f32
    %59 = vector.broadcast %cst_26 : f32 to vector<8x128xf32>
    %60 = vector.extract_strided_slice %58 {offsets = [0, 0], sizes = [8, 64], strides = [1, 1]} : vector<8x384xf32> to vector<8x64xf32>
    %61 = vector.extract_strided_slice %58 {offsets = [0, 128], sizes = [8, 64], strides = [1, 1]} : vector<8x384xf32> to vector<8x64xf32>
    %62 = vector.extract_strided_slice %58 {offsets = [0, 256], sizes = [8, 64], strides = [1, 1]} : vector<8x384xf32> to vector<8x64xf32>
    %cst_27 = arith.constant dense<0.000000e+00> : vector<8x8xf32>
    %63 = tpu.matmul %60, %61, %cst_27 {dimension_numbers = #tpu.dot_dimension_numbers<[1], [1], [0], [0], [0, 0, 1, 0], [], []>} : vector<8x64xf32>, vector<8x64xf32>, vector<8x8xf32> -> vector<8x8xf32>
    %64 = vector.broadcast %48 : vector<1x8xf32> to vector<8x8xf32>
    %65 = arith.addf %63, %64 : vector<8x8xf32>
    %cst_28 = arith.constant dense<0xFF800000> : vector<8xf32>
    %66 = vector.multi_reduction <maximumf>, %65, %cst_28 [1] : vector<8x8xf32> to vector<8xf32>
    %67 = vector.shape_cast %66 : vector<8xf32> to vector<8x1xf32>
    %68 = vector.broadcast %67 : vector<8x1xf32> to vector<8x8xf32>
    %69 = arith.subf %65, %68 : vector<8x8xf32>
    %70 = math.exp %69 : vector<8x8xf32>
    %cst_29 = arith.constant dense<0.000000e+00> : vector<8xf32>
    %71 = vector.multi_reduction <add>, %70, %cst_29 [1] : vector<8x8xf32> to vector<8xf32>
    %72 = vector.shape_cast %71 : vector<8xf32> to vector<8x1xf32>
    %73 = tpu.reciprocal %72 {approx = true} : vector<8x1xf32> -> vector<8x1xf32>
    %74 = vector.broadcast %73 : vector<8x1xf32> to vector<8x8xf32>
    %75 = arith.mulf %70, %74 : vector<8x8xf32>
    %cst_30 = arith.constant dense<0.000000e+00> : vector<8x64xf32>
    %76 = tpu.matmul %75, %62, %cst_30 {dimension_numbers = #tpu.dot_dimension_numbers<[1], [0], [0], [1], [0, 0, 1, 1], [], []>} : vector<8x8xf32>, vector<8x64xf32>, vector<8x64xf32> -> vector<8x64xf32>
    %77 = arith.truncf %76 : vector<8x64xf32> to vector<8x64xbf16>
    %c0_i32_31 = arith.constant 0 : i32
    %c0_i32_32 = arith.constant 0 : i32
    %c0_i32_33 = arith.constant 0 : i32
    %78 = tpu.memref_slice %arg3[%c0_i32_31, %c0_i32_32, %c0_i32_33] : memref<2x128x768xbf16, #tpu.memory_space<vmem>> -> memref<1x128x768xbf16, #tpu.memory_space<vmem>>
    %79 = tpu.memref_squeeze %78 : memref<1x128x768xbf16, #tpu.memory_space<vmem>> -> memref<128x768xbf16, #tpu.memory_space<vmem>>
    %c0_34 = arith.constant 0 : index
    %c384 = arith.constant 384 : index
    %80 = vector.load %79[%c0_34, %c384] : memref<128x768xbf16, #tpu.memory_space<vmem>>, vector<64x128xbf16>
    %cst_35 = arith.constant dense<0.000000e+00> : vector<8x128xf32>
    %81 = tpu.matmul %77, %80, %cst_35 {dimension_numbers = #tpu.dot_dimension_numbers<[1], [0], [0], [1], [0, 0, 1, 1], [], []>} : vector<8x64xbf16>, vector<64x128xbf16>, vector<8x128xf32> -> vector<8x128xf32>
    %82 = arith.addf %59, %81 : vector<8x128xf32>
    %83 = vector.extract_strided_slice %58 {offsets = [0, 64], sizes = [8, 64], strides = [1, 1]} : vector<8x384xf32> to vector<8x64xf32>
    %84 = vector.extract_strided_slice %58 {offsets = [0, 192], sizes = [8, 64], strides = [1, 1]} : vector<8x384xf32> to vector<8x64xf32>
    %85 = vector.extract_strided_slice %58 {offsets = [0, 320], sizes = [8, 64], strides = [1, 1]} : vector<8x384xf32> to vector<8x64xf32>
    %cst_36 = arith.constant dense<0.000000e+00> : vector<8x8xf32>
    %86 = tpu.matmul %83, %84, %cst_36 {dimension_numbers = #tpu.dot_dimension_numbers<[1], [1], [0], [0], [0, 0, 1, 0], [], []>} : vector<8x64xf32>, vector<8x64xf32>, vector<8x8xf32> -> vector<8x8xf32>
    %87 = vector.broadcast %48 : vector<1x8xf32> to vector<8x8xf32>
    %88 = arith.addf %86, %87 : vector<8x8xf32>
    %cst_37 = arith.constant dense<0xFF800000> : vector<8xf32>
    %89 = vector.multi_reduction <maximumf>, %88, %cst_37 [1] : vector<8x8xf32> to vector<8xf32>
    %90 = vector.shape_cast %89 : vector<8xf32> to vector<8x1xf32>
    %91 = vector.broadcast %90 : vector<8x1xf32> to vector<8x8xf32>
    %92 = arith.subf %88, %91 : vector<8x8xf32>
    %93 = math.exp %92 : vector<8x8xf32>
    %cst_38 = arith.constant dense<0.000000e+00> : vector<8xf32>
    %94 = vector.multi_reduction <add>, %93, %cst_38 [1] : vector<8x8xf32> to vector<8xf32>
    %95 = vector.shape_cast %94 : vector<8xf32> to vector<8x1xf32>
    %96 = tpu.reciprocal %95 {approx = true} : vector<8x1xf32> -> vector<8x1xf32>
    %97 = vector.broadcast %96 : vector<8x1xf32> to vector<8x8xf32>
    %98 = arith.mulf %93, %97 : vector<8x8xf32>
    %cst_39 = arith.constant dense<0.000000e+00> : vector<8x64xf32>
    %99 = tpu.matmul %98, %85, %cst_39 {dimension_numbers = #tpu.dot_dimension_numbers<[1], [0], [0], [1], [0, 0, 1, 1], [], []>} : vector<8x8xf32>, vector<8x64xf32>, vector<8x64xf32> -> vector<8x64xf32>
    %100 = arith.truncf %99 : vector<8x64xf32> to vector<8x64xbf16>
    %c0_i32_40 = arith.constant 0 : i32
    %c0_i32_41 = arith.constant 0 : i32
    %c0_i32_42 = arith.constant 0 : i32
    %101 = tpu.memref_slice %arg3[%c0_i32_40, %c0_i32_41, %c0_i32_42] : memref<2x128x768xbf16, #tpu.memory_space<vmem>> -> memref<1x128x768xbf16, #tpu.memory_space<vmem>>
    %102 = tpu.memref_squeeze %101 : memref<1x128x768xbf16, #tpu.memory_space<vmem>> -> memref<128x768xbf16, #tpu.memory_space<vmem>>
    %c64_43 = arith.constant 64 : index
    %c384_44 = arith.constant 384 : index
    %103 = vector.load %102[%c64_43, %c384_44] : memref<128x768xbf16, #tpu.memory_space<vmem>>, vector<64x128xbf16>
    %cst_45 = arith.constant dense<0.000000e+00> : vector<8x128xf32>
    %104 = tpu.matmul %100, %103, %cst_45 {dimension_numbers = #tpu.dot_dimension_numbers<[1], [0], [0], [1], [0, 0, 1, 1], [], []>} : vector<8x64xbf16>, vector<64x128xbf16>, vector<8x128xf32> -> vector<8x128xf32>
    %105 = arith.addf %82, %104 : vector<8x128xf32>
    %c0_i32_46 = arith.constant 0 : i32
    %c0_i32_47 = arith.constant 0 : i32
    %c0_i32_48 = arith.constant 0 : i32
    %106 = tpu.memref_slice %arg5[%c0_i32_46, %c0_i32_47, %c0_i32_48] : memref<2x8x384xf32, #tpu.memory_space<vmem>> -> memref<1x8x384xf32, #tpu.memory_space<vmem>>
    %107 = tpu.memref_squeeze %106 : memref<1x8x384xf32, #tpu.memory_space<vmem>> -> memref<8x384xf32, #tpu.memory_space<vmem>>
    %c1 = arith.constant 1 : index
    %c0_49 = arith.constant 0 : index
    %108 = vector.load %107[%c1, %c0_49] : memref<8x384xf32, #tpu.memory_space<vmem>>, vector<1x128xf32>
    %109 = vector.broadcast %108 : vector<1x128xf32> to vector<8x128xf32>
    %110 = arith.addf %105, %109 : vector<8x128xf32>
    %111 = arith.addf %47, %110 : vector<8x128xf32>
    %c0_i32_50 = arith.constant 0 : i32
    %c0_i32_51 = arith.constant 0 : i32
    %c0_i32_52 = arith.constant 0 : i32
    %112 = tpu.memref_slice %arg5[%c0_i32_50, %c0_i32_51, %c0_i32_52] : memref<2x8x384xf32, #tpu.memory_space<vmem>> -> memref<1x8x384xf32, #tpu.memory_space<vmem>>
    %113 = tpu.memref_squeeze %112 : memref<1x8x384xf32, #tpu.memory_space<vmem>> -> memref<8x384xf32, #tpu.memory_space<vmem>>
    %c2 = arith.constant 2 : index
    %c0_53 = arith.constant 0 : index
    %114 = vector.load %113[%c2, %c0_53] : memref<8x384xf32, #tpu.memory_space<vmem>>, vector<1x128xf32>
    %c0_i32_54 = arith.constant 0 : i32
    %c0_i32_55 = arith.constant 0 : i32
    %c0_i32_56 = arith.constant 0 : i32
    %115 = tpu.memref_slice %arg5[%c0_i32_54, %c0_i32_55, %c0_i32_56] : memref<2x8x384xf32, #tpu.memory_space<vmem>> -> memref<1x8x384xf32, #tpu.memory_space<vmem>>
    %116 = tpu.memref_squeeze %115 : memref<1x8x384xf32, #tpu.memory_space<vmem>> -> memref<8x384xf32, #tpu.memory_space<vmem>>
    %c3 = arith.constant 3 : index
    %c0_57 = arith.constant 0 : index
    %117 = vector.load %116[%c3, %c0_57] : memref<8x384xf32, #tpu.memory_space<vmem>>, vector<1x128xf32>
    %cst_58 = arith.constant dense<0.000000e+00> : vector<8xf32>
    %118 = vector.multi_reduction <add>, %111, %cst_58 [1] : vector<8x128xf32> to vector<8xf32>
    %119 = vector.shape_cast %118 : vector<8xf32> to vector<8x1xf32>
    %cst_59 = arith.constant 1.280000e+02 : f32
    %120 = vector.broadcast %cst_59 : f32 to vector<8x1xf32>
    %121 = arith.divf %119, %120 : vector<8x1xf32>
    %122 = vector.broadcast %121 : vector<8x1xf32> to vector<8x128xf32>
    %123 = arith.subf %111, %122 : vector<8x128xf32>
    %124 = arith.mulf %123, %123 : vector<8x128xf32>
    %cst_60 = arith.constant dense<0.000000e+00> : vector<8xf32>
    %125 = vector.multi_reduction <add>, %124, %cst_60 [1] : vector<8x128xf32> to vector<8xf32>
    %126 = vector.shape_cast %125 : vector<8xf32> to vector<8x1xf32>
    %cst_61 = arith.constant 1.280000e+02 : f32
    %127 = vector.broadcast %cst_61 : f32 to vector<8x1xf32>
    %128 = arith.divf %126, %127 : vector<8x1xf32>
    %129 = vector.broadcast %121 : vector<8x1xf32> to vector<8x128xf32>
    %130 = arith.subf %111, %129 : vector<8x128xf32>
    %cst_62 = arith.constant 9.99999996E-13 : f32
    %131 = vector.broadcast %cst_62 : f32 to vector<8x1xf32>
    %132 = arith.addf %128, %131 : vector<8x1xf32>
    %133 = math.rsqrt %132 : vector<8x1xf32>
    %134 = vector.broadcast %133 : vector<8x1xf32> to vector<8x128xf32>
    %135 = arith.mulf %130, %134 : vector<8x128xf32>
    %136 = vector.broadcast %114 : vector<1x128xf32> to vector<8x128xf32>
    %137 = arith.mulf %135, %136 : vector<8x128xf32>
    %138 = vector.broadcast %117 : vector<1x128xf32> to vector<8x128xf32>
    %139 = arith.addf %137, %138 : vector<8x128xf32>
    %140 = arith.truncf %139 : vector<8x128xf32> to vector<8x128xbf16>
    %c0_i32_63 = arith.constant 0 : i32
    %c0_i32_64 = arith.constant 0 : i32
    %c0_i32_65 = arith.constant 0 : i32
    %141 = tpu.memref_slice %arg3[%c0_i32_63, %c0_i32_64, %c0_i32_65] : memref<2x128x768xbf16, #tpu.memory_space<vmem>> -> memref<1x128x768xbf16, #tpu.memory_space<vmem>>
    %142 = tpu.memref_squeeze %141 : memref<1x128x768xbf16, #tpu.memory_space<vmem>> -> memref<128x768xbf16, #tpu.memory_space<vmem>>
    %c0_66 = arith.constant 0 : index
    %c512 = arith.constant 512 : index
    %143 = vector.load %142[%c0_66, %c512] : memref<128x768xbf16, #tpu.memory_space<vmem>>, vector<128x256xbf16>
    %cst_67 = arith.constant dense<0.000000e+00> : vector<8x256xf32>
    %144 = tpu.matmul %140, %143, %cst_67 {dimension_numbers = #tpu.dot_dimension_numbers<[1], [0], [0], [1], [0, 0, 1, 1], [], []>} : vector<8x128xbf16>, vector<128x256xbf16>, vector<8x256xf32> -> vector<8x256xf32>
    %c0_i32_68 = arith.constant 0 : i32
    %c0_i32_69 = arith.constant 0 : i32
    %c0_i32_70 = arith.constant 0 : i32
    %145 = tpu.memref_slice %arg5[%c0_i32_68, %c0_i32_69, %c0_i32_70] : memref<2x8x384xf32, #tpu.memory_space<vmem>> -> memref<1x8x384xf32, #tpu.memory_space<vmem>>
    %146 = tpu.memref_squeeze %145 : memref<1x8x384xf32, #tpu.memory_space<vmem>> -> memref<8x384xf32, #tpu.memory_space<vmem>>
    %c4 = arith.constant 4 : index
    %c0_71 = arith.constant 0 : index
    %147 = vector.load %146[%c4, %c0_71] : memref<8x384xf32, #tpu.memory_space<vmem>>, vector<1x256xf32>
    %148 = vector.broadcast %147 : vector<1x256xf32> to vector<8x256xf32>
    %149 = arith.addf %144, %148 : vector<8x256xf32>
    %150 = arith.mulf %149, %149 : vector<8x256xf32>
    %151 = arith.mulf %149, %150 : vector<8x256xf32>
    %cst_72 = arith.constant 4.471500e-02 : f32
    %152 = vector.broadcast %cst_72 : f32 to vector<8x256xf32>
    %153 = arith.mulf %152, %151 : vector<8x256xf32>
    %154 = arith.addf %149, %153 : vector<8x256xf32>
    %cst_73 = arith.constant 0.797884583 : f32
    %155 = vector.broadcast %cst_73 : f32 to vector<8x256xf32>
    %156 = arith.mulf %155, %154 : vector<8x256xf32>
    %157 = math.tanh %156 : vector<8x256xf32>
    %cst_74 = arith.constant 1.000000e+00 : f32
    %158 = vector.broadcast %cst_74 : f32 to vector<8x256xf32>
    %159 = arith.addf %158, %157 : vector<8x256xf32>
    %cst_75 = arith.constant 5.000000e-01 : f32
    %160 = vector.broadcast %cst_75 : f32 to vector<8x256xf32>
    %161 = arith.mulf %160, %159 : vector<8x256xf32>
    %162 = arith.mulf %149, %161 : vector<8x256xf32>
    %163 = arith.truncf %162 : vector<8x256xf32> to vector<8x256xbf16>
    %c0_76 = arith.constant 0 : index
    %c0_77 = arith.constant 0 : index
    %c0_78 = arith.constant 0 : index
    %164 = vector.load %arg4[%c0_76, %c0_77, %c0_78] : memref<2x256x128xbf16, #tpu.memory_space<vmem>>, vector<1x256x128xbf16>
    %165 = vector.shape_cast %164 : vector<1x256x128xbf16> to vector<256x128xbf16>
    %cst_79 = arith.constant dense<0.000000e+00> : vector<8x128xf32>
    %166 = tpu.matmul %163, %165, %cst_79 {dimension_numbers = #tpu.dot_dimension_numbers<[1], [0], [0], [1], [0, 0, 1, 1], [], []>} : vector<8x256xbf16>, vector<256x128xbf16>, vector<8x128xf32> -> vector<8x128xf32>
    %c0_i32_80 = arith.constant 0 : i32
    %c0_i32_81 = arith.constant 0 : i32
    %c0_i32_82 = arith.constant 0 : i32
    %167 = tpu.memref_slice %arg5[%c0_i32_80, %c0_i32_81, %c0_i32_82] : memref<2x8x384xf32, #tpu.memory_space<vmem>> -> memref<1x8x384xf32, #tpu.memory_space<vmem>>
    %168 = tpu.memref_squeeze %167 : memref<1x8x384xf32, #tpu.memory_space<vmem>> -> memref<8x384xf32, #tpu.memory_space<vmem>>
    %c5 = arith.constant 5 : index
    %c0_83 = arith.constant 0 : index
    %169 = vector.load %168[%c5, %c0_83] : memref<8x384xf32, #tpu.memory_space<vmem>>, vector<1x128xf32>
    %170 = vector.broadcast %169 : vector<1x128xf32> to vector<8x128xf32>
    %171 = arith.addf %166, %170 : vector<8x128xf32>
    %172 = arith.addf %139, %171 : vector<8x128xf32>
    %c0_i32_84 = arith.constant 0 : i32
    %c0_i32_85 = arith.constant 0 : i32
    %c0_i32_86 = arith.constant 0 : i32
    %173 = tpu.memref_slice %arg5[%c0_i32_84, %c0_i32_85, %c0_i32_86] : memref<2x8x384xf32, #tpu.memory_space<vmem>> -> memref<1x8x384xf32, #tpu.memory_space<vmem>>
    %174 = tpu.memref_squeeze %173 : memref<1x8x384xf32, #tpu.memory_space<vmem>> -> memref<8x384xf32, #tpu.memory_space<vmem>>
    %c6 = arith.constant 6 : index
    %c0_87 = arith.constant 0 : index
    %175 = vector.load %174[%c6, %c0_87] : memref<8x384xf32, #tpu.memory_space<vmem>>, vector<1x128xf32>
    %c0_i32_88 = arith.constant 0 : i32
    %c0_i32_89 = arith.constant 0 : i32
    %c0_i32_90 = arith.constant 0 : i32
    %176 = tpu.memref_slice %arg5[%c0_i32_88, %c0_i32_89, %c0_i32_90] : memref<2x8x384xf32, #tpu.memory_space<vmem>> -> memref<1x8x384xf32, #tpu.memory_space<vmem>>
    %177 = tpu.memref_squeeze %176 : memref<1x8x384xf32, #tpu.memory_space<vmem>> -> memref<8x384xf32, #tpu.memory_space<vmem>>
    %c7 = arith.constant 7 : index
    %c0_91 = arith.constant 0 : index
    %178 = vector.load %177[%c7, %c0_91] : memref<8x384xf32, #tpu.memory_space<vmem>>, vector<1x128xf32>
    %cst_92 = arith.constant dense<0.000000e+00> : vector<8xf32>
    %179 = vector.multi_reduction <add>, %172, %cst_92 [1] : vector<8x128xf32> to vector<8xf32>
    %180 = vector.shape_cast %179 : vector<8xf32> to vector<8x1xf32>
    %cst_93 = arith.constant 1.280000e+02 : f32
    %181 = vector.broadcast %cst_93 : f32 to vector<8x1xf32>
    %182 = arith.divf %180, %181 : vector<8x1xf32>
    %183 = vector.broadcast %182 : vector<8x1xf32> to vector<8x128xf32>
    %184 = arith.subf %172, %183 : vector<8x128xf32>
    %185 = arith.mulf %184, %184 : vector<8x128xf32>
    %cst_94 = arith.constant dense<0.000000e+00> : vector<8xf32>
    %186 = vector.multi_reduction <add>, %185, %cst_94 [1] : vector<8x128xf32> to vector<8xf32>
    %187 = vector.shape_cast %186 : vector<8xf32> to vector<8x1xf32>
    %cst_95 = arith.constant 1.280000e+02 : f32
    %188 = vector.broadcast %cst_95 : f32 to vector<8x1xf32>
    %189 = arith.divf %187, %188 : vector<8x1xf32>
    %190 = vector.broadcast %182 : vector<8x1xf32> to vector<8x128xf32>
    %191 = arith.subf %172, %190 : vector<8x128xf32>
    %cst_96 = arith.constant 9.99999996E-13 : f32
    %192 = vector.broadcast %cst_96 : f32 to vector<8x1xf32>
    %193 = arith.addf %189, %192 : vector<8x1xf32>
    %194 = math.rsqrt %193 : vector<8x1xf32>
    %195 = vector.broadcast %194 : vector<8x1xf32> to vector<8x128xf32>
    %196 = arith.mulf %191, %195 : vector<8x128xf32>
    %197 = vector.broadcast %175 : vector<1x128xf32> to vector<8x128xf32>
    %198 = arith.mulf %196, %197 : vector<8x128xf32>
    %199 = vector.broadcast %178 : vector<1x128xf32> to vector<8x128xf32>
    %200 = arith.addf %198, %199 : vector<8x128xf32>
    %201 = arith.truncf %200 : vector<8x128xf32> to vector<8x128xbf16>
    %c1_i32 = arith.constant 1 : i32
    %c0_i32_97 = arith.constant 0 : i32
    %c0_i32_98 = arith.constant 0 : i32
    %202 = tpu.memref_slice %arg3[%c1_i32, %c0_i32_97, %c0_i32_98] : memref<2x128x768xbf16, #tpu.memory_space<vmem>> -> memref<1x128x768xbf16, #tpu.memory_space<vmem>>
    %203 = tpu.memref_squeeze %202 : memref<1x128x768xbf16, #tpu.memory_space<vmem>> -> memref<128x768xbf16, #tpu.memory_space<vmem>>
    %c0_99 = arith.constant 0 : index
    %c0_100 = arith.constant 0 : index
    %204 = vector.load %203[%c0_99, %c0_100] : memref<128x768xbf16, #tpu.memory_space<vmem>>, vector<128x384xbf16>
    %cst_101 = arith.constant dense<0.000000e+00> : vector<8x384xf32>
    %205 = tpu.matmul %201, %204, %cst_101 {dimension_numbers = #tpu.dot_dimension_numbers<[1], [0], [0], [1], [0, 0, 1, 1], [], []>} : vector<8x128xbf16>, vector<128x384xbf16>, vector<8x384xf32> -> vector<8x384xf32>
    %c1_i32_102 = arith.constant 1 : i32
    %c0_i32_103 = arith.constant 0 : i32
    %c0_i32_104 = arith.constant 0 : i32
    %206 = tpu.memref_slice %arg5[%c1_i32_102, %c0_i32_103, %c0_i32_104] : memref<2x8x384xf32, #tpu.memory_space<vmem>> -> memref<1x8x384xf32, #tpu.memory_space<vmem>>
    %207 = tpu.memref_squeeze %206 : memref<1x8x384xf32, #tpu.memory_space<vmem>> -> memref<8x384xf32, #tpu.memory_space<vmem>>
    %c0_105 = arith.constant 0 : index
    %c0_106 = arith.constant 0 : index
    %208 = vector.load %207[%c0_105, %c0_106] : memref<8x384xf32, #tpu.memory_space<vmem>>, vector<1x384xf32>
    %209 = vector.broadcast %208 : vector<1x384xf32> to vector<8x384xf32>
    %210 = arith.addf %205, %209 : vector<8x384xf32>
    %cst_107 = arith.constant 0.000000e+00 : f32
    %211 = vector.broadcast %cst_107 : f32 to vector<8x128xf32>
    %212 = vector.extract_strided_slice %210 {offsets = [0, 0], sizes = [8, 64], strides = [1, 1]} : vector<8x384xf32> to vector<8x64xf32>
    %213 = vector.extract_strided_slice %210 {offsets = [0, 128], sizes = [8, 64], strides = [1, 1]} : vector<8x384xf32> to vector<8x64xf32>
    %214 = vector.extract_strided_slice %210 {offsets = [0, 256], sizes = [8, 64], strides = [1, 1]} : vector<8x384xf32> to vector<8x64xf32>
    %cst_108 = arith.constant dense<0.000000e+00> : vector<8x8xf32>
    %215 = tpu.matmul %212, %213, %cst_108 {dimension_numbers = #tpu.dot_dimension_numbers<[1], [1], [0], [0], [0, 0, 1, 0], [], []>} : vector<8x64xf32>, vector<8x64xf32>, vector<8x8xf32> -> vector<8x8xf32>
    %216 = vector.broadcast %48 : vector<1x8xf32> to vector<8x8xf32>
    %217 = arith.addf %215, %216 : vector<8x8xf32>
    %cst_109 = arith.constant dense<0xFF800000> : vector<8xf32>
    %218 = vector.multi_reduction <maximumf>, %217, %cst_109 [1] : vector<8x8xf32> to vector<8xf32>
    %219 = vector.shape_cast %218 : vector<8xf32> to vector<8x1xf32>
    %220 = vector.broadcast %219 : vector<8x1xf32> to vector<8x8xf32>
    %221 = arith.subf %217, %220 : vector<8x8xf32>
    %222 = math.exp %221 : vector<8x8xf32>
    %cst_110 = arith.constant dense<0.000000e+00> : vector<8xf32>
    %223 = vector.multi_reduction <add>, %222, %cst_110 [1] : vector<8x8xf32> to vector<8xf32>
    %224 = vector.shape_cast %223 : vector<8xf32> to vector<8x1xf32>
    %225 = tpu.reciprocal %224 {approx = true} : vector<8x1xf32> -> vector<8x1xf32>
    %226 = vector.broadcast %225 : vector<8x1xf32> to vector<8x8xf32>
    %227 = arith.mulf %222, %226 : vector<8x8xf32>
    %cst_111 = arith.constant dense<0.000000e+00> : vector<8x64xf32>
    %228 = tpu.matmul %227, %214, %cst_111 {dimension_numbers = #tpu.dot_dimension_numbers<[1], [0], [0], [1], [0, 0, 1, 1], [], []>} : vector<8x8xf32>, vector<8x64xf32>, vector<8x64xf32> -> vector<8x64xf32>
    %229 = arith.truncf %228 : vector<8x64xf32> to vector<8x64xbf16>
    %c1_i32_112 = arith.constant 1 : i32
    %c0_i32_113 = arith.constant 0 : i32
    %c0_i32_114 = arith.constant 0 : i32
    %230 = tpu.memref_slice %arg3[%c1_i32_112, %c0_i32_113, %c0_i32_114] : memref<2x128x768xbf16, #tpu.memory_space<vmem>> -> memref<1x128x768xbf16, #tpu.memory_space<vmem>>
    %231 = tpu.memref_squeeze %230 : memref<1x128x768xbf16, #tpu.memory_space<vmem>> -> memref<128x768xbf16, #tpu.memory_space<vmem>>
    %c0_115 = arith.constant 0 : index
    %c384_116 = arith.constant 384 : index
    %232 = vector.load %231[%c0_115, %c384_116] : memref<128x768xbf16, #tpu.memory_space<vmem>>, vector<64x128xbf16>
    %cst_117 = arith.constant dense<0.000000e+00> : vector<8x128xf32>
    %233 = tpu.matmul %229, %232, %cst_117 {dimension_numbers = #tpu.dot_dimension_numbers<[1], [0], [0], [1], [0, 0, 1, 1], [], []>} : vector<8x64xbf16>, vector<64x128xbf16>, vector<8x128xf32> -> vector<8x128xf32>
    %234 = arith.addf %211, %233 : vector<8x128xf32>
    %235 = vector.extract_strided_slice %210 {offsets = [0, 64], sizes = [8, 64], strides = [1, 1]} : vector<8x384xf32> to vector<8x64xf32>
    %236 = vector.extract_strided_slice %210 {offsets = [0, 192], sizes = [8, 64], strides = [1, 1]} : vector<8x384xf32> to vector<8x64xf32>
    %237 = vector.extract_strided_slice %210 {offsets = [0, 320], sizes = [8, 64], strides = [1, 1]} : vector<8x384xf32> to vector<8x64xf32>
    %cst_118 = arith.constant dense<0.000000e+00> : vector<8x8xf32>
    %238 = tpu.matmul %235, %236, %cst_118 {dimension_numbers = #tpu.dot_dimension_numbers<[1], [1], [0], [0], [0, 0, 1, 0], [], []>} : vector<8x64xf32>, vector<8x64xf32>, vector<8x8xf32> -> vector<8x8xf32>
    %239 = vector.broadcast %48 : vector<1x8xf32> to vector<8x8xf32>
    %240 = arith.addf %238, %239 : vector<8x8xf32>
    %cst_119 = arith.constant dense<0xFF800000> : vector<8xf32>
    %241 = vector.multi_reduction <maximumf>, %240, %cst_119 [1] : vector<8x8xf32> to vector<8xf32>
    %242 = vector.shape_cast %241 : vector<8xf32> to vector<8x1xf32>
    %243 = vector.broadcast %242 : vector<8x1xf32> to vector<8x8xf32>
    %244 = arith.subf %240, %243 : vector<8x8xf32>
    %245 = math.exp %244 : vector<8x8xf32>
    %cst_120 = arith.constant dense<0.000000e+00> : vector<8xf32>
    %246 = vector.multi_reduction <add>, %245, %cst_120 [1] : vector<8x8xf32> to vector<8xf32>
    %247 = vector.shape_cast %246 : vector<8xf32> to vector<8x1xf32>
    %248 = tpu.reciprocal %247 {approx = true} : vector<8x1xf32> -> vector<8x1xf32>
    %249 = vector.broadcast %248 : vector<8x1xf32> to vector<8x8xf32>
    %250 = arith.mulf %245, %249 : vector<8x8xf32>
    %cst_121 = arith.constant dense<0.000000e+00> : vector<8x64xf32>
    %251 = tpu.matmul %250, %237, %cst_121 {dimension_numbers = #tpu.dot_dimension_numbers<[1], [0], [0], [1], [0, 0, 1, 1], [], []>} : vector<8x8xf32>, vector<8x64xf32>, vector<8x64xf32> -> vector<8x64xf32>
    %252 = arith.truncf %251 : vector<8x64xf32> to vector<8x64xbf16>
    %c1_i32_122 = arith.constant 1 : i32
    %c0_i32_123 = arith.constant 0 : i32
    %c0_i32_124 = arith.constant 0 : i32
    %253 = tpu.memref_slice %arg3[%c1_i32_122, %c0_i32_123, %c0_i32_124] : memref<2x128x768xbf16, #tpu.memory_space<vmem>> -> memref<1x128x768xbf16, #tpu.memory_space<vmem>>
    %254 = tpu.memref_squeeze %253 : memref<1x128x768xbf16, #tpu.memory_space<vmem>> -> memref<128x768xbf16, #tpu.memory_space<vmem>>
    %c64_125 = arith.constant 64 : index
    %c384_126 = arith.constant 384 : index
    %255 = vector.load %254[%c64_125, %c384_126] : memref<128x768xbf16, #tpu.memory_space<vmem>>, vector<64x128xbf16>
    %cst_127 = arith.constant dense<0.000000e+00> : vector<8x128xf32>
    %256 = tpu.matmul %252, %255, %cst_127 {dimension_numbers = #tpu.dot_dimension_numbers<[1], [0], [0], [1], [0, 0, 1, 1], [], []>} : vector<8x64xbf16>, vector<64x128xbf16>, vector<8x128xf32> -> vector<8x128xf32>
    %257 = arith.addf %234, %256 : vector<8x128xf32>
    %c1_i32_128 = arith.constant 1 : i32
    %c0_i32_129 = arith.constant 0 : i32
    %c0_i32_130 = arith.constant 0 : i32
    %258 = tpu.memref_slice %arg5[%c1_i32_128, %c0_i32_129, %c0_i32_130] : memref<2x8x384xf32, #tpu.memory_space<vmem>> -> memref<1x8x384xf32, #tpu.memory_space<vmem>>
    %259 = tpu.memref_squeeze %258 : memref<1x8x384xf32, #tpu.memory_space<vmem>> -> memref<8x384xf32, #tpu.memory_space<vmem>>
    %c1_131 = arith.constant 1 : index
    %c0_132 = arith.constant 0 : index
    %260 = vector.load %259[%c1_131, %c0_132] : memref<8x384xf32, #tpu.memory_space<vmem>>, vector<1x128xf32>
    %261 = vector.broadcast %260 : vector<1x128xf32> to vector<8x128xf32>
    %262 = arith.addf %257, %261 : vector<8x128xf32>
    %263 = arith.addf %200, %262 : vector<8x128xf32>
    %c1_i32_133 = arith.constant 1 : i32
    %c0_i32_134 = arith.constant 0 : i32
    %c0_i32_135 = arith.constant 0 : i32
    %264 = tpu.memref_slice %arg5[%c1_i32_133, %c0_i32_134, %c0_i32_135] : memref<2x8x384xf32, #tpu.memory_space<vmem>> -> memref<1x8x384xf32, #tpu.memory_space<vmem>>
    %265 = tpu.memref_squeeze %264 : memref<1x8x384xf32, #tpu.memory_space<vmem>> -> memref<8x384xf32, #tpu.memory_space<vmem>>
    %c2_136 = arith.constant 2 : index
    %c0_137 = arith.constant 0 : index
    %266 = vector.load %265[%c2_136, %c0_137] : memref<8x384xf32, #tpu.memory_space<vmem>>, vector<1x128xf32>
    %c1_i32_138 = arith.constant 1 : i32
    %c0_i32_139 = arith.constant 0 : i32
    %c0_i32_140 = arith.constant 0 : i32
    %267 = tpu.memref_slice %arg5[%c1_i32_138, %c0_i32_139, %c0_i32_140] : memref<2x8x384xf32, #tpu.memory_space<vmem>> -> memref<1x8x384xf32, #tpu.memory_space<vmem>>
    %268 = tpu.memref_squeeze %267 : memref<1x8x384xf32, #tpu.memory_space<vmem>> -> memref<8x384xf32, #tpu.memory_space<vmem>>
    %c3_141 = arith.constant 3 : index
    %c0_142 = arith.constant 0 : index
    %269 = vector.load %268[%c3_141, %c0_142] : memref<8x384xf32, #tpu.memory_space<vmem>>, vector<1x128xf32>
    %cst_143 = arith.constant dense<0.000000e+00> : vector<8xf32>
    %270 = vector.multi_reduction <add>, %263, %cst_143 [1] : vector<8x128xf32> to vector<8xf32>
    %271 = vector.shape_cast %270 : vector<8xf32> to vector<8x1xf32>
    %cst_144 = arith.constant 1.280000e+02 : f32
    %272 = vector.broadcast %cst_144 : f32 to vector<8x1xf32>
    %273 = arith.divf %271, %272 : vector<8x1xf32>
    %274 = vector.broadcast %273 : vector<8x1xf32> to vector<8x128xf32>
    %275 = arith.subf %263, %274 : vector<8x128xf32>
    %276 = arith.mulf %275, %275 : vector<8x128xf32>
    %cst_145 = arith.constant dense<0.000000e+00> : vector<8xf32>
    %277 = vector.multi_reduction <add>, %276, %cst_145 [1] : vector<8x128xf32> to vector<8xf32>
    %278 = vector.shape_cast %277 : vector<8xf32> to vector<8x1xf32>
    %cst_146 = arith.constant 1.280000e+02 : f32
    %279 = vector.broadcast %cst_146 : f32 to vector<8x1xf32>
    %280 = arith.divf %278, %279 : vector<8x1xf32>
    %281 = vector.broadcast %273 : vector<8x1xf32> to vector<8x128xf32>
    %282 = arith.subf %263, %281 : vector<8x128xf32>
    %cst_147 = arith.constant 9.99999996E-13 : f32
    %283 = vector.broadcast %cst_147 : f32 to vector<8x1xf32>
    %284 = arith.addf %280, %283 : vector<8x1xf32>
    %285 = math.rsqrt %284 : vector<8x1xf32>
    %286 = vector.broadcast %285 : vector<8x1xf32> to vector<8x128xf32>
    %287 = arith.mulf %282, %286 : vector<8x128xf32>
    %288 = vector.broadcast %266 : vector<1x128xf32> to vector<8x128xf32>
    %289 = arith.mulf %287, %288 : vector<8x128xf32>
    %290 = vector.broadcast %269 : vector<1x128xf32> to vector<8x128xf32>
    %291 = arith.addf %289, %290 : vector<8x128xf32>
    %292 = arith.truncf %291 : vector<8x128xf32> to vector<8x128xbf16>
    %c1_i32_148 = arith.constant 1 : i32
    %c0_i32_149 = arith.constant 0 : i32
    %c0_i32_150 = arith.constant 0 : i32
    %293 = tpu.memref_slice %arg3[%c1_i32_148, %c0_i32_149, %c0_i32_150] : memref<2x128x768xbf16, #tpu.memory_space<vmem>> -> memref<1x128x768xbf16, #tpu.memory_space<vmem>>
    %294 = tpu.memref_squeeze %293 : memref<1x128x768xbf16, #tpu.memory_space<vmem>> -> memref<128x768xbf16, #tpu.memory_space<vmem>>
    %c0_151 = arith.constant 0 : index
    %c512_152 = arith.constant 512 : index
    %295 = vector.load %294[%c0_151, %c512_152] : memref<128x768xbf16, #tpu.memory_space<vmem>>, vector<128x256xbf16>
    %cst_153 = arith.constant dense<0.000000e+00> : vector<8x256xf32>
    %296 = tpu.matmul %292, %295, %cst_153 {dimension_numbers = #tpu.dot_dimension_numbers<[1], [0], [0], [1], [0, 0, 1, 1], [], []>} : vector<8x128xbf16>, vector<128x256xbf16>, vector<8x256xf32> -> vector<8x256xf32>
    %c1_i32_154 = arith.constant 1 : i32
    %c0_i32_155 = arith.constant 0 : i32
    %c0_i32_156 = arith.constant 0 : i32
    %297 = tpu.memref_slice %arg5[%c1_i32_154, %c0_i32_155, %c0_i32_156] : memref<2x8x384xf32, #tpu.memory_space<vmem>> -> memref<1x8x384xf32, #tpu.memory_space<vmem>>
    %298 = tpu.memref_squeeze %297 : memref<1x8x384xf32, #tpu.memory_space<vmem>> -> memref<8x384xf32, #tpu.memory_space<vmem>>
    %c4_157 = arith.constant 4 : index
    %c0_158 = arith.constant 0 : index
    %299 = vector.load %298[%c4_157, %c0_158] : memref<8x384xf32, #tpu.memory_space<vmem>>, vector<1x256xf32>
    %300 = vector.broadcast %299 : vector<1x256xf32> to vector<8x256xf32>
    %301 = arith.addf %296, %300 : vector<8x256xf32>
    %302 = arith.mulf %301, %301 : vector<8x256xf32>
    %303 = arith.mulf %301, %302 : vector<8x256xf32>
    %cst_159 = arith.constant 4.471500e-02 : f32
    %304 = vector.broadcast %cst_159 : f32 to vector<8x256xf32>
    %305 = arith.mulf %304, %303 : vector<8x256xf32>
    %306 = arith.addf %301, %305 : vector<8x256xf32>
    %cst_160 = arith.constant 0.797884583 : f32
    %307 = vector.broadcast %cst_160 : f32 to vector<8x256xf32>
    %308 = arith.mulf %307, %306 : vector<8x256xf32>
    %309 = math.tanh %308 : vector<8x256xf32>
    %cst_161 = arith.constant 1.000000e+00 : f32
    %310 = vector.broadcast %cst_161 : f32 to vector<8x256xf32>
    %311 = arith.addf %310, %309 : vector<8x256xf32>
    %cst_162 = arith.constant 5.000000e-01 : f32
    %312 = vector.broadcast %cst_162 : f32 to vector<8x256xf32>
    %313 = arith.mulf %312, %311 : vector<8x256xf32>
    %314 = arith.mulf %301, %313 : vector<8x256xf32>
    %315 = arith.truncf %314 : vector<8x256xf32> to vector<8x256xbf16>
    %c1_163 = arith.constant 1 : index
    %c0_164 = arith.constant 0 : index
    %c0_165 = arith.constant 0 : index
    %316 = vector.load %arg4[%c1_163, %c0_164, %c0_165] : memref<2x256x128xbf16, #tpu.memory_space<vmem>>, vector<1x256x128xbf16>
    %317 = vector.shape_cast %316 : vector<1x256x128xbf16> to vector<256x128xbf16>
    %cst_166 = arith.constant dense<0.000000e+00> : vector<8x128xf32>
    %318 = tpu.matmul %315, %317, %cst_166 {dimension_numbers = #tpu.dot_dimension_numbers<[1], [0], [0], [1], [0, 0, 1, 1], [], []>} : vector<8x256xbf16>, vector<256x128xbf16>, vector<8x128xf32> -> vector<8x128xf32>
    %c1_i32_167 = arith.constant 1 : i32
    %c0_i32_168 = arith.constant 0 : i32
    %c0_i32_169 = arith.constant 0 : i32
    %319 = tpu.memref_slice %arg5[%c1_i32_167, %c0_i32_168, %c0_i32_169] : memref<2x8x384xf32, #tpu.memory_space<vmem>> -> memref<1x8x384xf32, #tpu.memory_space<vmem>>
    %320 = tpu.memref_squeeze %319 : memref<1x8x384xf32, #tpu.memory_space<vmem>> -> memref<8x384xf32, #tpu.memory_space<vmem>>
    %c5_170 = arith.constant 5 : index
    %c0_171 = arith.constant 0 : index
    %321 = vector.load %320[%c5_170, %c0_171] : memref<8x384xf32, #tpu.memory_space<vmem>>, vector<1x128xf32>
    %322 = vector.broadcast %321 : vector<1x128xf32> to vector<8x128xf32>
    %323 = arith.addf %318, %322 : vector<8x128xf32>
    %324 = arith.addf %291, %323 : vector<8x128xf32>
    %c1_i32_172 = arith.constant 1 : i32
    %c0_i32_173 = arith.constant 0 : i32
    %c0_i32_174 = arith.constant 0 : i32
    %325 = tpu.memref_slice %arg5[%c1_i32_172, %c0_i32_173, %c0_i32_174] : memref<2x8x384xf32, #tpu.memory_space<vmem>> -> memref<1x8x384xf32, #tpu.memory_space<vmem>>
    %326 = tpu.memref_squeeze %325 : memref<1x8x384xf32, #tpu.memory_space<vmem>> -> memref<8x384xf32, #tpu.memory_space<vmem>>
    %c6_175 = arith.constant 6 : index
    %c0_176 = arith.constant 0 : index
    %327 = vector.load %326[%c6_175, %c0_176] : memref<8x384xf32, #tpu.memory_space<vmem>>, vector<1x128xf32>
    %c1_i32_177 = arith.constant 1 : i32
    %c0_i32_178 = arith.constant 0 : i32
    %c0_i32_179 = arith.constant 0 : i32
    %328 = tpu.memref_slice %arg5[%c1_i32_177, %c0_i32_178, %c0_i32_179] : memref<2x8x384xf32, #tpu.memory_space<vmem>> -> memref<1x8x384xf32, #tpu.memory_space<vmem>>
    %329 = tpu.memref_squeeze %328 : memref<1x8x384xf32, #tpu.memory_space<vmem>> -> memref<8x384xf32, #tpu.memory_space<vmem>>
    %c7_180 = arith.constant 7 : index
    %c0_181 = arith.constant 0 : index
    %330 = vector.load %329[%c7_180, %c0_181] : memref<8x384xf32, #tpu.memory_space<vmem>>, vector<1x128xf32>
    %cst_182 = arith.constant dense<0.000000e+00> : vector<8xf32>
    %331 = vector.multi_reduction <add>, %324, %cst_182 [1] : vector<8x128xf32> to vector<8xf32>
    %332 = vector.shape_cast %331 : vector<8xf32> to vector<8x1xf32>
    %cst_183 = arith.constant 1.280000e+02 : f32
    %333 = vector.broadcast %cst_183 : f32 to vector<8x1xf32>
    %334 = arith.divf %332, %333 : vector<8x1xf32>
    %335 = vector.broadcast %334 : vector<8x1xf32> to vector<8x128xf32>
    %336 = arith.subf %324, %335 : vector<8x128xf32>
    %337 = arith.mulf %336, %336 : vector<8x128xf32>
    %cst_184 = arith.constant dense<0.000000e+00> : vector<8xf32>
    %338 = vector.multi_reduction <add>, %337, %cst_184 [1] : vector<8x128xf32> to vector<8xf32>
    %339 = vector.shape_cast %338 : vector<8xf32> to vector<8x1xf32>
    %cst_185 = arith.constant 1.280000e+02 : f32
    %340 = vector.broadcast %cst_185 : f32 to vector<8x1xf32>
    %341 = arith.divf %339, %340 : vector<8x1xf32>
    %342 = vector.broadcast %334 : vector<8x1xf32> to vector<8x128xf32>
    %343 = arith.subf %324, %342 : vector<8x128xf32>
    %cst_186 = arith.constant 9.99999996E-13 : f32
    %344 = vector.broadcast %cst_186 : f32 to vector<8x1xf32>
    %345 = arith.addf %341, %344 : vector<8x1xf32>
    %346 = math.rsqrt %345 : vector<8x1xf32>
    %347 = vector.broadcast %346 : vector<8x1xf32> to vector<8x128xf32>
    %348 = arith.mulf %343, %347 : vector<8x128xf32>
    %349 = vector.broadcast %327 : vector<1x128xf32> to vector<8x128xf32>
    %350 = arith.mulf %348, %349 : vector<8x128xf32>
    %351 = vector.broadcast %330 : vector<1x128xf32> to vector<8x128xf32>
    %352 = arith.addf %350, %351 : vector<8x128xf32>
    %c0_187 = arith.constant 0 : index
    %c0_188 = arith.constant 0 : index
    %353 = vector.load %arg6[%c0_187, %c0_188] : memref<136x128xf32, #tpu.memory_space<vmem>>, vector<128x128xf32>
    %cst_189 = arith.constant dense<0.000000e+00> : vector<8x128xf32>
    %354 = tpu.matmul %352, %353, %cst_189 {dimension_numbers = #tpu.dot_dimension_numbers<[1], [0], [0], [1], [0, 0, 1, 1], [], []>} : vector<8x128xf32>, vector<128x128xf32>, vector<8x128xf32> -> vector<8x128xf32>
    %c128 = arith.constant 128 : index
    %c0_190 = arith.constant 0 : index
    %355 = vector.load %arg6[%c128, %c0_190] : memref<136x128xf32, #tpu.memory_space<vmem>>, vector<1x128xf32>
    %356 = vector.broadcast %355 : vector<1x128xf32> to vector<8x128xf32>
    %357 = arith.addf %354, %356 : vector<8x128xf32>
    %c0_191 = arith.constant 0 : index
    %c0_192 = arith.constant 0 : index
    %358 = vector.load %arg7[%c0_191, %c0_192] : memref<8x128xf32, #tpu.memory_space<vmem>>, vector<8x128xf32>
    tpu.vector_store %arg7[%c0_191, %c0_192], %357 {strides = array<i32>} : memref<8x128xf32, #tpu.memory_space<vmem>>, vector<8x128xf32>,
    return
  }
}

</mosaic_0001>

<llo_original>
// kernel: qabert_forward.1
$region0: #{qabert_forward.1}
  #allocation0 [shape = 'u32[]', space=smem, size = 0x4, offset = 0x4, fixed_abs, tag = 'smem constant byte address 0x4 - core index']
  #allocation1 [shape = 'u32[144,128]{1,0:T(1,128)}', space=vmem, size = 0x12000, scoped, tag = 'internal scratch']
  %s0 = inlined_call_operand.vmem [shape: s32[8,2], index: 0, kind: input, shape index: {}]
  %s1 = inlined_call_operand.vmem [shape: f32[1,8], index: 1, kind: input, shape index: {}]
  %s2 = inlined_call_operand.hbm [shape: f32[80,128], index: 2, kind: input, shape index: {}]
  %s3 = inlined_call_operand.hbm [shape: bf16[2,128,768], index: 3, kind: input, shape index: {}]
  %s4 = inlined_call_operand.hbm [shape: bf16[2,256,128], index: 4, kind: input, shape index: {}]
  %s5 = inlined_call_operand.hbm [shape: f32[2,8,384], index: 5, kind: input, shape index: {}]
  %s6 = inlined_call_operand.hbm [shape: f32[136,128], index: 6, kind: input, shape index: {}]
  %s7 = inlined_call_operand.vmem [shape: f32[8,128], index: 7, kind: output, shape index: {}]
  %s8 = sld [smem:[#allocation0]]
  $region58: #{qabert_forward.1} parent=0
    _
  %s10 = ssub.s32 1, %s8
  %s11 = scalar_select 0, %s10, %s8
  $region1: #{qabert_forward.1} parent=0
    #allocation2 [shape = 'u8[40960]{0}', space=vmem, size = 0xa000, scoped, tag = 'input window, operand 2, single buffered']
    #allocation3 [shape = 's32[1]{0}', space=sflag, size = 0x4, scoped, tag = 'scoped memory for qabert_forward.1']
    #allocation4 [shape = 'u8[393216]{0}', space=vmem, size = 0x60000, scoped, tag = 'input window, operand 3, single buffered']
    #allocation5 [shape = 's32[1]{0}', space=sflag, size = 0x4, scoped, tag = 'scoped memory for qabert_forward.1']
    #allocation6 [shape = 'u8[131072]{0}', space=vmem, size = 0x20000, scoped, tag = 'input window, operand 4, single buffered']
    #allocation7 [shape = 'u8[24576]{0}', space=vmem, size = 0x6000, scoped, tag = 'input window, operand 5, single buffered']
    #allocation8 [shape = 's32[1]{0}', space=sflag, size = 0x4, scoped, tag = 'scoped memory for qabert_forward.1']
    #allocation9 [shape = 'u8[69632]{0}', space=vmem, size = 0x11000, scoped, tag = 'input window, operand 6, single buffered']
    %12 = vsyncpa [#allocation3], 0
    %13 = vsyncpa [#allocation5], 0
    %14 = vsyncpa [#allocation8], 0
    // Predicated region
    $region2: #{qabert_forward.1} parent=1 // pred_check
      _
    $region3: #{qabert_forward.1} parent=1 // pred_check_branch
      %16 = sbr.rel (0) target = $region5
    $region4: #{qabert_forward.1} parent=1 // pred_region
      _
    $region5: #{qabert_forward.1} parent=1 // pred_fallthru
      _
    // Predicated region
    $region6: #{qabert_forward.1} parent=1 // pred_check
      _
    $region7: #{qabert_forward.1} parent=1 // pred_check_branch
      %18 = sbr.rel (0) target = $region9
    $region8: #{qabert_forward.1} parent=1 // pred_region
      _
    $region9: #{qabert_forward.1} parent=1 // pred_fallthru
      _
    // Predicated region
    $region10: #{qabert_forward.1} parent=1 // pred_check
      _
    $region11: #{qabert_forward.1} parent=1 // pred_check_branch
      %20 = sbr.rel (0) target = $region13
    $region12: #{qabert_forward.1} parent=1 // pred_region
      %s22 = ssub.s32 1280, 1280
      %23 = vsyncadd [#allocation3], %s22
      %s24 = sshll.u32 [#allocation2], 4
      %s25 = int_to_ptr.vmem [resolvable:$true] %s24
      %30 = dma.hbm_to_vmem [thread:$0]  %s2, 1280, %s25, [#allocation3], 128, 128, 8
    $region13: #{qabert_forward.1} parent=1 // pred_fallthru
      _
    // Predicated region
    $region14: #{qabert_forward.1} parent=1 // pred_check
      _
    $region15: #{qabert_forward.1} parent=1 // pred_check_branch
      %32 = sbr.rel (0) target = $region17
    $region16: #{qabert_forward.1} parent=1 // pred_region
      %s34 = ssub.s32 12288, 12288
      %35 = vsyncadd [#allocation5], %s34
      %s36 = sshll.u32 [#allocation4], 4
      %s37 = int_to_ptr.vmem [resolvable:$true] %s36
      %42 = dma.hbm_to_vmem [thread:$0]  %s3, 12288, %s37, [#allocation5], 384, 384, 24
    $region17: #{qabert_forward.1} parent=1 // pred_fallthru
      _
    // Predicated region
    $region18: #{qabert_forward.1} parent=1 // pred_check
      _
    $region19: #{qabert_forward.1} parent=1 // pred_check_branch
      %44 = sbr.rel (0) target = $region21
    $region20: #{qabert_forward.1} parent=1 // pred_region
      %s46 = ssub.s32 4096, 4096
      %47 = vsyncadd [#allocation5], %s46
      %s48 = sshll.u32 [#allocation6], 4
      %s49 = int_to_ptr.vmem [resolvable:$true] %s48
      %54 = dma.hbm_to_vmem [thread:$0]  %s4, 4096, %s49, [#allocation5], 64, 64, 4
    $region21: #{qabert_forward.1} parent=1 // pred_fallthru
      _
    // Predicated region
    $region22: #{qabert_forward.1} parent=1 // pred_check
      _
    $region23: #{qabert_forward.1} parent=1 // pred_check_branch
      %56 = sbr.rel (0) target = $region25
    $region24: #{qabert_forward.1} parent=1 // pred_region
      %s58 = ssub.s32 768, 768
      %59 = vsyncadd [#allocation8], %s58
      %s60 = sshll.u32 [#allocation7], 4
      %s61 = int_to_ptr.vmem [resolvable:$true] %s60
      %66 = dma.hbm_to_vmem [thread:$0]  %s5, 768, %s61, [#allocation8], 384, 384, 24
    $region25: #{qabert_forward.1} parent=1 // pred_fallthru
      _
    // Predicated region
    $region26: #{qabert_forward.1} parent=1 // pred_check
      _
    $region27: #{qabert_forward.1} parent=1 // pred_check_branch
      %68 = sbr.rel (0) target = $region29
    $region28: #{qabert_forward.1} parent=1 // pred_region
      %s70 = ssub.s32 2176, 2176
      %71 = vsyncadd [#allocation8], %s70
      %s72 = sshll.u32 [#allocation9], 4
      %s73 = int_to_ptr.vmem [resolvable:$true] %s72
      %78 = dma.hbm_to_vmem [thread:$0]  %s6, 2176, %s73, [#allocation8], 128, 128, 8
    $region29: #{qabert_forward.1} parent=1 // pred_fallthru
      _
    // Predicated region
    $region30: #{qabert_forward.1} parent=1 // pred_check
      _
    $region31: #{qabert_forward.1} parent=1 // pred_check_branch
      %80 = sbr.rel (0) target = $region33
    $region32: #{qabert_forward.1} parent=1 // pred_region
      %81 = dma.done [#allocation3], 1280
    $region33: #{qabert_forward.1} parent=1 // pred_fallthru
      _
    // Predicated region
    $region34: #{qabert_forward.1} parent=1 // pred_check
      _
    $region35: #{qabert_forward.1} parent=1 // pred_check_branch
      %83 = sbr.rel (0) target = $region37
    $region36: #{qabert_forward.1} parent=1 // pred_region
      %84 = dma.done [#allocation5], 12288
    $region37: #{qabert_forward.1} parent=1 // pred_fallthru
      _
    // Predicated region
    $region38: #{qabert_forward.1} parent=1 // pred_check
      _
    $region39: #{qabert_forward.1} parent=1 // pred_check_branch
      %86 = sbr.rel (0) target = $region41
    $region40: #{qabert_forward.1} parent=1 // pred_region
      %87 = dma.done [#allocation5], 4096
    $region41: #{qabert_forward.1} parent=1 // pred_fallthru
      _
    // Predicated region
    $region42: #{qabert_forward.1} parent=1 // pred_check
      _
    $region43: #{qabert_forward.1} parent=1 // pred_check_branch
      %89 = sbr.rel (0) target = $region45
    $region44: #{qabert_forward.1} parent=1 // pred_region
      %90 = dma.done [#allocation8], 768
    $region45: #{qabert_forward.1} parent=1 // pred_fallthru
      _
    // Predicated region
    $region46: #{qabert_forward.1} parent=1 // pred_check
      _
    $region47: #{qabert_forward.1} parent=1 // pred_check_branch
      %92 = sbr.rel (0) target = $region49
    $region48: #{qabert_forward.1} parent=1 // pred_region
      %93 = dma.done [#allocation8], 2176
    $region49: #{qabert_forward.1} parent=1 // pred_fallthru
      _
    %v95 = vld [vmem:[%s0] sm:$0xff]
    %v96 = vlaneseq
    %v97 = vand.u32 %v96, 127
    %98 = vset.pattern.permute.xlu0 0
    %99 = vperm.xlu0 %98, %v95
    %v100 = vpop.permute.xlu0 %99
    %vm101 = vcmp.eq.s32.totalorder %v97, %v100
    %v102 = vsel %vm101, 1, 0
    %v103 = vcvt.s32.f32 %v102
    %v104 = vld [vmem:[#allocation2] sm:$0xff]
    %v105 = vld [vmem:[#allocation2 + $0x8] sm:$0xff]
    %v106 = vld [vmem:[#allocation2 + $0x10] sm:$0xff]
    %v107 = vld [vmem:[#allocation2 + $0x18] sm:$0xff]
    %v108 = vld [vmem:[#allocation2 + $0x20] sm:$0xff]
    %v109 = vld [vmem:[#allocation2 + $0x28] sm:$0xff]
    %v110 = vld [vmem:[#allocation2 + $0x30] sm:$0xff]
    %v111 = vld [vmem:[#allocation2 + $0x38] sm:$0xff]
    %v112 = vld [vmem:[#allocation2 + $0x40] sm:$0xff]
    %vm113 = vcmp.eq.s32.totalorder %v95, 0
    %v114 = vld [vmem:[#allocation2 + $0x48] sm:$0x1]
    %v115 = vld [vmem:[#allocation2 + $0x49] sm:$0x1]
    %v116 = vsel %vm113, 1, 0
    %117 = vset.pattern.permute.xlu0 1
    %118 = vperm.xlu0 %117, %v116
    %v119 = vpop.permute.xlu0 %118
    %vm120 = vcmp.eq.s32.totalorder %v119, 1
    %v121 = vlaneseq
    %v122 = vshrl.u32 %v121, 7
    %v123 = vsub.s32 0, %v122
    %v124 = vrot.slane %v114, %v123
    %v125 = vlaneseq
    %v126 = vshrl.u32 %v125, 7
    %v127 = vsub.s32 0, %v126
    %v128 = vrot.slane %v115, %v127
    %v129 = vsel %vm120, %v124, %v128
    %vm130 = vcmask 523264
    %v132 = vsel %vm130, %v103, 0
    %134 = vmatprep.subr.mxu0 0.0
    %135 = vmatpush1.msra.mxu0 0.0
    %136 = vmatprep.subr.mxu0 0.0
    %137 = vmatpush1.msra.mxu0 0.0
    %138 = vmatprep.subr.mxu0 0.0
    %139 = vmatpush1.msra.mxu0 0.0
    %140 = vmatprep.subr.mxu0 0.0
    %141 = vmatpush1.msra.mxu0 0.0
    %142 = vmatprep.subr.mxu0 0.0
    %143 = vmatpush1.msra.mxu0 0.0
    %144 = vmatprep.subr.mxu0 0.0
    %145 = vmatpush1.msra.mxu0 0.0
    %146 = vmatprep.subr.mxu0 0.0
    %147 = vmatpush1.msra.mxu0 0.0
    %148 = vmatprep.subr.mxu0 0.0
    %149 = vmatpush1.msra.mxu0 0.0
    %150 = vmatprep.subr.mxu0 0.0
    %151 = vmatpush1.msra.mxu0 %v111
    %152 = vmatprep.subr.mxu0 0.0
    %153 = vmatpush1.msra.mxu0 %v110
    %154 = vmatprep.subr.mxu0 0.0
    %155 = vmatpush1.msra.mxu0 %v109
    %156 = vmatprep.subr.mxu0 0.0
    %157 = vmatpush1.msra.mxu0 %v108
    %158 = vmatprep.subr.mxu0 0.0
    %159 = vmatpush1.msra.mxu0 %v107
    %160 = vmatprep.subr.mxu0 0.0
    %161 = vmatpush1.msra.mxu0 %v106
    %162 = vmatprep.subr.mxu0 0.0
    %163 = vmatpush1.msra.mxu0 %v105
    %164 = vmatprep.subr.mxu0 0.0
    %165 = vmatpush1.msra.mxu0 %v104
    %166 = vmatprep.subr.mxu0 0.0
    %167 = vmatpush2.msra.mxu0 0.0
    %168 = vmatprep.subr.mxu0 0.0
    %169 = vmatpush2.msra.mxu0 0.0
    %170 = vmatprep.subr.mxu0 0.0
    %171 = vmatpush2.msra.mxu0 0.0
    %172 = vmatprep.subr.mxu0 0.0
    %173 = vmatpush2.msra.mxu0 0.0
    %174 = vmatprep.subr.mxu0 0.0
    %175 = vmatpush2.msra.mxu0 0.0
    %176 = vmatprep.subr.mxu0 0.0
    %177 = vmatpush2.msra.mxu0 0.0
    %178 = vmatprep.subr.mxu0 0.0
    %179 = vmatpush2.msra.mxu0 0.0
    %180 = vmatprep.subr.mxu0 0.0
    %181 = vmatpush2.msra.mxu0 0.0
    %182 = vmatprep.subr.mxu0 0.0
    %183 = vmatpush2.msra.mxu0 0.0
    %184 = vmatprep.subr.mxu0 0.0
    %185 = vmatpush2.msra.mxu0 0.0
    %186 = vmatprep.subr.mxu0 0.0
    %187 = vmatpush2.msra.mxu0 0.0
    %188 = vmatprep.subr.mxu0 0.0
    %189 = vmatpush2.msra.mxu0 0.0
    %190 = vmatprep.subr.mxu0 0.0
    %191 = vmatpush2.msra.mxu0 0.0
    %192 = vmatprep.subr.mxu0 0.0
    %193 = vmatpush2.msra.mxu0 0.0
    %194 = vmatprep.subr.mxu0 0.0
    %195 = vmatpush2.msra.mxu0 0.0
    %196 = vmatprep.subr.mxu0 0.0
    %197 = vmatpush2.msra.mxu0 0.0
    %198 = vmatprep.mubr.f32.mxu0 0.0
    %199 = vmatmul.mubr.f32.gmra.mxu0 %v132
    %v200 = vpop.f32.mrf.mxu0
    %v201 = vadd.f32 %v112, %v200
    %v202 = vpop.f32.mrf.mxu0
    %203 = vdwg.mxu0
    %v204 = vadd.f32 %v201, %v129
    %v205 = vld [vmem:[#allocation2 + $0x4a] sm:$0x1]
    %v206 = vld [vmem:[#allocation2 + $0x4b] sm:$0x1]
    %207 = vadd.xlane.f32.xlu0 %v204
    %v208 = vpop.xlane.xlu0 %207
    %v209 = vrcp.pop 128.0
    %v210 = vmul.f32 %v208, %v209
    %v211 = vsub.f32 %v204, %v210
    %v212 = vmul.f32 %v211, %v211
    %213 = vadd.xlane.f32.xlu0 %v212
    %v214 = vpop.xlane.xlu0 %213
    %v215 = vmul.f32 %v214, %v209
    %v216 = vadd.f32 %v215, 1e-12
    %v217 = vrsqrt.pop %v216
    %v218 = vmul.f32 %v211, %v217
    %v219 = vlaneseq
    %v220 = vshrl.u32 %v219, 7
    %v221 = vsub.s32 0, %v220
    %v222 = vrot.slane %v205, %v221
    %v223 = vmul.f32 %v218, %v222
    %v224 = vlaneseq
    %v225 = vshrl.u32 %v224, 7
    %v226 = vsub.s32 0, %v225
    %v227 = vrot.slane %v206, %v226
    %v228 = vadd.f32 %v223, %v227
    %v229 = vld [vmem:[%s1] sm:$0x1]
    %v230 = vpack.c.bf16 %v228, %v228
    %v231 = vld [vmem:[#allocation4] sm:$0xff]
    %v232 = vld [vmem:[#allocation4 + $0x8] sm:$0xf]
    %v233 = vld [vmem:[#allocation4 + $0x18] sm:$0xff]
    %v234 = vld [vmem:[#allocation4 + $0x20] sm:$0xf]
    %v235 = vld [vmem:[#allocation4 + $0x30] sm:$0xff]
    %v236 = vld [vmem:[#allocation4 + $0x38] sm:$0xf]
    %v237 = vld [vmem:[#allocation4 + $0x48] sm:$0xff]
    %v238 = vld [vmem:[#allocation4 + $0x50] sm:$0xf]
    %v239 = vld [vmem:[#allocation4 + $0x60] sm:$0xff]
    %v240 = vld [vmem:[#allocation4 + $0x68] sm:$0xf]
    %v241 = vld [vmem:[#allocation4 + $0x78] sm:$0xff]
    %v242 = vld [vmem:[#allocation4 + $0x80] sm:$0xf]
    %v243 = vld [vmem:[#allocation4 + $0x90] sm:$0xff]
    %v244 = vld [vmem:[#allocation4 + $0x98] sm:$0xf]
    %v245 = vld [vmem:[#allocation4 + $0xa8] sm:$0xff]
    %v246 = vld [vmem:[#allocation4 + $0xb0] sm:$0xf]
    %v247 = vld [vmem:[#allocation4 + $0xc0] sm:$0xff]
    %v248 = vld [vmem:[#allocation4 + $0xc8] sm:$0xf]
    %v249 = vld [vmem:[#allocation4 + $0xd8] sm:$0xff]
    %v250 = vld [vmem:[#allocation4 + $0xe0] sm:$0xf]
    %v251 = vld [vmem:[#allocation4 + $0xf0] sm:$0xff]
    %v252 = vld [vmem:[#allocation4 + $0xf8] sm:$0xf]
    %v253 = vld [vmem:[#allocation4 + $0x108] sm:$0xff]
    %v254 = vld [vmem:[#allocation4 + $0x110] sm:$0xf]
    %v255 = vld [vmem:[#allocation4 + $0x120] sm:$0xff]
    %v256 = vld [vmem:[#allocation4 + $0x128] sm:$0xf]
    %v257 = vld [vmem:[#allocation4 + $0x138] sm:$0xff]
    %v258 = vld [vmem:[#allocation4 + $0x140] sm:$0xf]
    %v259 = vld [vmem:[#allocation4 + $0x150] sm:$0xff]
    %v260 = vld [vmem:[#allocation4 + $0x158] sm:$0xf]
    %v261 = vld [vmem:[#allocation4 + $0x168] sm:$0xff]
    %v262 = vld [vmem:[#allocation4 + $0x170] sm:$0xf]
    %v263 = vld [vmem:[#allocation7] ss:$8 sm:$0x7]
    %v265 = vlaneseq
    %v266 = vshrl.u32 %v265, 7
    %v267 = vsub.s32 0, %v266
    %v268 = vrot.slane %v263, %v267
    %v269 = vlaneseq
    %v270 = vshrl.u32 %v269, 7
    %v271 = vsub.s32 1, %v270
    %v272 = vrot.slane %v263, %v271
    %v273 = vlaneseq
    %v274 = vshrl.u32 %v273, 7
    %v275 = vsub.s32 2, %v274
    %v276 = vrot.slane %v263, %v275
    %v312 = vunpack.c.l.b16 %v231
    %v313 = vunpack.c.h.b16 %v231
    %v314 = vunpack.c.l.b16 %v232
    %v315 = vunpack.c.l.b16 %v233
    %v316 = vunpack.c.h.b16 %v233
    %v317 = vunpack.c.l.b16 %v234
    %v318 = vunpack.c.l.b16 %v235
    %v319 = vunpack.c.h.b16 %v235
    %v320 = vunpack.c.l.b16 %v236
    %v321 = vunpack.c.l.b16 %v237
    %v322 = vunpack.c.h.b16 %v237
    %v323 = vunpack.c.l.b16 %v238
    %v324 = vunpack.c.l.b16 %v239
    %v325 = vunpack.c.h.b16 %v239
    %v326 = vunpack.c.l.b16 %v240
    %v327 = vunpack.c.l.b16 %v241
    %v328 = vunpack.c.h.b16 %v241
    %v329 = vunpack.c.l.b16 %v242
    %v330 = vunpack.c.l.b16 %v243
    %v331 = vunpack.c.h.b16 %v243
    %v332 = vunpack.c.l.b16 %v244
    %v333 = vunpack.c.l.b16 %v245
    %v334 = vunpack.c.h.b16 %v245
    %v335 = vunpack.c.l.b16 %v246
    %v336 = vunpack.c.l.b16 %v247
    %v337 = vunpack.c.h.b16 %v247
    %v338 = vunpack.c.l.b16 %v248
    %v339 = vunpack.c.l.b16 %v249
    %v340 = vunpack.c.h.b16 %v249
    %v341 = vunpack.c.l.b16 %v250
    %v342 = vunpack.c.l.b16 %v251
    %v343 = vunpack.c.h.b16 %v251
    %v344 = vunpack.c.l.b16 %v252
    %v345 = vunpack.c.l.b16 %v253
    %v346 = vunpack.c.h.b16 %v253
    %v347 = vunpack.c.l.b16 %v254
    %v348 = vunpack.c.l.b16 %v255
    %v349 = vunpack.c.h.b16 %v255
    %v350 = vunpack.c.l.b16 %v256
    %v351 = vunpack.c.l.b16 %v257
    %v352 = vunpack.c.h.b16 %v257
    %v353 = vunpack.c.l.b16 %v258
    %v354 = vunpack.c.l.b16 %v259
    %v355 = vunpack.c.h.b16 %v259
    %v356 = vunpack.c.l.b16 %v260
    %v357 = vunpack.c.l.b16 %v261
    %v358 = vunpack.c.h.b16 %v261
    %v359 = vunpack.c.l.b16 %v262
    %v360 = vpack.c.b16 %v315, %v312
    %v361 = vpack.c.b16 %v316, %v313
    %v362 = vpack.c.b16 %v317, %v314
    %v363 = vpack.c.b16 %v321, %v318
    %v364 = vpack.c.b16 %v322, %v319
    %v365 = vpack.c.b16 %v323, %v320
    %v366 = vpack.c.b16 %v327, %v324
    %v367 = vpack.c.b16 %v328, %v325
    %v368 = vpack.c.b16 %v329, %v326
    %v369 = vpack.c.b16 %v333, %v330
    %v370 = vpack.c.b16 %v334, %v331
    %v371 = vpack.c.b16 %v335, %v332
    %v372 = vpack.c.b16 %v339, %v336
    %v373 = vpack.c.b16 %v340, %v337
    %v374 = vpack.c.b16 %v341, %v338
    %v375 = vpack.c.b16 %v345, %v342
    %v376 = vpack.c.b16 %v346, %v343
    %v377 = vpack.c.b16 %v347, %v344
    %v378 = vpack.c.b16 %v351, %v348
    %v379 = vpack.c.b16 %v352, %v349
    %v380 = vpack.c.b16 %v353, %v350
    %v381 = vpack.c.b16 %v357, %v354
    %v382 = vpack.c.b16 %v358, %v355
    %v383 = vpack.c.b16 %v359, %v356
    %408 = vmatprep.subr.bf16.mxu0 %v382
    %409 = vmatpush1.bf16.msra.mxu0 %v381
    %410 = vmatprep.subr.bf16.mxu0 %v379
    %411 = vmatpush1.bf16.msra.mxu0 %v378
    %412 = vmatprep.subr.bf16.mxu0 %v376
    %413 = vmatpush1.bf16.msra.mxu0 %v375
    %414 = vmatprep.subr.bf16.mxu0 %v373
    %415 = vmatpush1.bf16.msra.mxu0 %v372
    %416 = vmatprep.subr.bf16.mxu0 %v370
    %417 = vmatpush1.bf16.msra.mxu0 %v369
    %418 = vmatprep.subr.bf16.mxu0 %v367
    %419 = vmatpush1.bf16.msra.mxu0 %v366
    %420 = vmatprep.subr.bf16.mxu0 %v364
    %421 = vmatpush1.bf16.msra.mxu0 %v363
    %422 = vmatprep.subr.bf16.mxu0 %v361
    %423 = vmatpush1.bf16.msra.mxu0 %v360
    %424 = vmatprep.subr.bf16.mxu0 0
    %425 = vmatpush2.bf16.msra.mxu0 0
    %426 = vmatprep.subr.bf16.mxu0 0
    %427 = vmatpush2.bf16.msra.mxu0 0
    %428 = vmatprep.subr.bf16.mxu0 0
    %429 = vmatpush2.bf16.msra.mxu0 0
    %430 = vmatprep.subr.bf16.mxu0 0
    %431 = vmatpush2.bf16.msra.mxu0 0
    %432 = vmatprep.subr.bf16.mxu0 0
    %433 = vmatpush2.bf16.msra.mxu0 0
    %434 = vmatprep.subr.bf16.mxu0 0
    %435 = vmatpush2.bf16.msra.mxu0 0
    %436 = vmatprep.subr.bf16.mxu0 0
    %437 = vmatpush2.bf16.msra.mxu0 0
    %438 = vmatprep.subr.bf16.mxu0 0
    %439 = vmatpush2.bf16.msra.mxu0 0
    %440 = vmatprep.mubr.bf16.mxu0 0
    %441 = vmatmul.mubr.bf16.gmra.mxu0 %v230
    %v442 = vpop.f32.mrf.mxu0
    %v443 = vadd.f32 %v268, %v442
    %v444 = vpop.f32.mrf.mxu0
    %v445 = vadd.f32 %v272, %v444
    %v446 = vpop.f32.mrf.mxu0
    %v447 = vpop.f32.mrf.mxu0
    %448 = vdwg.mxu0
    %449 = vmatprep.subr.bf16.mxu0 0
    %450 = vmatpush1.bf16.msra.mxu0 %v383
    %451 = vmatprep.subr.bf16.mxu0 0
    %452 = vmatpush1.bf16.msra.mxu0 %v380
    %453 = vmatprep.subr.bf16.mxu0 0
    %454 = vmatpush1.bf16.msra.mxu0 %v377
    %455 = vmatprep.subr.bf16.mxu0 0
    %456 = vmatpush1.bf16.msra.mxu0 %v374
    %457 = vmatprep.subr.bf16.mxu0 0
    %458 = vmatpush1.bf16.msra.mxu0 %v371
    %459 = vmatprep.subr.bf16.mxu0 0
    %460 = vmatpush1.bf16.msra.mxu0 %v368
    %461 = vmatprep.subr.bf16.mxu0 0
    %462 = vmatpush1.bf16.msra.mxu0 %v365
    %463 = vmatprep.subr.bf16.mxu0 0
    %464 = vmatpush1.bf16.msra.mxu0 %v362
    %465 = vmatprep.subr.bf16.mxu0 0
    %466 = vmatpush2.bf16.msra.mxu0 0
    %467 = vmatprep.subr.bf16.mxu0 0
    %468 = vmatpush2.bf16.msra.mxu0 0
    %469 = vmatprep.subr.bf16.mxu0 0
    %470 = vmatpush2.bf16.msra.mxu0 0
    %471 = vmatprep.subr.bf16.mxu0 0
    %472 = vmatpush2.bf16.msra.mxu0 0
    %473 = vmatprep.subr.bf16.mxu0 0
    %474 = vmatpush2.bf16.msra.mxu0 0
    %475 = vmatprep.subr.bf16.mxu0 0
    %476 = vmatpush2.bf16.msra.mxu0 0
    %477 = vmatprep.subr.bf16.mxu0 0
    %478 = vmatpush2.bf16.msra.mxu0 0
    %479 = vmatprep.subr.bf16.mxu0 0
    %480 = vmatpush2.bf16.msra.mxu0 0
    %481 = vmatprep.mubr.bf16.mxu0 0
    %482 = vmatmul.mubr.bf16.gmra.mxu0 %v230
    %v483 = vpop.f32.mrf.mxu0
    %v484 = vadd.f32 %v276, %v483
    %v485 = vpop.f32.mrf.mxu0
    %v486 = vpop.f32.mrf.mxu0
    %v487 = vpop.f32.mrf.mxu0
    %488 = vdwg.mxu0
    %v490 = vlaneseq
    %v491 = vshrl.u32 %v490, 7
    %v492 = vsub.s32 0, %v491
    %v493 = vrot.slane %v229, %v492
    %v496 = vsel %vm130, %v443, 0
    %v499 = vsel %vm130, %v445, 0
    %501 = vmatprep.subr.mxu0 0.0
    %502 = vmatpush1.xpose.msra.mxu0 0.0
    %503 = vmatprep.subr.mxu0 0.0
    %504 = vmatpush1.xpose.msra.mxu0 0.0
    %505 = vmatprep.subr.mxu0 0.0
    %506 = vmatpush1.xpose.msra.mxu0 0.0
    %507 = vmatprep.subr.mxu0 0.0
    %508 = vmatpush1.xpose.msra.mxu0 0.0
    %509 = vmatprep.subr.mxu0 0.0
    %510 = vmatpush1.xpose.msra.mxu0 0.0
    %511 = vmatprep.subr.mxu0 0.0
    %512 = vmatpush1.xpose.msra.mxu0 0.0
    %513 = vmatprep.subr.mxu0 0.0
    %514 = vmatpush1.xpose.msra.mxu0 0.0
    %515 = vmatprep.subr.mxu0 0.0
    %516 = vmatpush1.xpose.msra.mxu0 0.0
    %517 = vmatprep.subr.mxu0 0.0
    %518 = vmatpush1.xpose.msra.mxu0 0.0
    %519 = vmatprep.subr.mxu0 0.0
    %520 = vmatpush1.xpose.msra.mxu0 0.0
    %521 = vmatprep.subr.mxu0 0.0
    %522 = vmatpush1.xpose.msra.mxu0 0.0
    %523 = vmatprep.subr.mxu0 0.0
    %524 = vmatpush1.xpose.msra.mxu0 0.0
    %525 = vmatprep.subr.mxu0 0.0
    %526 = vmatpush1.xpose.msra.mxu0 0.0
    %527 = vmatprep.subr.mxu0 0.0
    %528 = vmatpush1.xpose.msra.mxu0 0.0
    %529 = vmatprep.subr.mxu0 0.0
    %530 = vmatpush1.xpose.msra.mxu0 0.0
    %531 = vmatprep.subr.mxu0 0.0
    %532 = vmatpush1.xpose.msra.mxu0 %v499
    %533 = vmatprep.subr.mxu0 0.0
    %534 = vmatpush2.xpose.msra.mxu0 0.0
    %535 = vmatprep.subr.mxu0 0.0
    %536 = vmatpush2.xpose.msra.mxu0 0.0
    %537 = vmatprep.subr.mxu0 0.0
    %538 = vmatpush2.xpose.msra.mxu0 0.0
    %539 = vmatprep.subr.mxu0 0.0
    %540 = vmatpush2.xpose.msra.mxu0 0.0
    %541 = vmatprep.subr.mxu0 0.0
    %542 = vmatpush2.xpose.msra.mxu0 0.0
    %543 = vmatprep.subr.mxu0 0.0
    %544 = vmatpush2.xpose.msra.mxu0 0.0
    %545 = vmatprep.subr.mxu0 0.0
    %546 = vmatpush2.xpose.msra.mxu0 0.0
    %547 = vmatprep.subr.mxu0 0.0
    %548 = vmatpush2.xpose.msra.mxu0 0.0
    %549 = vmatprep.subr.mxu0 0.0
    %550 = vmatpush2.xpose.msra.mxu0 0.0
    %551 = vmatprep.subr.mxu0 0.0
    %552 = vmatpush2.xpose.msra.mxu0 0.0
    %553 = vmatprep.subr.mxu0 0.0
    %554 = vmatpush2.xpose.msra.mxu0 0.0
    %555 = vmatprep.subr.mxu0 0.0
    %556 = vmatpush2.xpose.msra.mxu0 0.0
    %557 = vmatprep.subr.mxu0 0.0
    %558 = vmatpush2.xpose.msra.mxu0 0.0
    %559 = vmatprep.subr.mxu0 0.0
    %560 = vmatpush2.xpose.msra.mxu0 0.0
    %561 = vmatprep.subr.mxu0 0.0
    %562 = vmatpush2.xpose.msra.mxu0 0.0
    %563 = vmatprep.subr.mxu0 0.0
    %564 = vmatpush2.xpose.msra.mxu0 0.0
    %565 = vmatprep.mubr.f32.mxu0 0.0
    %566 = vmatmul.mubr.f32.gmra.mxu0 %v496
    %v567 = vpop.f32.mrf.mxu0
    %v568 = vadd.f32 %v493, %v567
    %v569 = vpop.f32.mrf.mxu0
    %570 = vdwg.mxu0
    %vm571 = vcmask 64512
    %v572 = vsel %vm571, %v568, -inf
    %573 = vmax.xlane.f32.xlu0 %v572
    %v574 = vpop.xlane.xlu0 %573
    %v575 = vsub.f32 %v568, %v574
    %v576 = vmul.f32 %v575, 1.442695
    %v577 = vpow.pop %v576
    %v578 = vsel %vm571, %v577, 0.0
    %579 = vadd.xlane.f32.xlu0 %v578
    %v580 = vpop.xlane.xlu0 %579
    %v581 = vrcp.pop %v580
    %v582 = vmul.f32 %v577, %v581
    %v584 = vsel %vm571, %v582, 0
    %586 = vmatprep.subr.mxu0 0.0
    %587 = vmatpush1.msra.mxu0 0.0
    %588 = vmatprep.subr.mxu0 0.0
    %589 = vmatpush1.msra.mxu0 0.0
    %590 = vmatprep.subr.mxu0 0.0
    %591 = vmatpush1.msra.mxu0 0.0
    %592 = vmatprep.subr.mxu0 0.0
    %593 = vmatpush1.msra.mxu0 0.0
    %594 = vmatprep.subr.mxu0 0.0
    %595 = vmatpush1.msra.mxu0 0.0
    %596 = vmatprep.subr.mxu0 0.0
    %597 = vmatpush1.msra.mxu0 0.0
    %598 = vmatprep.subr.mxu0 0.0
    %599 = vmatpush1.msra.mxu0 0.0
    %600 = vmatprep.subr.mxu0 0.0
    %601 = vmatpush1.msra.mxu0 0.0
    %602 = vmatprep.subr.mxu0 0.0
    %603 = vmatpush1.msra.mxu0 0.0
    %604 = vmatprep.subr.mxu0 0.0
    %605 = vmatpush1.msra.mxu0 0.0
    %606 = vmatprep.subr.mxu0 0.0
    %607 = vmatpush1.msra.mxu0 0.0
    %608 = vmatprep.subr.mxu0 0.0
    %609 = vmatpush1.msra.mxu0 0.0
    %610 = vmatprep.subr.mxu0 0.0
    %611 = vmatpush1.msra.mxu0 0.0
    %612 = vmatprep.subr.mxu0 0.0
    %613 = vmatpush1.msra.mxu0 0.0
    %614 = vmatprep.subr.mxu0 0.0
    %615 = vmatpush1.msra.mxu0 0.0
    %616 = vmatprep.subr.mxu0 0.0
    %617 = vmatpush1.msra.mxu0 %v484
    %618 = vmatprep.subr.mxu0 0.0
    %619 = vmatpush2.msra.mxu0 0.0
    %620 = vmatprep.subr.mxu0 0.0
    %621 = vmatpush2.msra.mxu0 0.0
    %622 = vmatprep.subr.mxu0 0.0
    %623 = vmatpush2.msra.mxu0 0.0
    %624 = vmatprep.subr.mxu0 0.0
    %625 = vmatpush2.msra.mxu0 0.0
    %626 = vmatprep.subr.mxu0 0.0
    %627 = vmatpush2.msra.mxu0 0.0
    %628 = vmatprep.subr.mxu0 0.0
    %629 = vmatpush2.msra.mxu0 0.0
    %630 = vmatprep.subr.mxu0 0.0
    %631 = vmatpush2.msra.mxu0 0.0
    %632 = vmatprep.subr.mxu0 0.0
    %633 = vmatpush2.msra.mxu0 0.0
    %634 = vmatprep.subr.mxu0 0.0
    %635 = vmatpush2.msra.mxu0 0.0
    %636 = vmatprep.subr.mxu0 0.0
    %637 = vmatpush2.msra.mxu0 0.0
    %638 = vmatprep.subr.mxu0 0.0
    %639 = vmatpush2.msra.mxu0 0.0
    %640 = vmatprep.subr.mxu0 0.0
    %641 = vmatpush2.msra.mxu0 0.0
    %642 = vmatprep.subr.mxu0 0.0
    %643 = vmatpush2.msra.mxu0 0.0
    %644 = vmatprep.subr.mxu0 0.0
    %645 = vmatpush2.msra.mxu0 0.0
    %646 = vmatprep.subr.mxu0 0.0
    %647 = vmatpush2.msra.mxu0 0.0
    %648 = vmatprep.subr.mxu0 0.0
    %649 = vmatpush2.msra.mxu0 0.0
    %650 = vmatprep.mubr.f32.mxu0 0.0
    %651 = vmatmul.mubr.f32.gmra.mxu0 %v584
    %v652 = vpop.f32.mrf.mxu0
    %v653 = vadd.f32 0.0, %v652
    %v654 = vpop.f32.mrf.mxu0
    %655 = vdwg.mxu0
    %v656 = vpack.c.bf16 %v653, %v653
    %v657 = vld [vmem:[#allocation4 + $0xc] sm:$0xf]
    %v658 = vld [vmem:[#allocation4 + $0x24] sm:$0xf]
    %v659 = vld [vmem:[#allocation4 + $0x3c] sm:$0xf]
    %v660 = vld [vmem:[#allocation4 + $0x54] sm:$0xf]
    %v661 = vld [vmem:[#allocation4 + $0x6c] sm:$0xf]
    %v662 = vld [vmem:[#allocation4 + $0x84] sm:$0xf]
    %v663 = vld [vmem:[#allocation4 + $0x9c] sm:$0xf]
    %v664 = vld [vmem:[#allocation4 + $0xb4] sm:$0xf]
    %665 = vrot.lane.b32.xlu0 %v443, 64
    %v666 = vpop.permute.xlu0 %665
    %667 = vrot.lane.b32.xlu0 %v445, 64
    %v668 = vpop.permute.xlu0 %667
    %v669 = vsel %vm130, %v666, 0
    %v671 = vsel %vm130, %v668, 0
    %673 = vmatprep.subr.mxu0 0.0
    %674 = vmatpush1.xpose.msra.mxu0 0.0
    %675 = vmatprep.subr.mxu0 0.0
    %676 = vmatpush1.xpose.msra.mxu0 0.0
    %677 = vmatprep.subr.mxu0 0.0
    %678 = vmatpush1.xpose.msra.mxu0 0.0
    %679 = vmatprep.subr.mxu0 0.0
    %680 = vmatpush1.xpose.msra.mxu0 0.0
    %681 = vmatprep.subr.mxu0 0.0
    %682 = vmatpush1.xpose.msra.mxu0 0.0
    %683 = vmatprep.subr.mxu0 0.0
    %684 = vmatpush1.xpose.msra.mxu0 0.0
    %685 = vmatprep.subr.mxu0 0.0
    %686 = vmatpush1.xpose.msra.mxu0 0.0
    %687 = vmatprep.subr.mxu0 0.0
    %688 = vmatpush1.xpose.msra.mxu0 0.0
    %689 = vmatprep.subr.mxu0 0.0
    %690 = vmatpush1.xpose.msra.mxu0 0.0
    %691 = vmatprep.subr.mxu0 0.0
    %692 = vmatpush1.xpose.msra.mxu0 0.0
    %693 = vmatprep.subr.mxu0 0.0
    %694 = vmatpush1.xpose.msra.mxu0 0.0
    %695 = vmatprep.subr.mxu0 0.0
    %696 = vmatpush1.xpose.msra.mxu0 0.0
    %697 = vmatprep.subr.mxu0 0.0
    %698 = vmatpush1.xpose.msra.mxu0 0.0
    %699 = vmatprep.subr.mxu0 0.0
    %700 = vmatpush1.xpose.msra.mxu0 0.0
    %701 = vmatprep.subr.mxu0 0.0
    %702 = vmatpush1.xpose.msra.mxu0 0.0
    %703 = vmatprep.subr.mxu0 0.0
    %704 = vmatpush1.xpose.msra.mxu0 %v671
    %705 = vmatprep.subr.mxu0 0.0
    %706 = vmatpush2.xpose.msra.mxu0 0.0
    %707 = vmatprep.subr.mxu0 0.0
    %708 = vmatpush2.xpose.msra.mxu0 0.0
    %709 = vmatprep.subr.mxu0 0.0
    %710 = vmatpush2.xpose.msra.mxu0 0.0
    %711 = vmatprep.subr.mxu0 0.0
    %712 = vmatpush2.xpose.msra.mxu0 0.0
    %713 = vmatprep.subr.mxu0 0.0
    %714 = vmatpush2.xpose.msra.mxu0 0.0
    %715 = vmatprep.subr.mxu0 0.0
    %716 = vmatpush2.xpose.msra.mxu0 0.0
    %717 = vmatprep.subr.mxu0 0.0
    %718 = vmatpush2.xpose.msra.mxu0 0.0
    %719 = vmatprep.subr.mxu0 0.0
    %720 = vmatpush2.xpose.msra.mxu0 0.0
    %721 = vmatprep.subr.mxu0 0.0
    %722 = vmatpush2.xpose.msra.mxu0 0.0
    %723 = vmatprep.subr.mxu0 0.0
    %724 = vmatpush2.xpose.msra.mxu0 0.0
    %725 = vmatprep.subr.mxu0 0.0
    %726 = vmatpush2.xpose.msra.mxu0 0.0
    %727 = vmatprep.subr.mxu0 0.0
    %728 = vmatpush2.xpose.msra.mxu0 0.0
    %729 = vmatprep.subr.mxu0 0.0
    %730 = vmatpush2.xpose.msra.mxu0 0.0
    %731 = vmatprep.subr.mxu0 0.0
    %732 = vmatpush2.xpose.msra.mxu0 0.0
    %733 = vmatprep.subr.mxu0 0.0
    %734 = vmatpush2.xpose.msra.mxu0 0.0
    %735 = vmatprep.subr.mxu0 0.0
    %736 = vmatpush2.xpose.msra.mxu0 0.0
    %737 = vmatprep.mubr.f32.mxu0 0.0
    %738 = vmatmul.mubr.f32.gmra.mxu0 %v669
    %v739 = vpop.f32.mrf.mxu0
    %v740 = vadd.f32 %v493, %v739
    %v741 = vpop.f32.mrf.mxu0
    %742 = vdwg.mxu0
    %v743 = vsel %vm571, %v740, -inf
    %744 = vmax.xlane.f32.xlu0 %v743
    %v745 = vpop.xlane.xlu0 %744
    %v746 = vsub.f32 %v740, %v745
    %v747 = vmul.f32 %v746, 1.442695
    %v748 = vpow.pop %v747
    %v749 = vsel %vm571, %v748, 0.0
    %750 = vadd.xlane.f32.xlu0 %v749
    %v751 = vpop.xlane.xlu0 %750
    %v752 = vrcp.pop %v751
    %v753 = vmul.f32 %v748, %v752
    %755 = vrot.lane.b32.xlu0 %v484, 64
    %v756 = vpop.permute.xlu0 %755
    %v759 = vsel %vm571, %v753, 0
    %761 = vmatprep.subr.mxu0 0.0
    %762 = vmatpush1.msra.mxu0 0.0
    %763 = vmatprep.subr.mxu0 0.0
    %764 = vmatpush1.msra.mxu0 0.0
    %765 = vmatprep.subr.mxu0 0.0
    %766 = vmatpush1.msra.mxu0 0.0
    %767 = vmatprep.subr.mxu0 0.0
    %768 = vmatpush1.msra.mxu0 0.0
    %769 = vmatprep.subr.mxu0 0.0
    %770 = vmatpush1.msra.mxu0 0.0
    %771 = vmatprep.subr.mxu0 0.0
    %772 = vmatpush1.msra.mxu0 0.0
    %773 = vmatprep.subr.mxu0 0.0
    %774 = vmatpush1.msra.mxu0 0.0
    %775 = vmatprep.subr.mxu0 0.0
    %776 = vmatpush1.msra.mxu0 0.0
    %777 = vmatprep.subr.mxu0 0.0
    %778 = vmatpush1.msra.mxu0 0.0
    %779 = vmatprep.subr.mxu0 0.0
    %780 = vmatpush1.msra.mxu0 0.0
    %781 = vmatprep.subr.mxu0 0.0
    %782 = vmatpush1.msra.mxu0 0.0
    %783 = vmatprep.subr.mxu0 0.0
    %784 = vmatpush1.msra.mxu0 0.0
    %785 = vmatprep.subr.mxu0 0.0
    %786 = vmatpush1.msra.mxu0 0.0
    %787 = vmatprep.subr.mxu0 0.0
    %788 = vmatpush1.msra.mxu0 0.0
    %789 = vmatprep.subr.mxu0 0.0
    %790 = vmatpush1.msra.mxu0 0.0
    %791 = vmatprep.subr.mxu0 0.0
    %792 = vmatpush1.msra.mxu0 %v756
    %793 = vmatprep.subr.mxu0 0.0
    %794 = vmatpush2.msra.mxu0 0.0
    %795 = vmatprep.subr.mxu0 0.0
    %796 = vmatpush2.msra.mxu0 0.0
    %797 = vmatprep.subr.mxu0 0.0
    %798 = vmatpush2.msra.mxu0 0.0
    %799 = vmatprep.subr.mxu0 0.0
    %800 = vmatpush2.msra.mxu0 0.0
    %801 = vmatprep.subr.mxu0 0.0
    %802 = vmatpush2.msra.mxu0 0.0
    %803 = vmatprep.subr.mxu0 0.0
    %804 = vmatpush2.msra.mxu0 0.0
    %805 = vmatprep.subr.mxu0 0.0
    %806 = vmatpush2.msra.mxu0 0.0
    %807 = vmatprep.subr.mxu0 0.0
    %808 = vmatpush2.msra.mxu0 0.0
    %809 = vmatprep.subr.mxu0 0.0
    %810 = vmatpush2.msra.mxu0 0.0
    %811 = vmatprep.subr.mxu0 0.0
    %812 = vmatpush2.msra.mxu0 0.0
    %813 = vmatprep.subr.mxu0 0.0
    %814 = vmatpush2.msra.mxu0 0.0
    %815 = vmatprep.subr.mxu0 0.0
    %816 = vmatpush2.msra.mxu0 0.0
    %817 = vmatprep.subr.mxu0 0.0
    %818 = vmatpush2.msra.mxu0 0.0
    %819 = vmatprep.subr.mxu0 0.0
    %820 = vmatpush2.msra.mxu0 0.0
    %821 = vmatprep.subr.mxu0 0.0
    %822 = vmatpush2.msra.mxu0 0.0
    %823 = vmatprep.subr.mxu0 0.0
    %824 = vmatpush2.msra.mxu0 0.0
    %825 = vmatprep.mubr.f32.mxu0 0.0
    %826 = vmatmul.mubr.f32.gmra.mxu0 %v759
    %v827 = vpop.f32.mrf.mxu0
    %v828 = vadd.f32 0.0, %v827
    %v829 = vpop.f32.mrf.mxu0
    %830 = vdwg.mxu0
    %v831 = vpack.c.bf16 %v828, %v828
    %v832 = vld [vmem:[#allocation4 + $0xcc] sm:$0xf]
    %v833 = vld [vmem:[#allocation4 + $0xe4] sm:$0xf]
    %v834 = vld [vmem:[#allocation4 + $0xfc] sm:$0xf]
    %v835 = vld [vmem:[#allocation4 + $0x114] sm:$0xf]
    %v836 = vld [vmem:[#allocation4 + $0x12c] sm:$0xf]
    %v837 = vld [vmem:[#allocation4 + $0x144] sm:$0xf]
    %v838 = vld [vmem:[#allocation4 + $0x15c] sm:$0xf]
    %v839 = vld [vmem:[#allocation4 + $0x174] sm:$0xf]
    %v848 = vunpack.c.l.b16 %v832
    %v849 = vunpack.c.l.b16 %v833
    %v850 = vunpack.c.l.b16 %v834
    %v851 = vunpack.c.l.b16 %v835
    %v852 = vunpack.c.l.b16 %v836
    %v853 = vunpack.c.l.b16 %v837
    %v854 = vunpack.c.l.b16 %v838
    %v855 = vunpack.c.l.b16 %v839
    %v856 = vpack.c.b16 %v849, %v848
    %v857 = vpack.c.b16 %v851, %v850
    %v858 = vpack.c.b16 %v853, %v852
    %v859 = vpack.c.b16 %v855, %v854
    %v865 = vsel %vm130, %v831, 0
    %867 = vmatprep.subr.bf16.mxu0 0
    %868 = vmatpush1.bf16.msra.mxu0 0
    %869 = vmatprep.subr.bf16.mxu0 0
    %870 = vmatpush1.bf16.msra.mxu0 0
    %871 = vmatprep.subr.bf16.mxu0 0
    %872 = vmatpush1.bf16.msra.mxu0 0
    %873 = vmatprep.subr.bf16.mxu0 0
    %874 = vmatpush1.bf16.msra.mxu0 0
    %875 = vmatprep.subr.bf16.mxu0 0
    %876 = vmatpush1.bf16.msra.mxu0 %v859
    %877 = vmatprep.subr.bf16.mxu0 0
    %878 = vmatpush1.bf16.msra.mxu0 %v858
    %879 = vmatprep.subr.bf16.mxu0 0
    %880 = vmatpush1.bf16.msra.mxu0 %v857
    %881 = vmatprep.subr.bf16.mxu0 0
    %882 = vmatpush1.bf16.msra.mxu0 %v856
    %883 = vmatprep.subr.bf16.mxu0 0
    %884 = vmatpush2.bf16.msra.mxu0 0
    %885 = vmatprep.subr.bf16.mxu0 0
    %886 = vmatpush2.bf16.msra.mxu0 0
    %887 = vmatprep.subr.bf16.mxu0 0
    %888 = vmatpush2.bf16.msra.mxu0 0
    %889 = vmatprep.subr.bf16.mxu0 0
    %890 = vmatpush2.bf16.msra.mxu0 0
    %891 = vmatprep.subr.bf16.mxu0 0
    %892 = vmatpush2.bf16.msra.mxu0 0
    %893 = vmatprep.subr.bf16.mxu0 0
    %894 = vmatpush2.bf16.msra.mxu0 0
    %895 = vmatprep.subr.bf16.mxu0 0
    %896 = vmatpush2.bf16.msra.mxu0 0
    %897 = vmatprep.subr.bf16.mxu0 0
    %898 = vmatpush2.bf16.msra.mxu0 0
    %899 = vmatprep.mubr.bf16.mxu0 0
    %900 = vmatmul.mubr.bf16.gmra.mxu0 %v865
    %v901 = vpop.f32.mrf.mxu0
    %v902 = vadd.f32 0.0, %v901
    %v903 = vpop.f32.mrf.mxu0
    %v904 = vpop.f32.mrf.mxu0
    %v905 = vpop.f32.mrf.mxu0
    %906 = vdwg.mxu0
    %v915 = vunpack.c.l.b16 %v657
    %v916 = vunpack.c.l.b16 %v658
    %v917 = vunpack.c.l.b16 %v659
    %v918 = vunpack.c.l.b16 %v660
    %v919 = vunpack.c.l.b16 %v661
    %v920 = vunpack.c.l.b16 %v662
    %v921 = vunpack.c.l.b16 %v663
    %v922 = vunpack.c.l.b16 %v664
    %v923 = vpack.c.b16 %v916, %v915
    %v924 = vpack.c.b16 %v918, %v917
    %v925 = vpack.c.b16 %v920, %v919
    %v926 = vpack.c.b16 %v922, %v921
    %v932 = vsel %vm130, %v656, 0
    %934 = vmatprep.subr.bf16.mxu0 0
    %935 = vmatpush1.bf16.msra.mxu0 0
    %936 = vmatprep.subr.bf16.mxu0 0
    %937 = vmatpush1.bf16.msra.mxu0 0
    %938 = vmatprep.subr.bf16.mxu0 0
    %939 = vmatpush1.bf16.msra.mxu0 0
    %940 = vmatprep.subr.bf16.mxu0 0
    %941 = vmatpush1.bf16.msra.mxu0 0
    %942 = vmatprep.subr.bf16.mxu0 0
    %943 = vmatpush1.bf16.msra.mxu0 %v926
    %944 = vmatprep.subr.bf16.mxu0 0
    %945 = vmatpush1.bf16.msra.mxu0 %v925
    %946 = vmatprep.subr.bf16.mxu0 0
    %947 = vmatpush1.bf16.msra.mxu0 %v924
    %948 = vmatprep.subr.bf16.mxu0 0
    %949 = vmatpush1.bf16.msra.mxu0 %v923
    %950 = vmatprep.subr.bf16.mxu0 0
    %951 = vmatpush2.bf16.msra.mxu0 0
    %952 = vmatprep.subr.bf16.mxu0 0
    %953 = vmatpush2.bf16.msra.mxu0 0
    %954 = vmatprep.subr.bf16.mxu0 0
    %955 = vmatpush2.bf16.msra.mxu0 0
    %956 = vmatprep.subr.bf16.mxu0 0
    %957 = vmatpush2.bf16.msra.mxu0 0
    %958 = vmatprep.subr.bf16.mxu0 0
    %959 = vmatpush2.bf16.msra.mxu0 0
    %960 = vmatprep.subr.bf16.mxu0 0
    %961 = vmatpush2.bf16.msra.mxu0 0
    %962 = vmatprep.subr.bf16.mxu0 0
    %963 = vmatpush2.bf16.msra.mxu0 0
    %964 = vmatprep.subr.bf16.mxu0 0
    %965 = vmatpush2.bf16.msra.mxu0 0
    %966 = vmatprep.mubr.bf16.mxu0 0
    %967 = vmatmul.mubr.bf16.gmra.mxu0 %v932
    %v968 = vpop.f32.mrf.mxu0
    %v969 = vadd.f32 %v902, %v968
    %v970 = vpop.f32.mrf.mxu0
    %v971 = vpop.f32.mrf.mxu0
    %v972 = vpop.f32.mrf.mxu0
    %973 = vdwg.mxu0
    %v974 = vld [vmem:[#allocation7 + $0x1] ss:$0 sm:$0xff]
    %v975 = vadd.f32 %v969, %v974
    %v976 = vadd.f32 %v228, %v975
    %v977 = vld [vmem:[#allocation7 + $0x2] ss:$0 sm:$0xff]
    %v978 = vld [vmem:[#allocation7 + $0x3] ss:$0 sm:$0xff]
    %979 = vadd.xlane.f32.xlu0 %v976
    %v980 = vpop.xlane.xlu0 %979
    %v981 = vmul.f32 %v980, %v209
    %v982 = vsub.f32 %v976, %v981
    %v983 = vmul.f32 %v982, %v982
    %984 = vadd.xlane.f32.xlu0 %v983
    %v985 = vpop.xlane.xlu0 %984
    %v986 = vmul.f32 %v985, %v209
    %v987 = vadd.f32 %v986, 1e-12
    %v988 = vrsqrt.pop %v987
    %v989 = vmul.f32 %v982, %v988
    %v990 = vmul.f32 %v989, %v977
    %v991 = vadd.f32 %v990, %v978
    %v992 = vpack.c.bf16 %v991, %v991
    %v993 = vld [vmem:[#allocation4 + $0x10] sm:$0xff]
    %v994 = vld [vmem:[#allocation4 + $0x28] sm:$0xff]
    %v995 = vld [vmem:[#allocation4 + $0x40] sm:$0xff]
    %v996 = vld [vmem:[#allocation4 + $0x58] sm:$0xff]
    %v997 = vld [vmem:[#allocation4 + $0x70] sm:$0xff]
    %v998 = vld [vmem:[#allocation4 + $0x88] sm:$0xff]
    %v999 = vld [vmem:[#allocation4 + $0xa0] sm:$0xff]
    %v1000 = vld [vmem:[#allocation4 + $0xb8] sm:$0xff]
    %v1001 = vld [vmem:[#allocation4 + $0xd0] sm:$0xff]
    %v1002 = vld [vmem:[#allocation4 + $0xe8] sm:$0xff]
    %v1003 = vld [vmem:[#allocation4 + $0x100] sm:$0xff]
    %v1004 = vld [vmem:[#allocation4 + $0x118] sm:$0xff]
    %v1005 = vld [vmem:[#allocation4 + $0x130] sm:$0xff]
    %v1006 = vld [vmem:[#allocation4 + $0x148] sm:$0xff]
    %v1007 = vld [vmem:[#allocation4 + $0x160] sm:$0xff]
    %v1008 = vld [vmem:[#allocation4 + $0x178] sm:$0xff]
    %s1009 = scalar_lea.vmem [#allocation7], 4
    %v1010 = vld [vmem:[%s1009] ss:$8 sm:$0x3]
    %v1012 = vlaneseq
    %v1013 = vshrl.u32 %v1012, 7
    %v1014 = vsub.s32 0, %v1013
    %v1015 = vrot.slane %v1010, %v1014
    %v1016 = vlaneseq
    %v1017 = vshrl.u32 %v1016, 7
    %v1018 = vsub.s32 1, %v1017
    %v1019 = vrot.slane %v1010, %v1018
    %v1038 = vunpack.c.l.b16 %v993
    %v1039 = vunpack.c.h.b16 %v993
    %v1040 = vunpack.c.l.b16 %v994
    %v1041 = vunpack.c.h.b16 %v994
    %v1042 = vunpack.c.l.b16 %v995
    %v1043 = vunpack.c.h.b16 %v995
    %v1044 = vunpack.c.l.b16 %v996
    %v1045 = vunpack.c.h.b16 %v996
    %v1046 = vunpack.c.l.b16 %v997
    %v1047 = vunpack.c.h.b16 %v997
    %v1048 = vunpack.c.l.b16 %v998
    %v1049 = vunpack.c.h.b16 %v998
    %v1050 = vunpack.c.l.b16 %v999
    %v1051 = vunpack.c.h.b16 %v999
    %v1052 = vunpack.c.l.b16 %v1000
    %v1053 = vunpack.c.h.b16 %v1000
    %v1054 = vunpack.c.l.b16 %v1001
    %v1055 = vunpack.c.h.b16 %v1001
    %v1056 = vunpack.c.l.b16 %v1002
    %v1057 = vunpack.c.h.b16 %v1002
    %v1058 = vunpack.c.l.b16 %v1003
    %v1059 = vunpack.c.h.b16 %v1003
    %v1060 = vunpack.c.l.b16 %v1004
    %v1061 = vunpack.c.h.b16 %v1004
    %v1062 = vunpack.c.l.b16 %v1005
    %v1063 = vunpack.c.h.b16 %v1005
    %v1064 = vunpack.c.l.b16 %v1006
    %v1065 = vunpack.c.h.b16 %v1006
    %v1066 = vunpack.c.l.b16 %v1007
    %v1067 = vunpack.c.h.b16 %v1007
    %v1068 = vunpack.c.l.b16 %v1008
    %v1069 = vunpack.c.h.b16 %v1008
    %v1070 = vpack.c.b16 %v1040, %v1038
    %v1071 = vpack.c.b16 %v1041, %v1039
    %v1072 = vpack.c.b16 %v1044, %v1042
    %v1073 = vpack.c.b16 %v1045, %v1043
    %v1074 = vpack.c.b16 %v1048, %v1046
    %v1075 = vpack.c.b16 %v1049, %v1047
    %v1076 = vpack.c.b16 %v1052, %v1050
    %v1077 = vpack.c.b16 %v1053, %v1051
    %v1078 = vpack.c.b16 %v1056, %v1054
    %v1079 = vpack.c.b16 %v1057, %v1055
    %v1080 = vpack.c.b16 %v1060, %v1058
    %v1081 = vpack.c.b16 %v1061, %v1059
    %v1082 = vpack.c.b16 %v1064, %v1062
    %v1083 = vpack.c.b16 %v1065, %v1063
    %v1084 = vpack.c.b16 %v1068, %v1066
    %v1085 = vpack.c.b16 %v1069, %v1067
    %1102 = vmatprep.subr.bf16.mxu0 %v1085
    %1103 = vmatpush1.bf16.msra.mxu0 %v1084
    %1104 = vmatprep.subr.bf16.mxu0 %v1083
    %1105 = vmatpush1.bf16.msra.mxu0 %v1082
    %1106 = vmatprep.subr.bf16.mxu0 %v1081
    %1107 = vmatpush1.bf16.msra.mxu0 %v1080
    %1108 = vmatprep.subr.bf16.mxu0 %v1079
    %1109 = vmatpush1.bf16.msra.mxu0 %v1078
    %1110 = vmatprep.subr.bf16.mxu0 %v1077
    %1111 = vmatpush1.bf16.msra.mxu0 %v1076
    %1112 = vmatprep.subr.bf16.mxu0 %v1075
    %1113 = vmatpush1.bf16.msra.mxu0 %v1074
    %1114 = vmatprep.subr.bf16.mxu0 %v1073
    %1115 = vmatpush1.bf16.msra.mxu0 %v1072
    %1116 = vmatprep.subr.bf16.mxu0 %v1071
    %1117 = vmatpush1.bf16.msra.mxu0 %v1070
    %1118 = vmatprep.subr.bf16.mxu0 0
    %1119 = vmatpush2.bf16.msra.mxu0 0
    %1120 = vmatprep.subr.bf16.mxu0 0
    %1121 = vmatpush2.bf16.msra.mxu0 0
    %1122 = vmatprep.subr.bf16.mxu0 0
    %1123 = vmatpush2.bf16.msra.mxu0 0
    %1124 = vmatprep.subr.bf16.mxu0 0
    %1125 = vmatpush2.bf16.msra.mxu0 0
    %1126 = vmatprep.subr.bf16.mxu0 0
    %1127 = vmatpush2.bf16.msra.mxu0 0
    %1128 = vmatprep.subr.bf16.mxu0 0
    %1129 = vmatpush2.bf16.msra.mxu0 0
    %1130 = vmatprep.subr.bf16.mxu0 0
    %1131 = vmatpush2.bf16.msra.mxu0 0
    %1132 = vmatprep.subr.bf16.mxu0 0
    %1133 = vmatpush2.bf16.msra.mxu0 0
    %1134 = vmatprep.mubr.bf16.mxu0 0
    %1135 = vmatmul.mubr.bf16.gmra.mxu0 %v992
    %v1136 = vpop.f32.mrf.mxu0
    %v1137 = vadd.f32 %v1015, %v1136
    %v1138 = vpop.f32.mrf.mxu0
    %v1139 = vadd.f32 %v1019, %v1138
    %v1140 = vpop.f32.mrf.mxu0
    %v1141 = vpop.f32.mrf.mxu0
    %1142 = vdwg.mxu0
    %v1143 = vmul.f32 %v1137, %v1137
    %v1144 = vmul.f32 %v1139, %v1139
    %v1145 = vmul.f32 %v1137, %v1143
    %v1146 = vmul.f32 %v1139, %v1144
    %v1147 = vmul.f32 %v1145, 0.044715
    %v1148 = vmul.f32 %v1146, 0.044715
    %v1149 = vadd.f32 %v1137, %v1147
    %v1150 = vadd.f32 %v1139, %v1148
    %v1151 = vmul.f32 %v1149, 0.7978846
    %v1152 = vmul.f32 %v1150, 0.7978846
    %v1153 = vtanh.pop %v1151
    %v1154 = vtanh.pop %v1152
    %v1155 = vadd.f32 %v1153, 1.0
    %v1156 = vadd.f32 %v1154, 1.0
    %v1157 = vmul.f32 %v1155, 0.5
    %v1158 = vmul.f32 %v1156, 0.5
    %v1159 = vmul.f32 %v1137, %v1157
    %v1160 = vmul.f32 %v1139, %v1158
    %v1161 = vpack.c.bf16 %v1159, %v1159
    %v1162 = vpack.c.bf16 %v1160, %v1160
    %v1163 = vld [vmem:[#allocation6] sm:$0xf]
    %v1164 = vld [vmem:[#allocation6 + $0x4] sm:$0xf]
    %v1165 = vld [vmem:[#allocation6 + $0x8] sm:$0xf]
    %v1166 = vld [vmem:[#allocation6 + $0xc] sm:$0xf]
    %v1167 = vld [vmem:[#allocation6 + $0x10] sm:$0xf]
    %v1168 = vld [vmem:[#allocation6 + $0x14] sm:$0xf]
    %v1169 = vld [vmem:[#allocation6 + $0x18] sm:$0xf]
    %v1170 = vld [vmem:[#allocation6 + $0x1c] sm:$0xf]
    %v1171 = vld [vmem:[#allocation6 + $0x20] sm:$0xf]
    %v1172 = vld [vmem:[#allocation6 + $0x24] sm:$0xf]
    %v1173 = vld [vmem:[#allocation6 + $0x28] sm:$0xf]
    %v1174 = vld [vmem:[#allocation6 + $0x2c] sm:$0xf]
    %v1175 = vld [vmem:[#allocation6 + $0x30] sm:$0xf]
    %v1176 = vld [vmem:[#allocation6 + $0x34] sm:$0xf]
    %v1177 = vld [vmem:[#allocation6 + $0x38] sm:$0xf]
    %v1178 = vld [vmem:[#allocation6 + $0x3c] sm:$0xf]
    %v1179 = vld [vmem:[#allocation6 + $0x40] sm:$0xf]
    %v1180 = vld [vmem:[#allocation6 + $0x44] sm:$0xf]
    %v1181 = vld [vmem:[#allocation6 + $0x48] sm:$0xf]
    %v1182 = vld [vmem:[#allocation6 + $0x4c] sm:$0xf]
    %v1183 = vld [vmem:[#allocation6 + $0x50] sm:$0xf]
    %v1184 = vld [vmem:[#allocation6 + $0x54] sm:$0xf]
    %v1185 = vld [vmem:[#allocation6 + $0x58] sm:$0xf]
    %v1186 = vld [vmem:[#allocation6 + $0x5c] sm:$0xf]
    %v1187 = vld [vmem:[#allocation6 + $0x60] sm:$0xf]
    %v1188 = vld [vmem:[#allocation6 + $0x64] sm:$0xf]
    %v1189 = vld [vmem:[#allocation6 + $0x68] sm:$0xf]
    %v1190 = vld [vmem:[#allocation6 + $0x6c] sm:$0xf]
    %v1191 = vld [vmem:[#allocation6 + $0x70] sm:$0xf]
    %v1192 = vld [vmem:[#allocation6 + $0x74] sm:$0xf]
    %v1193 = vld [vmem:[#allocation6 + $0x78] sm:$0xf]
    %v1194 = vld [vmem:[#allocation6 + $0x7c] sm:$0xf]
    %v1195 = vld [vmem:[#allocation7 + $0x5] ss:$0 sm:$0xff]
    %v1228 = vunpack.c.l.b16 %v1163
    %v1229 = vunpack.c.l.b16 %v1164
    %v1230 = vunpack.c.l.b16 %v1165
    %v1231 = vunpack.c.l.b16 %v1166
    %v1232 = vunpack.c.l.b16 %v1167
    %v1233 = vunpack.c.l.b16 %v1168
    %v1234 = vunpack.c.l.b16 %v1169
    %v1235 = vunpack.c.l.b16 %v1170
    %v1236 = vunpack.c.l.b16 %v1171
    %v1237 = vunpack.c.l.b16 %v1172
    %v1238 = vunpack.c.l.b16 %v1173
    %v1239 = vunpack.c.l.b16 %v1174
    %v1240 = vunpack.c.l.b16 %v1175
    %v1241 = vunpack.c.l.b16 %v1176
    %v1242 = vunpack.c.l.b16 %v1177
    %v1243 = vunpack.c.l.b16 %v1178
    %v1244 = vunpack.c.l.b16 %v1179
    %v1245 = vunpack.c.l.b16 %v1180
    %v1246 = vunpack.c.l.b16 %v1181
    %v1247 = vunpack.c.l.b16 %v1182
    %v1248 = vunpack.c.l.b16 %v1183
    %v1249 = vunpack.c.l.b16 %v1184
    %v1250 = vunpack.c.l.b16 %v1185
    %v1251 = vunpack.c.l.b16 %v1186
    %v1252 = vunpack.c.l.b16 %v1187
    %v1253 = vunpack.c.l.b16 %v1188
    %v1254 = vunpack.c.l.b16 %v1189
    %v1255 = vunpack.c.l.b16 %v1190
    %v1256 = vunpack.c.l.b16 %v1191
    %v1257 = vunpack.c.l.b16 %v1192
    %v1258 = vunpack.c.l.b16 %v1193
    %v1259 = vunpack.c.l.b16 %v1194
    %v1260 = vpack.c.b16 %v1229, %v1228
    %v1261 = vpack.c.b16 %v1231, %v1230
    %v1262 = vpack.c.b16 %v1233, %v1232
    %v1263 = vpack.c.b16 %v1235, %v1234
    %v1264 = vpack.c.b16 %v1237, %v1236
    %v1265 = vpack.c.b16 %v1239, %v1238
    %v1266 = vpack.c.b16 %v1241, %v1240
    %v1267 = vpack.c.b16 %v1243, %v1242
    %v1268 = vpack.c.b16 %v1245, %v1244
    %v1269 = vpack.c.b16 %v1247, %v1246
    %v1270 = vpack.c.b16 %v1249, %v1248
    %v1271 = vpack.c.b16 %v1251, %v1250
    %v1272 = vpack.c.b16 %v1253, %v1252
    %v1273 = vpack.c.b16 %v1255, %v1254
    %v1274 = vpack.c.b16 %v1257, %v1256
    %v1275 = vpack.c.b16 %v1259, %v1258
    %1292 = vmatprep.subr.bf16.mxu0 0
    %1293 = vmatpush1.bf16.msra.mxu0 %v1267
    %1294 = vmatprep.subr.bf16.mxu0 0
    %1295 = vmatpush1.bf16.msra.mxu0 %v1266
    %1296 = vmatprep.subr.bf16.mxu0 0
    %1297 = vmatpush1.bf16.msra.mxu0 %v1265
    %1298 = vmatprep.subr.bf16.mxu0 0
    %1299 = vmatpush1.bf16.msra.mxu0 %v1264
    %1300 = vmatprep.subr.bf16.mxu0 0
    %1301 = vmatpush1.bf16.msra.mxu0 %v1263
    %1302 = vmatprep.subr.bf16.mxu0 0
    %1303 = vmatpush1.bf16.msra.mxu0 %v1262
    %1304 = vmatprep.subr.bf16.mxu0 0
    %1305 = vmatpush1.bf16.msra.mxu0 %v1261
    %1306 = vmatprep.subr.bf16.mxu0 0
    %1307 = vmatpush1.bf16.msra.mxu0 %v1260
    %1308 = vmatprep.subr.bf16.mxu0 0
    %1309 = vmatpush2.bf16.msra.mxu0 %v1275
    %1310 = vmatprep.subr.bf16.mxu0 0
    %1311 = vmatpush2.bf16.msra.mxu0 %v1274
    %1312 = vmatprep.subr.bf16.mxu0 0
    %1313 = vmatpush2.bf16.msra.mxu0 %v1273
    %1314 = vmatprep.subr.bf16.mxu0 0
    %1315 = vmatpush2.bf16.msra.mxu0 %v1272
    %1316 = vmatprep.subr.bf16.mxu0 0
    %1317 = vmatpush2.bf16.msra.mxu0 %v1271
    %1318 = vmatprep.subr.bf16.mxu0 0
    %1319 = vmatpush2.bf16.msra.mxu0 %v1270
    %1320 = vmatprep.subr.bf16.mxu0 0
    %1321 = vmatpush2.bf16.msra.mxu0 %v1269
    %1322 = vmatprep.subr.bf16.mxu0 0
    %1323 = vmatpush2.bf16.msra.mxu0 %v1268
    %1324 = vmatprep.mubr.bf16.mxu0 %v1162
    %1325 = vmatmul.mubr.bf16.gmra.mxu0 %v1161
    %v1326 = vpop.f32.mrf.mxu0
    %v1327 = vadd.f32 %v1195, %v1326
    %v1328 = vpop.f32.mrf.mxu0
    %v1329 = vpop.f32.mrf.mxu0
    %v1330 = vpop.f32.mrf.mxu0
    %1331 = vdwg.mxu0
    %v1332 = vadd.f32 %v991, %v1327
    %v1333 = vld [vmem:[#allocation7 + $0x6] ss:$0 sm:$0xff]
    %v1334 = vld [vmem:[#allocation7 + $0x7] ss:$0 sm:$0xff]
    %1335 = vadd.xlane.f32.xlu0 %v1332
    %v1336 = vpop.xlane.xlu0 %1335
    %v1337 = vmul.f32 %v1336, %v209
    %v1338 = vsub.f32 %v1332, %v1337
    %v1339 = vmul.f32 %v1338, %v1338
    %1340 = vadd.xlane.f32.xlu0 %v1339
    %v1341 = vpop.xlane.xlu0 %1340
    %v1342 = vmul.f32 %v1341, %v209
    %v1343 = vadd.f32 %v1342, 1e-12
    %v1344 = vrsqrt.pop %v1343
    %v1345 = vmul.f32 %v1338, %v1344
    %v1346 = vmul.f32 %v1345, %v1333
    %v1347 = vadd.f32 %v1346, %v1334
    %v1348 = vpack.c.bf16 %v1347, %v1347
    %s1349 = scalar_lea.vmem [#allocation4], 384
    %v1350 = vld [vmem:[%s1349] sm:$0xff]
    %v1351 = vld [vmem:[%s1349 + $0x8] sm:$0xf]
    %v1352 = vld [vmem:[%s1349 + $0x18] sm:$0xff]
    %v1353 = vld [vmem:[%s1349 + $0x20] sm:$0xf]
    %v1354 = vld [vmem:[%s1349 + $0x30] sm:$0xff]
    %v1355 = vld [vmem:[%s1349 + $0x38] sm:$0xf]
    %v1356 = vld [vmem:[%s1349 + $0x48] sm:$0xff]
    %v1357 = vld [vmem:[%s1349 + $0x50] sm:$0xf]
    %v1358 = vld [vmem:[%s1349 + $0x60] sm:$0xff]
    %v1359 = vld [vmem:[%s1349 + $0x68] sm:$0xf]
    %v1360 = vld [vmem:[%s1349 + $0x78] sm:$0xff]
    %v1361 = vld [vmem:[%s1349 + $0x80] sm:$0xf]
    %v1362 = vld [vmem:[%s1349 + $0x90] sm:$0xff]
    %v1363 = vld [vmem:[%s1349 + $0x98] sm:$0xf]
    %v1364 = vld [vmem:[%s1349 + $0xa8] sm:$0xff]
    %v1365 = vld [vmem:[%s1349 + $0xb0] sm:$0xf]
    %v1366 = vld [vmem:[%s1349 + $0xc0] sm:$0xff]
    %v1367 = vld [vmem:[%s1349 + $0xc8] sm:$0xf]
    %v1368 = vld [vmem:[%s1349 + $0xd8] sm:$0xff]
    %v1369 = vld [vmem:[%s1349 + $0xe0] sm:$0xf]
    %v1370 = vld [vmem:[%s1349 + $0xf0] sm:$0xff]
    %v1371 = vld [vmem:[%s1349 + $0xf8] sm:$0xf]
    %v1372 = vld [vmem:[%s1349 + $0x108] sm:$0xff]
    %v1373 = vld [vmem:[%s1349 + $0x110] sm:$0xf]
    %v1374 = vld [vmem:[%s1349 + $0x120] sm:$0xff]
    %v1375 = vld [vmem:[%s1349 + $0x128] sm:$0xf]
    %v1376 = vld [vmem:[%s1349 + $0x138] sm:$0xff]
    %v1377 = vld [vmem:[%s1349 + $0x140] sm:$0xf]
    %v1378 = vld [vmem:[%s1349 + $0x150] sm:$0xff]
    %v1379 = vld [vmem:[%s1349 + $0x158] sm:$0xf]
    %v1380 = vld [vmem:[%s1349 + $0x168] sm:$0xff]
    %v1381 = vld [vmem:[%s1349 + $0x170] sm:$0xf]
    %s1382 = scalar_lea.vmem [#allocation7], 24
    %v1383 = vld [vmem:[%s1382] ss:$8 sm:$0x7]
    %v1385 = vlaneseq
    %v1386 = vshrl.u32 %v1385, 7
    %v1387 = vsub.s32 0, %v1386
    %v1388 = vrot.slane %v1383, %v1387
    %v1389 = vlaneseq
    %v1390 = vshrl.u32 %v1389, 7
    %v1391 = vsub.s32 1, %v1390
    %v1392 = vrot.slane %v1383, %v1391
    %v1393 = vlaneseq
    %v1394 = vshrl.u32 %v1393, 7
    %v1395 = vsub.s32 2, %v1394
    %v1396 = vrot.slane %v1383, %v1395
    %v1432 = vunpack.c.l.b16 %v1350
    %v1433 = vunpack.c.h.b16 %v1350
    %v1434 = vunpack.c.l.b16 %v1351
    %v1435 = vunpack.c.l.b16 %v1352
    %v1436 = vunpack.c.h.b16 %v1352
    %v1437 = vunpack.c.l.b16 %v1353
    %v1438 = vunpack.c.l.b16 %v1354
    %v1439 = vunpack.c.h.b16 %v1354
    %v1440 = vunpack.c.l.b16 %v1355
    %v1441 = vunpack.c.l.b16 %v1356
    %v1442 = vunpack.c.h.b16 %v1356
    %v1443 = vunpack.c.l.b16 %v1357
    %v1444 = vunpack.c.l.b16 %v1358
    %v1445 = vunpack.c.h.b16 %v1358
    %v1446 = vunpack.c.l.b16 %v1359
    %v1447 = vunpack.c.l.b16 %v1360
    %v1448 = vunpack.c.h.b16 %v1360
    %v1449 = vunpack.c.l.b16 %v1361
    %v1450 = vunpack.c.l.b16 %v1362
    %v1451 = vunpack.c.h.b16 %v1362
    %v1452 = vunpack.c.l.b16 %v1363
    %v1453 = vunpack.c.l.b16 %v1364
    %v1454 = vunpack.c.h.b16 %v1364
    %v1455 = vunpack.c.l.b16 %v1365
    %v1456 = vunpack.c.l.b16 %v1366
    %v1457 = vunpack.c.h.b16 %v1366
    %v1458 = vunpack.c.l.b16 %v1367
    %v1459 = vunpack.c.l.b16 %v1368
    %v1460 = vunpack.c.h.b16 %v1368
    %v1461 = vunpack.c.l.b16 %v1369
    %v1462 = vunpack.c.l.b16 %v1370
    %v1463 = vunpack.c.h.b16 %v1370
    %v1464 = vunpack.c.l.b16 %v1371
    %v1465 = vunpack.c.l.b16 %v1372
    %v1466 = vunpack.c.h.b16 %v1372
    %v1467 = vunpack.c.l.b16 %v1373
    %v1468 = vunpack.c.l.b16 %v1374
    %v1469 = vunpack.c.h.b16 %v1374
    %v1470 = vunpack.c.l.b16 %v1375
    %v1471 = vunpack.c.l.b16 %v1376
    %v1472 = vunpack.c.h.b16 %v1376
    %v1473 = vunpack.c.l.b16 %v1377
    %v1474 = vunpack.c.l.b16 %v1378
    %v1475 = vunpack.c.h.b16 %v1378
    %v1476 = vunpack.c.l.b16 %v1379
    %v1477 = vunpack.c.l.b16 %v1380
    %v1478 = vunpack.c.h.b16 %v1380
    %v1479 = vunpack.c.l.b16 %v1381
    %v1480 = vpack.c.b16 %v1435, %v1432
    %v1481 = vpack.c.b16 %v1436, %v1433
    %v1482 = vpack.c.b16 %v1437, %v1434
    %v1483 = vpack.c.b16 %v1441, %v1438
    %v1484 = vpack.c.b16 %v1442, %v1439
    %v1485 = vpack.c.b16 %v1443, %v1440
    %v1486 = vpack.c.b16 %v1447, %v1444
    %v1487 = vpack.c.b16 %v1448, %v1445
    %v1488 = vpack.c.b16 %v1449, %v1446
    %v1489 = vpack.c.b16 %v1453, %v1450
    %v1490 = vpack.c.b16 %v1454, %v1451
    %v1491 = vpack.c.b16 %v1455, %v1452
    %v1492 = vpack.c.b16 %v1459, %v1456
    %v1493 = vpack.c.b16 %v1460, %v1457
    %v1494 = vpack.c.b16 %v1461, %v1458
    %v1495 = vpack.c.b16 %v1465, %v1462
    %v1496 = vpack.c.b16 %v1466, %v1463
    %v1497 = vpack.c.b16 %v1467, %v1464
    %v1498 = vpack.c.b16 %v1471, %v1468
    %v1499 = vpack.c.b16 %v1472, %v1469
    %v1500 = vpack.c.b16 %v1473, %v1470
    %v1501 = vpack.c.b16 %v1477, %v1474
    %v1502 = vpack.c.b16 %v1478, %v1475
    %v1503 = vpack.c.b16 %v1479, %v1476
    %1528 = vmatprep.subr.bf16.mxu0 %v1502
    %1529 = vmatpush1.bf16.msra.mxu0 %v1501
    %1530 = vmatprep.subr.bf16.mxu0 %v1499
    %1531 = vmatpush1.bf16.msra.mxu0 %v1498
    %1532 = vmatprep.subr.bf16.mxu0 %v1496
    %1533 = vmatpush1.bf16.msra.mxu0 %v1495
    %1534 = vmatprep.subr.bf16.mxu0 %v1493
    %1535 = vmatpush1.bf16.msra.mxu0 %v1492
    %1536 = vmatprep.subr.bf16.mxu0 %v1490
    %1537 = vmatpush1.bf16.msra.mxu0 %v1489
    %1538 = vmatprep.subr.bf16.mxu0 %v1487
    %1539 = vmatpush1.bf16.msra.mxu0 %v1486
    %1540 = vmatprep.subr.bf16.mxu0 %v1484
    %1541 = vmatpush1.bf16.msra.mxu0 %v1483
    %1542 = vmatprep.subr.bf16.mxu0 %v1481
    %1543 = vmatpush1.bf16.msra.mxu0 %v1480
    %1544 = vmatprep.subr.bf16.mxu0 0
    %1545 = vmatpush2.bf16.msra.mxu0 0
    %1546 = vmatprep.subr.bf16.mxu0 0
    %1547 = vmatpush2.bf16.msra.mxu0 0
    %1548 = vmatprep.subr.bf16.mxu0 0
    %1549 = vmatpush2.bf16.msra.mxu0 0
    %1550 = vmatprep.subr.bf16.mxu0 0
    %1551 = vmatpush2.bf16.msra.mxu0 0
    %1552 = vmatprep.subr.bf16.mxu0 0
    %1553 = vmatpush2.bf16.msra.mxu0 0
    %1554 = vmatprep.subr.bf16.mxu0 0
    %1555 = vmatpush2.bf16.msra.mxu0 0
    %1556 = vmatprep.subr.bf16.mxu0 0
    %1557 = vmatpush2.bf16.msra.mxu0 0
    %1558 = vmatprep.subr.bf16.mxu0 0
    %1559 = vmatpush2.bf16.msra.mxu0 0
    %1560 = vmatprep.mubr.bf16.mxu0 0
    %1561 = vmatmul.mubr.bf16.gmra.mxu0 %v1348
    %v1562 = vpop.f32.mrf.mxu0
    %v1563 = vadd.f32 %v1388, %v1562
    %v1564 = vpop.f32.mrf.mxu0
    %v1565 = vadd.f32 %v1392, %v1564
    %v1566 = vpop.f32.mrf.mxu0
    %v1567 = vpop.f32.mrf.mxu0
    %1568 = vdwg.mxu0
    %1569 = vmatprep.subr.bf16.mxu0 0
    %1570 = vmatpush1.bf16.msra.mxu0 %v1503
    %1571 = vmatprep.subr.bf16.mxu0 0
    %1572 = vmatpush1.bf16.msra.mxu0 %v1500
    %1573 = vmatprep.subr.bf16.mxu0 0
    %1574 = vmatpush1.bf16.msra.mxu0 %v1497
    %1575 = vmatprep.subr.bf16.mxu0 0
    %1576 = vmatpush1.bf16.msra.mxu0 %v1494
    %1577 = vmatprep.subr.bf16.mxu0 0
    %1578 = vmatpush1.bf16.msra.mxu0 %v1491
    %1579 = vmatprep.subr.bf16.mxu0 0
    %1580 = vmatpush1.bf16.msra.mxu0 %v1488
    %1581 = vmatprep.subr.bf16.mxu0 0
    %1582 = vmatpush1.bf16.msra.mxu0 %v1485
    %1583 = vmatprep.subr.bf16.mxu0 0
    %1584 = vmatpush1.bf16.msra.mxu0 %v1482
    %1585 = vmatprep.subr.bf16.mxu0 0
    %1586 = vmatpush2.bf16.msra.mxu0 0
    %1587 = vmatprep.subr.bf16.mxu0 0
    %1588 = vmatpush2.bf16.msra.mxu0 0
    %1589 = vmatprep.subr.bf16.mxu0 0
    %1590 = vmatpush2.bf16.msra.mxu0 0
    %1591 = vmatprep.subr.bf16.mxu0 0
    %1592 = vmatpush2.bf16.msra.mxu0 0
    %1593 = vmatprep.subr.bf16.mxu0 0
    %1594 = vmatpush2.bf16.msra.mxu0 0
    %1595 = vmatprep.subr.bf16.mxu0 0
    %1596 = vmatpush2.bf16.msra.mxu0 0
    %1597 = vmatprep.subr.bf16.mxu0 0
    %1598 = vmatpush2.bf16.msra.mxu0 0
    %1599 = vmatprep.subr.bf16.mxu0 0
    %1600 = vmatpush2.bf16.msra.mxu0 0
    %1601 = vmatprep.mubr.bf16.mxu0 0
    %1602 = vmatmul.mubr.bf16.gmra.mxu0 %v1348
    %v1603 = vpop.f32.mrf.mxu0
    %v1604 = vadd.f32 %v1396, %v1603
    %v1605 = vpop.f32.mrf.mxu0
    %v1606 = vpop.f32.mrf.mxu0
    %v1607 = vpop.f32.mrf.mxu0
    %1608 = vdwg.mxu0
    %v1610 = vsel %vm130, %v1563, 0
    %v1613 = vsel %vm130, %v1565, 0
    %1615 = vmatprep.subr.mxu0 0.0
    %1616 = vmatpush1.xpose.msra.mxu0 0.0
    %1617 = vmatprep.subr.mxu0 0.0
    %1618 = vmatpush1.xpose.msra.mxu0 0.0
    %1619 = vmatprep.subr.mxu0 0.0
    %1620 = vmatpush1.xpose.msra.mxu0 0.0
    %1621 = vmatprep.subr.mxu0 0.0
    %1622 = vmatpush1.xpose.msra.mxu0 0.0
    %1623 = vmatprep.subr.mxu0 0.0
    %1624 = vmatpush1.xpose.msra.mxu0 0.0
    %1625 = vmatprep.subr.mxu0 0.0
    %1626 = vmatpush1.xpose.msra.mxu0 0.0
    %1627 = vmatprep.subr.mxu0 0.0
    %1628 = vmatpush1.xpose.msra.mxu0 0.0
    %1629 = vmatprep.subr.mxu0 0.0
    %1630 = vmatpush1.xpose.msra.mxu0 0.0
    %1631 = vmatprep.subr.mxu0 0.0
    %1632 = vmatpush1.xpose.msra.mxu0 0.0
    %1633 = vmatprep.subr.mxu0 0.0
    %1634 = vmatpush1.xpose.msra.mxu0 0.0
    %1635 = vmatprep.subr.mxu0 0.0
    %1636 = vmatpush1.xpose.msra.mxu0 0.0
    %1637 = vmatprep.subr.mxu0 0.0
    %1638 = vmatpush1.xpose.msra.mxu0 0.0
    %1639 = vmatprep.subr.mxu0 0.0
    %1640 = vmatpush1.xpose.msra.mxu0 0.0
    %1641 = vmatprep.subr.mxu0 0.0
    %1642 = vmatpush1.xpose.msra.mxu0 0.0
    %1643 = vmatprep.subr.mxu0 0.0
    %1644 = vmatpush1.xpose.msra.mxu0 0.0
    %1645 = vmatprep.subr.mxu0 0.0
    %1646 = vmatpush1.xpose.msra.mxu0 %v1613
    %1647 = vmatprep.subr.mxu0 0.0
    %1648 = vmatpush2.xpose.msra.mxu0 0.0
    %1649 = vmatprep.subr.mxu0 0.0
    %1650 = vmatpush2.xpose.msra.mxu0 0.0
    %1651 = vmatprep.subr.mxu0 0.0
    %1652 = vmatpush2.xpose.msra.mxu0 0.0
    %1653 = vmatprep.subr.mxu0 0.0
    %1654 = vmatpush2.xpose.msra.mxu0 0.0
    %1655 = vmatprep.subr.mxu0 0.0
    %1656 = vmatpush2.xpose.msra.mxu0 0.0
    %1657 = vmatprep.subr.mxu0 0.0
    %1658 = vmatpush2.xpose.msra.mxu0 0.0
    %1659 = vmatprep.subr.mxu0 0.0
    %1660 = vmatpush2.xpose.msra.mxu0 0.0
    %1661 = vmatprep.subr.mxu0 0.0
    %1662 = vmatpush2.xpose.msra.mxu0 0.0
    %1663 = vmatprep.subr.mxu0 0.0
    %1664 = vmatpush2.xpose.msra.mxu0 0.0
    %1665 = vmatprep.subr.mxu0 0.0
    %1666 = vmatpush2.xpose.msra.mxu0 0.0
    %1667 = vmatprep.subr.mxu0 0.0
    %1668 = vmatpush2.xpose.msra.mxu0 0.0
    %1669 = vmatprep.subr.mxu0 0.0
    %1670 = vmatpush2.xpose.msra.mxu0 0.0
    %1671 = vmatprep.subr.mxu0 0.0
    %1672 = vmatpush2.xpose.msra.mxu0 0.0
    %1673 = vmatprep.subr.mxu0 0.0
    %1674 = vmatpush2.xpose.msra.mxu0 0.0
    %1675 = vmatprep.subr.mxu0 0.0
    %1676 = vmatpush2.xpose.msra.mxu0 0.0
    %1677 = vmatprep.subr.mxu0 0.0
    %1678 = vmatpush2.xpose.msra.mxu0 0.0
    %1679 = vmatprep.mubr.f32.mxu0 0.0
    %1680 = vmatmul.mubr.f32.gmra.mxu0 %v1610
    %v1681 = vpop.f32.mrf.mxu0
    %v1682 = vadd.f32 %v493, %v1681
    %v1683 = vpop.f32.mrf.mxu0
    %1684 = vdwg.mxu0
    %v1685 = vsel %vm571, %v1682, -inf
    %1686 = vmax.xlane.f32.xlu0 %v1685
    %v1687 = vpop.xlane.xlu0 %1686
    %v1688 = vsub.f32 %v1682, %v1687
    %v1689 = vmul.f32 %v1688, 1.442695
    %v1690 = vpow.pop %v1689
    %v1691 = vsel %vm571, %v1690, 0.0
    %1692 = vadd.xlane.f32.xlu0 %v1691
    %v1693 = vpop.xlane.xlu0 %1692
    %v1694 = vrcp.pop %v1693
    %v1695 = vmul.f32 %v1690, %v1694
    %v1697 = vsel %vm571, %v1695, 0
    %1699 = vmatprep.subr.mxu0 0.0
    %1700 = vmatpush1.msra.mxu0 0.0
    %1701 = vmatprep.subr.mxu0 0.0
    %1702 = vmatpush1.msra.mxu0 0.0
    %1703 = vmatprep.subr.mxu0 0.0
    %1704 = vmatpush1.msra.mxu0 0.0
    %1705 = vmatprep.subr.mxu0 0.0
    %1706 = vmatpush1.msra.mxu0 0.0
    %1707 = vmatprep.subr.mxu0 0.0
    %1708 = vmatpush1.msra.mxu0 0.0
    %1709 = vmatprep.subr.mxu0 0.0
    %1710 = vmatpush1.msra.mxu0 0.0
    %1711 = vmatprep.subr.mxu0 0.0
    %1712 = vmatpush1.msra.mxu0 0.0
    %1713 = vmatprep.subr.mxu0 0.0
    %1714 = vmatpush1.msra.mxu0 0.0
    %1715 = vmatprep.subr.mxu0 0.0
    %1716 = vmatpush1.msra.mxu0 0.0
    %1717 = vmatprep.subr.mxu0 0.0
    %1718 = vmatpush1.msra.mxu0 0.0
    %1719 = vmatprep.subr.mxu0 0.0
    %1720 = vmatpush1.msra.mxu0 0.0
    %1721 = vmatprep.subr.mxu0 0.0
    %1722 = vmatpush1.msra.mxu0 0.0
    %1723 = vmatprep.subr.mxu0 0.0
    %1724 = vmatpush1.msra.mxu0 0.0
    %1725 = vmatprep.subr.mxu0 0.0
    %1726 = vmatpush1.msra.mxu0 0.0
    %1727 = vmatprep.subr.mxu0 0.0
    %1728 = vmatpush1.msra.mxu0 0.0
    %1729 = vmatprep.subr.mxu0 0.0
    %1730 = vmatpush1.msra.mxu0 %v1604
    %1731 = vmatprep.subr.mxu0 0.0
    %1732 = vmatpush2.msra.mxu0 0.0
    %1733 = vmatprep.subr.mxu0 0.0
    %1734 = vmatpush2.msra.mxu0 0.0
    %1735 = vmatprep.subr.mxu0 0.0
    %1736 = vmatpush2.msra.mxu0 0.0
    %1737 = vmatprep.subr.mxu0 0.0
    %1738 = vmatpush2.msra.mxu0 0.0
    %1739 = vmatprep.subr.mxu0 0.0
    %1740 = vmatpush2.msra.mxu0 0.0
    %1741 = vmatprep.subr.mxu0 0.0
    %1742 = vmatpush2.msra.mxu0 0.0
    %1743 = vmatprep.subr.mxu0 0.0
    %1744 = vmatpush2.msra.mxu0 0.0
    %1745 = vmatprep.subr.mxu0 0.0
    %1746 = vmatpush2.msra.mxu0 0.0
    %1747 = vmatprep.subr.mxu0 0.0
    %1748 = vmatpush2.msra.mxu0 0.0
    %1749 = vmatprep.subr.mxu0 0.0
    %1750 = vmatpush2.msra.mxu0 0.0
    %1751 = vmatprep.subr.mxu0 0.0
    %1752 = vmatpush2.msra.mxu0 0.0
    %1753 = vmatprep.subr.mxu0 0.0
    %1754 = vmatpush2.msra.mxu0 0.0
    %1755 = vmatprep.subr.mxu0 0.0
    %1756 = vmatpush2.msra.mxu0 0.0
    %1757 = vmatprep.subr.mxu0 0.0
    %1758 = vmatpush2.msra.mxu0 0.0
    %1759 = vmatprep.subr.mxu0 0.0
    %1760 = vmatpush2.msra.mxu0 0.0
    %1761 = vmatprep.subr.mxu0 0.0
    %1762 = vmatpush2.msra.mxu0 0.0
    %1763 = vmatprep.mubr.f32.mxu0 0.0
    %1764 = vmatmul.mubr.f32.gmra.mxu0 %v1697
    %v1765 = vpop.f32.mrf.mxu0
    %v1766 = vadd.f32 0.0, %v1765
    %v1767 = vpop.f32.mrf.mxu0
    %1768 = vdwg.mxu0
    %v1769 = vpack.c.bf16 %v1766, %v1766
    %v1770 = vld [vmem:[%s1349 + $0xc] sm:$0xf]
    %v1771 = vld [vmem:[%s1349 + $0x24] sm:$0xf]
    %v1772 = vld [vmem:[%s1349 + $0x3c] sm:$0xf]
    %v1773 = vld [vmem:[%s1349 + $0x54] sm:$0xf]
    %v1774 = vld [vmem:[%s1349 + $0x6c] sm:$0xf]
    %v1775 = vld [vmem:[%s1349 + $0x84] sm:$0xf]
    %v1776 = vld [vmem:[%s1349 + $0x9c] sm:$0xf]
    %v1777 = vld [vmem:[%s1349 + $0xb4] sm:$0xf]
    %1778 = vrot.lane.b32.xlu0 %v1563, 64
    %v1779 = vpop.permute.xlu0 %1778
    %1780 = vrot.lane.b32.xlu0 %v1565, 64
    %v1781 = vpop.permute.xlu0 %1780
    %v1782 = vsel %vm130, %v1779, 0
    %v1784 = vsel %vm130, %v1781, 0
    %1786 = vmatprep.subr.mxu0 0.0
    %1787 = vmatpush1.xpose.msra.mxu0 0.0
    %1788 = vmatprep.subr.mxu0 0.0
    %1789 = vmatpush1.xpose.msra.mxu0 0.0
    %1790 = vmatprep.subr.mxu0 0.0
    %1791 = vmatpush1.xpose.msra.mxu0 0.0
    %1792 = vmatprep.subr.mxu0 0.0
    %1793 = vmatpush1.xpose.msra.mxu0 0.0
    %1794 = vmatprep.subr.mxu0 0.0
    %1795 = vmatpush1.xpose.msra.mxu0 0.0
    %1796 = vmatprep.subr.mxu0 0.0
    %1797 = vmatpush1.xpose.msra.mxu0 0.0
    %1798 = vmatprep.subr.mxu0 0.0
    %1799 = vmatpush1.xpose.msra.mxu0 0.0
    %1800 = vmatprep.subr.mxu0 0.0
    %1801 = vmatpush1.xpose.msra.mxu0 0.0
    %1802 = vmatprep.subr.mxu0 0.0
    %1803 = vmatpush1.xpose.msra.mxu0 0.0
    %1804 = vmatprep.subr.mxu0 0.0
    %1805 = vmatpush1.xpose.msra.mxu0 0.0
    %1806 = vmatprep.subr.mxu0 0.0
    %1807 = vmatpush1.xpose.msra.mxu0 0.0
    %1808 = vmatprep.subr.mxu0 0.0
    %1809 = vmatpush1.xpose.msra.mxu0 0.0
    %1810 = vmatprep.subr.mxu0 0.0
    %1811 = vmatpush1.xpose.msra.mxu0 0.0
    %1812 = vmatprep.subr.mxu0 0.0
    %1813 = vmatpush1.xpose.msra.mxu0 0.0
    %1814 = vmatprep.subr.mxu0 0.0
    %1815 = vmatpush1.xpose.msra.mxu0 0.0
    %1816 = vmatprep.subr.mxu0 0.0
    %1817 = vmatpush1.xpose.msra.mxu0 %v1784
    %1818 = vmatprep.subr.mxu0 0.0
    %1819 = vmatpush2.xpose.msra.mxu0 0.0
    %1820 = vmatprep.subr.mxu0 0.0
    %1821 = vmatpush2.xpose.msra.mxu0 0.0
    %1822 = vmatprep.subr.mxu0 0.0
    %1823 = vmatpush2.xpose.msra.mxu0 0.0
    %1824 = vmatprep.subr.mxu0 0.0
    %1825 = vmatpush2.xpose.msra.mxu0 0.0
    %1826 = vmatprep.subr.mxu0 0.0
    %1827 = vmatpush2.xpose.msra.mxu0 0.0
    %1828 = vmatprep.subr.mxu0 0.0
    %1829 = vmatpush2.xpose.msra.mxu0 0.0
    %1830 = vmatprep.subr.mxu0 0.0
    %1831 = vmatpush2.xpose.msra.mxu0 0.0
    %1832 = vmatprep.subr.mxu0 0.0
    %1833 = vmatpush2.xpose.msra.mxu0 0.0
    %1834 = vmatprep.subr.mxu0 0.0
    %1835 = vmatpush2.xpose.msra.mxu0 0.0
    %1836 = vmatprep.subr.mxu0 0.0
    %1837 = vmatpush2.xpose.msra.mxu0 0.0
    %1838 = vmatprep.subr.mxu0 0.0
    %1839 = vmatpush2.xpose.msra.mxu0 0.0
    %1840 = vmatprep.subr.mxu0 0.0
    %1841 = vmatpush2.xpose.msra.mxu0 0.0
    %1842 = vmatprep.subr.mxu0 0.0
    %1843 = vmatpush2.xpose.msra.mxu0 0.0
    %1844 = vmatprep.subr.mxu0 0.0
    %1845 = vmatpush2.xpose.msra.mxu0 0.0
    %1846 = vmatprep.subr.mxu0 0.0
    %1847 = vmatpush2.xpose.msra.mxu0 0.0
    %1848 = vmatprep.subr.mxu0 0.0
    %1849 = vmatpush2.xpose.msra.mxu0 0.0
    %1850 = vmatprep.mubr.f32.mxu0 0.0
    %1851 = vmatmul.mubr.f32.gmra.mxu0 %v1782
    %v1852 = vpop.f32.mrf.mxu0
    %v1853 = vadd.f32 %v493, %v1852
    %v1854 = vpop.f32.mrf.mxu0
    %1855 = vdwg.mxu0
    %v1856 = vsel %vm571, %v1853, -inf
    %1857 = vmax.xlane.f32.xlu0 %v1856
    %v1858 = vpop.xlane.xlu0 %1857
    %v1859 = vsub.f32 %v1853, %v1858
    %v1860 = vmul.f32 %v1859, 1.442695
    %v1861 = vpow.pop %v1860
    %v1862 = vsel %vm571, %v1861, 0.0
    %1863 = vadd.xlane.f32.xlu0 %v1862
    %v1864 = vpop.xlane.xlu0 %1863
    %v1865 = vrcp.pop %v1864
    %v1866 = vmul.f32 %v1861, %v1865
    %1868 = vrot.lane.b32.xlu0 %v1604, 64
    %v1869 = vpop.permute.xlu0 %1868
    %v1872 = vsel %vm571, %v1866, 0
    %1874 = vmatprep.subr.mxu0 0.0
    %1875 = vmatpush1.msra.mxu0 0.0
    %1876 = vmatprep.subr.mxu0 0.0
    %1877 = vmatpush1.msra.mxu0 0.0
    %1878 = vmatprep.subr.mxu0 0.0
    %1879 = vmatpush1.msra.mxu0 0.0
    %1880 = vmatprep.subr.mxu0 0.0
    %1881 = vmatpush1.msra.mxu0 0.0
    %1882 = vmatprep.subr.mxu0 0.0
    %1883 = vmatpush1.msra.mxu0 0.0
    %1884 = vmatprep.subr.mxu0 0.0
    %1885 = vmatpush1.msra.mxu0 0.0
    %1886 = vmatprep.subr.mxu0 0.0
    %1887 = vmatpush1.msra.mxu0 0.0
    %1888 = vmatprep.subr.mxu0 0.0
    %1889 = vmatpush1.msra.mxu0 0.0
    %1890 = vmatprep.subr.mxu0 0.0
    %1891 = vmatpush1.msra.mxu0 0.0
    %1892 = vmatprep.subr.mxu0 0.0
    %1893 = vmatpush1.msra.mxu0 0.0
    %1894 = vmatprep.subr.mxu0 0.0
    %1895 = vmatpush1.msra.mxu0 0.0
    %1896 = vmatprep.subr.mxu0 0.0
    %1897 = vmatpush1.msra.mxu0 0.0
    %1898 = vmatprep.subr.mxu0 0.0
    %1899 = vmatpush1.msra.mxu0 0.0
    %1900 = vmatprep.subr.mxu0 0.0
    %1901 = vmatpush1.msra.mxu0 0.0
    %1902 = vmatprep.subr.mxu0 0.0
    %1903 = vmatpush1.msra.mxu0 0.0
    %1904 = vmatprep.subr.mxu0 0.0
    %1905 = vmatpush1.msra.mxu0 %v1869
    %1906 = vmatprep.subr.mxu0 0.0
    %1907 = vmatpush2.msra.mxu0 0.0
    %1908 = vmatprep.subr.mxu0 0.0
    %1909 = vmatpush2.msra.mxu0 0.0
    %1910 = vmatprep.subr.mxu0 0.0
    %1911 = vmatpush2.msra.mxu0 0.0
    %1912 = vmatprep.subr.mxu0 0.0
    %1913 = vmatpush2.msra.mxu0 0.0
    %1914 = vmatprep.subr.mxu0 0.0
    %1915 = vmatpush2.msra.mxu0 0.0
    %1916 = vmatprep.subr.mxu0 0.0
    %1917 = vmatpush2.msra.mxu0 0.0
    %1918 = vmatprep.subr.mxu0 0.0
    %1919 = vmatpush2.msra.mxu0 0.0
    %1920 = vmatprep.subr.mxu0 0.0
    %1921 = vmatpush2.msra.mxu0 0.0
    %1922 = vmatprep.subr.mxu0 0.0
    %1923 = vmatpush2.msra.mxu0 0.0
    %1924 = vmatprep.subr.mxu0 0.0
    %1925 = vmatpush2.msra.mxu0 0.0
    %1926 = vmatprep.subr.mxu0 0.0
    %1927 = vmatpush2.msra.mxu0 0.0
    %1928 = vmatprep.subr.mxu0 0.0
    %1929 = vmatpush2.msra.mxu0 0.0
    %1930 = vmatprep.subr.mxu0 0.0
    %1931 = vmatpush2.msra.mxu0 0.0
    %1932 = vmatprep.subr.mxu0 0.0
    %1933 = vmatpush2.msra.mxu0 0.0
    %1934 = vmatprep.subr.mxu0 0.0
    %1935 = vmatpush2.msra.mxu0 0.0
    %1936 = vmatprep.subr.mxu0 0.0
    %1937 = vmatpush2.msra.mxu0 0.0
    %1938 = vmatprep.mubr.f32.mxu0 0.0
    %1939 = vmatmul.mubr.f32.gmra.mxu0 %v1872
    %v1940 = vpop.f32.mrf.mxu0
    %v1941 = vadd.f32 0.0, %v1940
    %v1942 = vpop.f32.mrf.mxu0
    %1943 = vdwg.mxu0
    %v1944 = vpack.c.bf16 %v1941, %v1941
    %v1945 = vld [vmem:[%s1349 + $0xcc] sm:$0xf]
    %v1946 = vld [vmem:[%s1349 + $0xe4] sm:$0xf]
    %v1947 = vld [vmem:[%s1349 + $0xfc] sm:$0xf]
    %v1948 = vld [vmem:[%s1349 + $0x114] sm:$0xf]
    %v1949 = vld [vmem:[%s1349 + $0x12c] sm:$0xf]
    %v1950 = vld [vmem:[%s1349 + $0x144] sm:$0xf]
    %v1951 = vld [vmem:[%s1349 + $0x15c] sm:$0xf]
    %v1952 = vld [vmem:[%s1349 + $0x174] sm:$0xf]
    %v1961 = vunpack.c.l.b16 %v1945
    %v1962 = vunpack.c.l.b16 %v1946
    %v1963 = vunpack.c.l.b16 %v1947
    %v1964 = vunpack.c.l.b16 %v1948
    %v1965 = vunpack.c.l.b16 %v1949
    %v1966 = vunpack.c.l.b16 %v1950
    %v1967 = vunpack.c.l.b16 %v1951
    %v1968 = vunpack.c.l.b16 %v1952
    %v1969 = vpack.c.b16 %v1962, %v1961
    %v1970 = vpack.c.b16 %v1964, %v1963
    %v1971 = vpack.c.b16 %v1966, %v1965
    %v1972 = vpack.c.b16 %v1968, %v1967
    %v1978 = vsel %vm130, %v1944, 0
    %1980 = vmatprep.subr.bf16.mxu0 0
    %1981 = vmatpush1.bf16.msra.mxu0 0
    %1982 = vmatprep.subr.bf16.mxu0 0
    %1983 = vmatpush1.bf16.msra.mxu0 0
    %1984 = vmatprep.subr.bf16.mxu0 0
    %1985 = vmatpush1.bf16.msra.mxu0 0
    %1986 = vmatprep.subr.bf16.mxu0 0
    %1987 = vmatpush1.bf16.msra.mxu0 0
    %1988 = vmatprep.subr.bf16.mxu0 0
    %1989 = vmatpush1.bf16.msra.mxu0 %v1972
    %1990 = vmatprep.subr.bf16.mxu0 0
    %1991 = vmatpush1.bf16.msra.mxu0 %v1971
    %1992 = vmatprep.subr.bf16.mxu0 0
    %1993 = vmatpush1.bf16.msra.mxu0 %v1970
    %1994 = vmatprep.subr.bf16.mxu0 0
    %1995 = vmatpush1.bf16.msra.mxu0 %v1969
    %1996 = vmatprep.subr.bf16.mxu0 0
    %1997 = vmatpush2.bf16.msra.mxu0 0
    %1998 = vmatprep.subr.bf16.mxu0 0
    %1999 = vmatpush2.bf16.msra.mxu0 0
    %2000 = vmatprep.subr.bf16.mxu0 0
    %2001 = vmatpush2.bf16.msra.mxu0 0
    %2002 = vmatprep.subr.bf16.mxu0 0
    %2003 = vmatpush2.bf16.msra.mxu0 0
    %2004 = vmatprep.subr.bf16.mxu0 0
    %2005 = vmatpush2.bf16.msra.mxu0 0
    %2006 = vmatprep.subr.bf16.mxu0 0
    %2007 = vmatpush2.bf16.msra.mxu0 0
    %2008 = vmatprep.subr.bf16.mxu0 0
    %2009 = vmatpush2.bf16.msra.mxu0 0
    %2010 = vmatprep.subr.bf16.mxu0 0
    %2011 = vmatpush2.bf16.msra.mxu0 0
    %2012 = vmatprep.mubr.bf16.mxu0 0
    %2013 = vmatmul.mubr.bf16.gmra.mxu0 %v1978
    %v2014 = vpop.f32.mrf.mxu0
    %v2015 = vadd.f32 0.0, %v2014
    %v2016 = vpop.f32.mrf.mxu0
    %v2017 = vpop.f32.mrf.mxu0
    %v2018 = vpop.f32.mrf.mxu0
    %2019 = vdwg.mxu0
    %v2028 = vunpack.c.l.b16 %v1770
    %v2029 = vunpack.c.l.b16 %v1771
    %v2030 = vunpack.c.l.b16 %v1772
    %v2031 = vunpack.c.l.b16 %v1773
    %v2032 = vunpack.c.l.b16 %v1774
    %v2033 = vunpack.c.l.b16 %v1775
    %v2034 = vunpack.c.l.b16 %v1776
    %v2035 = vunpack.c.l.b16 %v1777
    %v2036 = vpack.c.b16 %v2029, %v2028
    %v2037 = vpack.c.b16 %v2031, %v2030
    %v2038 = vpack.c.b16 %v2033, %v2032
    %v2039 = vpack.c.b16 %v2035, %v2034
    %v2045 = vsel %vm130, %v1769, 0
    %2047 = vmatprep.subr.bf16.mxu0 0
    %2048 = vmatpush1.bf16.msra.mxu0 0
    %2049 = vmatprep.subr.bf16.mxu0 0
    %2050 = vmatpush1.bf16.msra.mxu0 0
    %2051 = vmatprep.subr.bf16.mxu0 0
    %2052 = vmatpush1.bf16.msra.mxu0 0
    %2053 = vmatprep.subr.bf16.mxu0 0
    %2054 = vmatpush1.bf16.msra.mxu0 0
    %2055 = vmatprep.subr.bf16.mxu0 0
    %2056 = vmatpush1.bf16.msra.mxu0 %v2039
    %2057 = vmatprep.subr.bf16.mxu0 0
    %2058 = vmatpush1.bf16.msra.mxu0 %v2038
    %2059 = vmatprep.subr.bf16.mxu0 0
    %2060 = vmatpush1.bf16.msra.mxu0 %v2037
    %2061 = vmatprep.subr.bf16.mxu0 0
    %2062 = vmatpush1.bf16.msra.mxu0 %v2036
    %2063 = vmatprep.subr.bf16.mxu0 0
    %2064 = vmatpush2.bf16.msra.mxu0 0
    %2065 = vmatprep.subr.bf16.mxu0 0
    %2066 = vmatpush2.bf16.msra.mxu0 0
    %2067 = vmatprep.subr.bf16.mxu0 0
    %2068 = vmatpush2.bf16.msra.mxu0 0
    %2069 = vmatprep.subr.bf16.mxu0 0
    %2070 = vmatpush2.bf16.msra.mxu0 0
    %2071 = vmatprep.subr.bf16.mxu0 0
    %2072 = vmatpush2.bf16.msra.mxu0 0
    %2073 = vmatprep.subr.bf16.mxu0 0
    %2074 = vmatpush2.bf16.msra.mxu0 0
    %2075 = vmatprep.subr.bf16.mxu0 0
    %2076 = vmatpush2.bf16.msra.mxu0 0
    %2077 = vmatprep.subr.bf16.mxu0 0
    %2078 = vmatpush2.bf16.msra.mxu0 0
    %2079 = vmatprep.mubr.bf16.mxu0 0
    %2080 = vmatmul.mubr.bf16.gmra.mxu0 %v2045
    %v2081 = vpop.f32.mrf.mxu0
    %v2082 = vadd.f32 %v2015, %v2081
    %v2083 = vpop.f32.mrf.mxu0
    %v2084 = vpop.f32.mrf.mxu0
    %v2085 = vpop.f32.mrf.mxu0
    %2086 = vdwg.mxu0
    %v2087 = vld [vmem:[%s1382 + $0x1] ss:$0 sm:$0xff]
    %v2088 = vadd.f32 %v2082, %v2087
    %v2089 = vadd.f32 %v1347, %v2088
    %v2090 = vld [vmem:[%s1382 + $0x2] ss:$0 sm:$0xff]
    %v2091 = vld [vmem:[%s1382 + $0x3] ss:$0 sm:$0xff]
    %2092 = vadd.xlane.f32.xlu0 %v2089
    %v2093 = vpop.xlane.xlu0 %2092
    %v2094 = vmul.f32 %v2093, %v209
    %v2095 = vsub.f32 %v2089, %v2094
    %v2096 = vmul.f32 %v2095, %v2095
    %2097 = vadd.xlane.f32.xlu0 %v2096
    %v2098 = vpop.xlane.xlu0 %2097
    %v2099 = vmul.f32 %v2098, %v209
    %v2100 = vadd.f32 %v2099, 1e-12
    %v2101 = vrsqrt.pop %v2100
    %v2102 = vmul.f32 %v2095, %v2101
    %v2103 = vmul.f32 %v2102, %v2090
    %v2104 = vadd.f32 %v2103, %v2091
    %v2105 = vpack.c.bf16 %v2104, %v2104
    %v2106 = vld [vmem:[%s1349 + $0x10] sm:$0xff]
    %v2107 = vld [vmem:[%s1349 + $0x28] sm:$0xff]
    %v2108 = vld [vmem:[%s1349 + $0x40] sm:$0xff]
    %v2109 = vld [vmem:[%s1349 + $0x58] sm:$0xff]
    %v2110 = vld [vmem:[%s1349 + $0x70] sm:$0xff]
    %v2111 = vld [vmem:[%s1349 + $0x88] sm:$0xff]
    %v2112 = vld [vmem:[%s1349 + $0xa0] sm:$0xff]
    %v2113 = vld [vmem:[%s1349 + $0xb8] sm:$0xff]
    %v2114 = vld [vmem:[%s1349 + $0xd0] sm:$0xff]
    %v2115 = vld [vmem:[%s1349 + $0xe8] sm:$0xff]
    %v2116 = vld [vmem:[%s1349 + $0x100] sm:$0xff]
    %v2117 = vld [vmem:[%s1349 + $0x118] sm:$0xff]
    %v2118 = vld [vmem:[%s1349 + $0x130] sm:$0xff]
    %v2119 = vld [vmem:[%s1349 + $0x148] sm:$0xff]
    %v2120 = vld [vmem:[%s1349 + $0x160] sm:$0xff]
    %v2121 = vld [vmem:[%s1349 + $0x178] sm:$0xff]
    %s2122 = scalar_lea.vmem %s1382, 4 [#allocation7]
    %v2123 = vld [vmem:[%s2122] ss:$8 sm:$0x3]
    %v2125 = vlaneseq
    %v2126 = vshrl.u32 %v2125, 7
    %v2127 = vsub.s32 0, %v2126
    %v2128 = vrot.slane %v2123, %v2127
    %v2129 = vlaneseq
    %v2130 = vshrl.u32 %v2129, 7
    %v2131 = vsub.s32 1, %v2130
    %v2132 = vrot.slane %v2123, %v2131
    %v2151 = vunpack.c.l.b16 %v2106
    %v2152 = vunpack.c.h.b16 %v2106
    %v2153 = vunpack.c.l.b16 %v2107
    %v2154 = vunpack.c.h.b16 %v2107
    %v2155 = vunpack.c.l.b16 %v2108
    %v2156 = vunpack.c.h.b16 %v2108
    %v2157 = vunpack.c.l.b16 %v2109
    %v2158 = vunpack.c.h.b16 %v2109
    %v2159 = vunpack.c.l.b16 %v2110
    %v2160 = vunpack.c.h.b16 %v2110
    %v2161 = vunpack.c.l.b16 %v2111
    %v2162 = vunpack.c.h.b16 %v2111
    %v2163 = vunpack.c.l.b16 %v2112
    %v2164 = vunpack.c.h.b16 %v2112
    %v2165 = vunpack.c.l.b16 %v2113
    %v2166 = vunpack.c.h.b16 %v2113
    %v2167 = vunpack.c.l.b16 %v2114
    %v2168 = vunpack.c.h.b16 %v2114
    %v2169 = vunpack.c.l.b16 %v2115
    %v2170 = vunpack.c.h.b16 %v2115
    %v2171 = vunpack.c.l.b16 %v2116
    %v2172 = vunpack.c.h.b16 %v2116
    %v2173 = vunpack.c.l.b16 %v2117
    %v2174 = vunpack.c.h.b16 %v2117
    %v2175 = vunpack.c.l.b16 %v2118
    %v2176 = vunpack.c.h.b16 %v2118
    %v2177 = vunpack.c.l.b16 %v2119
    %v2178 = vunpack.c.h.b16 %v2119
    %v2179 = vunpack.c.l.b16 %v2120
    %v2180 = vunpack.c.h.b16 %v2120
    %v2181 = vunpack.c.l.b16 %v2121
    %v2182 = vunpack.c.h.b16 %v2121
    %v2183 = vpack.c.b16 %v2153, %v2151
    %v2184 = vpack.c.b16 %v2154, %v2152
    %v2185 = vpack.c.b16 %v2157, %v2155
    %v2186 = vpack.c.b16 %v2158, %v2156
    %v2187 = vpack.c.b16 %v2161, %v2159
    %v2188 = vpack.c.b16 %v2162, %v2160
    %v2189 = vpack.c.b16 %v2165, %v2163
    %v2190 = vpack.c.b16 %v2166, %v2164
    %v2191 = vpack.c.b16 %v2169, %v2167
    %v2192 = vpack.c.b16 %v2170, %v2168
    %v2193 = vpack.c.b16 %v2173, %v2171
    %v2194 = vpack.c.b16 %v2174, %v2172
    %v2195 = vpack.c.b16 %v2177, %v2175
    %v2196 = vpack.c.b16 %v2178, %v2176
    %v2197 = vpack.c.b16 %v2181, %v2179
    %v2198 = vpack.c.b16 %v2182, %v2180
    %2215 = vmatprep.subr.bf16.mxu0 %v2198
    %2216 = vmatpush1.bf16.msra.mxu0 %v2197
    %2217 = vmatprep.subr.bf16.mxu0 %v2196
    %2218 = vmatpush1.bf16.msra.mxu0 %v2195
    %2219 = vmatprep.subr.bf16.mxu0 %v2194
    %2220 = vmatpush1.bf16.msra.mxu0 %v2193
    %2221 = vmatprep.subr.bf16.mxu0 %v2192
    %2222 = vmatpush1.bf16.msra.mxu0 %v2191
    %2223 = vmatprep.subr.bf16.mxu0 %v2190
    %2224 = vmatpush1.bf16.msra.mxu0 %v2189
    %2225 = vmatprep.subr.bf16.mxu0 %v2188
    %2226 = vmatpush1.bf16.msra.mxu0 %v2187
    %2227 = vmatprep.subr.bf16.mxu0 %v2186
    %2228 = vmatpush1.bf16.msra.mxu0 %v2185
    %2229 = vmatprep.subr.bf16.mxu0 %v2184
    %2230 = vmatpush1.bf16.msra.mxu0 %v2183
    %2231 = vmatprep.subr.bf16.mxu0 0
    %2232 = vmatpush2.bf16.msra.mxu0 0
    %2233 = vmatprep.subr.bf16.mxu0 0
    %2234 = vmatpush2.bf16.msra.mxu0 0
    %2235 = vmatprep.subr.bf16.mxu0 0
    %2236 = vmatpush2.bf16.msra.mxu0 0
    %2237 = vmatprep.subr.bf16.mxu0 0
    %2238 = vmatpush2.bf16.msra.mxu0 0
    %2239 = vmatprep.subr.bf16.mxu0 0
    %2240 = vmatpush2.bf16.msra.mxu0 0
    %2241 = vmatprep.subr.bf16.mxu0 0
    %2242 = vmatpush2.bf16.msra.mxu0 0
    %2243 = vmatprep.subr.bf16.mxu0 0
    %2244 = vmatpush2.bf16.msra.mxu0 0
    %2245 = vmatprep.subr.bf16.mxu0 0
    %2246 = vmatpush2.bf16.msra.mxu0 0
    %2247 = vmatprep.mubr.bf16.mxu0 0
    %2248 = vmatmul.mubr.bf16.gmra.mxu0 %v2105
    %v2249 = vpop.f32.mrf.mxu0
    %v2250 = vadd.f32 %v2128, %v2249
    %v2251 = vpop.f32.mrf.mxu0
    %v2252 = vadd.f32 %v2132, %v2251
    %v2253 = vpop.f32.mrf.mxu0
    %v2254 = vpop.f32.mrf.mxu0
    %2255 = vdwg.mxu0
    %v2256 = vmul.f32 %v2250, %v2250
    %v2257 = vmul.f32 %v2252, %v2252
    %v2258 = vmul.f32 %v2250, %v2256
    %v2259 = vmul.f32 %v2252, %v2257
    %v2260 = vmul.f32 %v2258, 0.044715
    %v2261 = vmul.f32 %v2259, 0.044715
    %v2262 = vadd.f32 %v2250, %v2260
    %v2263 = vadd.f32 %v2252, %v2261
    %v2264 = vmul.f32 %v2262, 0.7978846
    %v2265 = vmul.f32 %v2263, 0.7978846
    %v2266 = vtanh.pop %v2264
    %v2267 = vtanh.pop %v2265
    %v2268 = vadd.f32 %v2266, 1.0
    %v2269 = vadd.f32 %v2267, 1.0
    %v2270 = vmul.f32 %v2268, 0.5
    %v2271 = vmul.f32 %v2269, 0.5
    %v2272 = vmul.f32 %v2250, %v2270
    %v2273 = vmul.f32 %v2252, %v2271
    %v2274 = vpack.c.bf16 %v2272, %v2272
    %v2275 = vpack.c.bf16 %v2273, %v2273
    %s2276 = scalar_lea.vmem [#allocation6], 128
    %v2277 = vld [vmem:[%s2276] sm:$0xf]
    %v2278 = vld [vmem:[%s2276 + $0x4] sm:$0xf]
    %v2279 = vld [vmem:[%s2276 + $0x8] sm:$0xf]
    %v2280 = vld [vmem:[%s2276 + $0xc] sm:$0xf]
    %v2281 = vld [vmem:[%s2276 + $0x10] sm:$0xf]
    %v2282 = vld [vmem:[%s2276 + $0x14] sm:$0xf]
    %v2283 = vld [vmem:[%s2276 + $0x18] sm:$0xf]
    %v2284 = vld [vmem:[%s2276 + $0x1c] sm:$0xf]
    %v2285 = vld [vmem:[%s2276 + $0x20] sm:$0xf]
    %v2286 = vld [vmem:[%s2276 + $0x24] sm:$0xf]
    %v2287 = vld [vmem:[%s2276 + $0x28] sm:$0xf]
    %v2288 = vld [vmem:[%s2276 + $0x2c] sm:$0xf]
    %v2289 = vld [vmem:[%s2276 + $0x30] sm:$0xf]
    %v2290 = vld [vmem:[%s2276 + $0x34] sm:$0xf]
    %v2291 = vld [vmem:[%s2276 + $0x38] sm:$0xf]
    %v2292 = vld [vmem:[%s2276 + $0x3c] sm:$0xf]
    %v2293 = vld [vmem:[%s2276 + $0x40] sm:$0xf]
    %v2294 = vld [vmem:[%s2276 + $0x44] sm:$0xf]
    %v2295 = vld [vmem:[%s2276 + $0x48] sm:$0xf]
    %v2296 = vld [vmem:[%s2276 + $0x4c] sm:$0xf]
    %v2297 = vld [vmem:[%s2276 + $0x50] sm:$0xf]
    %v2298 = vld [vmem:[%s2276 + $0x54] sm:$0xf]
    %v2299 = vld [vmem:[%s2276 + $0x58] sm:$0xf]
    %v2300 = vld [vmem:[%s2276 + $0x5c] sm:$0xf]
    %v2301 = vld [vmem:[%s2276 + $0x60] sm:$0xf]
    %v2302 = vld [vmem:[%s2276 + $0x64] sm:$0xf]
    %v2303 = vld [vmem:[%s2276 + $0x68] sm:$0xf]
    %v2304 = vld [vmem:[%s2276 + $0x6c] sm:$0xf]
    %v2305 = vld [vmem:[%s2276 + $0x70] sm:$0xf]
    %v2306 = vld [vmem:[%s2276 + $0x74] sm:$0xf]
    %v2307 = vld [vmem:[%s2276 + $0x78] sm:$0xf]
    %v2308 = vld [vmem:[%s2276 + $0x7c] sm:$0xf]
    %v2309 = vld [vmem:[%s1382 + $0x5] ss:$0 sm:$0xff]
    %v2342 = vunpack.c.l.b16 %v2277
    %v2343 = vunpack.c.l.b16 %v2278
    %v2344 = vunpack.c.l.b16 %v2279
    %v2345 = vunpack.c.l.b16 %v2280
    %v2346 = vunpack.c.l.b16 %v2281
    %v2347 = vunpack.c.l.b16 %v2282
    %v2348 = vunpack.c.l.b16 %v2283
    %v2349 = vunpack.c.l.b16 %v2284
    %v2350 = vunpack.c.l.b16 %v2285
    %v2351 = vunpack.c.l.b16 %v2286
    %v2352 = vunpack.c.l.b16 %v2287
    %v2353 = vunpack.c.l.b16 %v2288
    %v2354 = vunpack.c.l.b16 %v2289
    %v2355 = vunpack.c.l.b16 %v2290
    %v2356 = vunpack.c.l.b16 %v2291
    %v2357 = vunpack.c.l.b16 %v2292
    %v2358 = vunpack.c.l.b16 %v2293
    %v2359 = vunpack.c.l.b16 %v2294
    %v2360 = vunpack.c.l.b16 %v2295
    %v2361 = vunpack.c.l.b16 %v2296
    %v2362 = vunpack.c.l.b16 %v2297
    %v2363 = vunpack.c.l.b16 %v2298
    %v2364 = vunpack.c.l.b16 %v2299
    %v2365 = vunpack.c.l.b16 %v2300
    %v2366 = vunpack.c.l.b16 %v2301
    %v2367 = vunpack.c.l.b16 %v2302
    %v2368 = vunpack.c.l.b16 %v2303
    %v2369 = vunpack.c.l.b16 %v2304
    %v2370 = vunpack.c.l.b16 %v2305
    %v2371 = vunpack.c.l.b16 %v2306
    %v2372 = vunpack.c.l.b16 %v2307
    %v2373 = vunpack.c.l.b16 %v2308
    %v2374 = vpack.c.b16 %v2343, %v2342
    %v2375 = vpack.c.b16 %v2345, %v2344
    %v2376 = vpack.c.b16 %v2347, %v2346
    %v2377 = vpack.c.b16 %v2349, %v2348
    %v2378 = vpack.c.b16 %v2351, %v2350
    %v2379 = vpack.c.b16 %v2353, %v2352
    %v2380 = vpack.c.b16 %v2355, %v2354
    %v2381 = vpack.c.b16 %v2357, %v2356
    %v2382 = vpack.c.b16 %v2359, %v2358
    %v2383 = vpack.c.b16 %v2361, %v2360
    %v2384 = vpack.c.b16 %v2363, %v2362
    %v2385 = vpack.c.b16 %v2365, %v2364
    %v2386 = vpack.c.b16 %v2367, %v2366
    %v2387 = vpack.c.b16 %v2369, %v2368
    %v2388 = vpack.c.b16 %v2371, %v2370
    %v2389 = vpack.c.b16 %v2373, %v2372
    %2406 = vmatprep.subr.bf16.mxu0 0
    %2407 = vmatpush1.bf16.msra.mxu0 %v2381
    %2408 = vmatprep.subr.bf16.mxu0 0
    %2409 = vmatpush1.bf16.msra.mxu0 %v2380
    %2410 = vmatprep.subr.bf16.mxu0 0
    %2411 = vmatpush1.bf16.msra.mxu0 %v2379
    %2412 = vmatprep.subr.bf16.mxu0 0
    %2413 = vmatpush1.bf16.msra.mxu0 %v2378
    %2414 = vmatprep.subr.bf16.mxu0 0
    %2415 = vmatpush1.bf16.msra.mxu0 %v2377
    %2416 = vmatprep.subr.bf16.mxu0 0
    %2417 = vmatpush1.bf16.msra.mxu0 %v2376
    %2418 = vmatprep.subr.bf16.mxu0 0
    %2419 = vmatpush1.bf16.msra.mxu0 %v2375
    %2420 = vmatprep.subr.bf16.mxu0 0
    %2421 = vmatpush1.bf16.msra.mxu0 %v2374
    %2422 = vmatprep.subr.bf16.mxu0 0
    %2423 = vmatpush2.bf16.msra.mxu0 %v2389
    %2424 = vmatprep.subr.bf16.mxu0 0
    %2425 = vmatpush2.bf16.msra.mxu0 %v2388
    %2426 = vmatprep.subr.bf16.mxu0 0
    %2427 = vmatpush2.bf16.msra.mxu0 %v2387
    %2428 = vmatprep.subr.bf16.mxu0 0
    %2429 = vmatpush2.bf16.msra.mxu0 %v2386
    %2430 = vmatprep.subr.bf16.mxu0 0
    %2431 = vmatpush2.bf16.msra.mxu0 %v2385
    %2432 = vmatprep.subr.bf16.mxu0 0
    %2433 = vmatpush2.bf16.msra.mxu0 %v2384
    %2434 = vmatprep.subr.bf16.mxu0 0
    %2435 = vmatpush2.bf16.msra.mxu0 %v2383
    %2436 = vmatprep.subr.bf16.mxu0 0
    %2437 = vmatpush2.bf16.msra.mxu0 %v2382
    %2438 = vmatprep.mubr.bf16.mxu0 %v2275
    %2439 = vmatmul.mubr.bf16.gmra.mxu0 %v2274
    %v2440 = vpop.f32.mrf.mxu0
    %v2441 = vadd.f32 %v2309, %v2440
    %v2442 = vpop.f32.mrf.mxu0
    %v2443 = vpop.f32.mrf.mxu0
    %v2444 = vpop.f32.mrf.mxu0
    %2445 = vdwg.mxu0
    %v2446 = vadd.f32 %v2104, %v2441
    %v2447 = vld [vmem:[%s1382 + $0x6] ss:$0 sm:$0xff]
    %v2448 = vld [vmem:[%s1382 + $0x7] ss:$0 sm:$0xff]
    %2449 = vadd.xlane.f32.xlu0 %v2446
    %v2450 = vpop.xlane.xlu0 %2449
    %v2451 = vmul.f32 %v2450, %v209
    %v2452 = vsub.f32 %v2446, %v2451
    %v2453 = vmul.f32 %v2452, %v2452
    %2454 = vadd.xlane.f32.xlu0 %v2453
    %v2455 = vpop.xlane.xlu0 %2454
    %v2456 = vmul.f32 %v2455, %v209
    %v2457 = vadd.f32 %v2456, 1e-12
    %v2458 = vrsqrt.pop %v2457
    %v2459 = vmul.f32 %v2452, %v2458
    %v2460 = vmul.f32 %v2459, %v2447
    %v2461 = vadd.f32 %v2460, %v2448
    %v2462 = vld [vmem:[#allocation9] sm:$0xff]
    %v2463 = vld [vmem:[#allocation9 + $0x8] sm:$0xff]
    %v2464 = vld [vmem:[#allocation9 + $0x10] sm:$0xff]
    %v2465 = vld [vmem:[#allocation9 + $0x18] sm:$0xff]
    %v2466 = vld [vmem:[#allocation9 + $0x20] sm:$0xff]
    %v2467 = vld [vmem:[#allocation9 + $0x28] sm:$0xff]
    %v2468 = vld [vmem:[#allocation9 + $0x30] sm:$0xff]
    %v2469 = vld [vmem:[#allocation9 + $0x38] sm:$0xff]
    %v2470 = vld [vmem:[#allocation9 + $0x40] sm:$0xff]
    %v2471 = vld [vmem:[#allocation9 + $0x48] sm:$0xff]
    %v2472 = vld [vmem:[#allocation9 + $0x50] sm:$0xff]
    %v2473 = vld [vmem:[#allocation9 + $0x58] sm:$0xff]
    %v2474 = vld [vmem:[#allocation9 + $0x60] sm:$0xff]
    %v2475 = vld [vmem:[#allocation9 + $0x68] sm:$0xff]
    %v2476 = vld [vmem:[#allocation9 + $0x70] sm:$0xff]
    %v2477 = vld [vmem:[#allocation9 + $0x78] sm:$0xff]
    %v2478 = vld [vmem:[#allocation9 + $0x80] sm:$0x1]
    %v2479 = vlaneseq
    %v2480 = vshrl.u32 %v2479, 7
    %v2481 = vsub.s32 0, %v2480
    %v2482 = vrot.slane %v2478, %v2481
    %2483 = vmatprep.subr.mxu0 0.0
    %2484 = vmatpush1.msra.mxu0 %v2477
    %2485 = vmatprep.subr.mxu0 0.0
    %2486 = vmatpush1.msra.mxu0 %v2476
    %2487 = vmatprep.subr.mxu0 0.0
    %2488 = vmatpush1.msra.mxu0 %v2475
    %2489 = vmatprep.subr.mxu0 0.0
    %2490 = vmatpush1.msra.mxu0 %v2474
    %2491 = vmatprep.subr.mxu0 0.0
    %2492 = vmatpush1.msra.mxu0 %v2473
    %2493 = vmatprep.subr.mxu0 0.0
    %2494 = vmatpush1.msra.mxu0 %v2472
    %2495 = vmatprep.subr.mxu0 0.0
    %2496 = vmatpush1.msra.mxu0 %v2471
    %2497 = vmatprep.subr.mxu0 0.0
    %2498 = vmatpush1.msra.mxu0 %v2470
    %2499 = vmatprep.subr.mxu0 0.0
    %2500 = vmatpush1.msra.mxu0 %v2469
    %2501 = vmatprep.subr.mxu0 0.0
    %2502 = vmatpush1.msra.mxu0 %v2468
    %2503 = vmatprep.subr.mxu0 0.0
    %2504 = vmatpush1.msra.mxu0 %v2467
    %2505 = vmatprep.subr.mxu0 0.0
    %2506 = vmatpush1.msra.mxu0 %v2466
    %2507 = vmatprep.subr.mxu0 0.0
    %2508 = vmatpush1.msra.mxu0 %v2465
    %2509 = vmatprep.subr.mxu0 0.0
    %2510 = vmatpush1.msra.mxu0 %v2464
    %2511 = vmatprep.subr.mxu0 0.0
    %2512 = vmatpush1.msra.mxu0 %v2463
    %2513 = vmatprep.subr.mxu0 0.0
    %2514 = vmatpush1.msra.mxu0 %v2462
    %2515 = vmatprep.subr.mxu0 0.0
    %2516 = vmatpush2.msra.mxu0 0.0
    %2517 = vmatprep.subr.mxu0 0.0
    %2518 = vmatpush2.msra.mxu0 0.0
    %2519 = vmatprep.subr.mxu0 0.0
    %2520 = vmatpush2.msra.mxu0 0.0
    %2521 = vmatprep.subr.mxu0 0.0
    %2522 = vmatpush2.msra.mxu0 0.0
    %2523 = vmatprep.subr.mxu0 0.0
    %2524 = vmatpush2.msra.mxu0 0.0
    %2525 = vmatprep.subr.mxu0 0.0
    %2526 = vmatpush2.msra.mxu0 0.0
    %2527 = vmatprep.subr.mxu0 0.0
    %2528 = vmatpush2.msra.mxu0 0.0
    %2529 = vmatprep.subr.mxu0 0.0
    %2530 = vmatpush2.msra.mxu0 0.0
    %2531 = vmatprep.subr.mxu0 0.0
    %2532 = vmatpush2.msra.mxu0 0.0
    %2533 = vmatprep.subr.mxu0 0.0
    %2534 = vmatpush2.msra.mxu0 0.0
    %2535 = vmatprep.subr.mxu0 0.0
    %2536 = vmatpush2.msra.mxu0 0.0
    %2537 = vmatprep.subr.mxu0 0.0
    %2538 = vmatpush2.msra.mxu0 0.0
    %2539 = vmatprep.subr.mxu0 0.0
    %2540 = vmatpush2.msra.mxu0 0.0
    %2541 = vmatprep.subr.mxu0 0.0
    %2542 = vmatpush2.msra.mxu0 0.0
    %2543 = vmatprep.subr.mxu0 0.0
    %2544 = vmatpush2.msra.mxu0 0.0
    %2545 = vmatprep.subr.mxu0 0.0
    %2546 = vmatpush2.msra.mxu0 0.0
    %2547 = vmatprep.mubr.f32.mxu0 0.0
    %2548 = vmatmul.mubr.f32.gmra.mxu0 %v2461
    %v2549 = vpop.f32.mrf.mxu0
    %v2550 = vadd.f32 %v2482, %v2549
    %v2551 = vpop.f32.mrf.mxu0
    %2552 = vdwg.mxu0
    %2553 = vst [vmem:[%s7] sm:$0xff] %v2550
    // Predicated region
    $region50: #{qabert_forward.1} parent=1 // pred_check
      _
    $region51: #{qabert_forward.1} parent=1 // pred_check_branch
      %2555 = sbr.rel (0) target = $region53
    $region52: #{qabert_forward.1} parent=1 // pred_region
      _
    $region53: #{qabert_forward.1} parent=1 // pred_fallthru
      _
    // Predicated region
    $region54: #{qabert_forward.1} parent=1 // pred_check
      _
    $region55: #{qabert_forward.1} parent=1 // pred_check_branch
      %2557 = sbr.rel (0) target = $region57
    $region56: #{qabert_forward.1} parent=1 // pred_region
      _
    $region57: #{qabert_forward.1} parent=1 // pred_fallthru
      _
    %2558 = vsyncpa [#allocation3], 1
    %2559 = vsyncpa [#allocation5], 1
    %2560 = vsyncpa [#allocation8], 1

</llo_original>
